<compile_context>
chip_gen: v7x
topology: tpu7x:2x2x1
jax: 0.10.0
libtpu: 0.0.40
codegen_flags: <defaults>
</compile_context>

<pallas_src>
import functools
import math

import jax
import jax.numpy as jnp
from jax.experimental import pallas as pl
from jax.experimental.pallas import tpu as pltpu

NEG_SLOPE = 0.01          # nn.LeakyReLU() default negative slope
IN_EPS = 1e-5             # nn.InstanceNorm2d default eps (affine=False)


def _default_vmem_limit():
    # <= ~3/4 of physical VMEM per TensorCore, capped at 96 MiB:
    #   v5e/v6e (128 MiB) -> 96 MiB ; v7x (64 MiB) -> 48 MiB ; fallback -> 48 MiB.
    cap = 64 * 1024 * 1024
    try:
        cap = int(getattr(pltpu.get_tpu_info(), "vmem_capacity_bytes", cap))
    except Exception:
        pass
    return min(cap * 3 // 4, 96 * 1024 * 1024)


VMEM_LIMIT = _default_vmem_limit()


def _round_up(x, m):
    return (x + m - 1) // m * m


# ----------------------------- Pallas kernels ------------------------------

def _conv_block_kernel(x_ref, w_ref, o_ref, *, Ho, Wo, apply_in):
    """Fused Conv2d(k=4, s=2, p=1, bias=False) [+ InstanceNorm2d] + LeakyReLU.

      x_ref: (Nb, Rp, F4)   bf16  flattened pad+space-to-depth rows per image
      w_ref: (4, F4, Cout)  bf16  weight block per 2x2 super-offset (d = 2*dh+dw)
      o_ref: (Nb, Mo, Cout) bf16  Mo = Ho*(Wo+1); column wo == Wo of each output
                                  row is junk (masked for stats, stripped in the
                                  wrapper).
    """
    Nb = x_ref.shape[0]
    Cout = o_ref.shape[-1]
    Wp = Wo + 1
    Mo = Ho * Wp

    if apply_in:
        # Junk-column mask for the InstanceNorm statistics (hoisted out of the
        # per-image loop).
        ridx = jax.lax.broadcasted_iota(jnp.int32, (Mo, 1), 0)
        valid = (ridx % Wp != Wo).astype(jnp.float32)          # (Mo, 1)
        inv_hw = 1.0 / float(Ho * Wo)

    for nb in range(Nb):
        x = x_ref[nb]                                          # (Rp, F4) bf16

        # Shared-LHS convolution: one MXU matmul per 2x2 super-offset; the
        # spatial shift is applied to the (smaller, Cout-wide) result with a
        # static row-offset slice, so no window gather / im2col copy and no
        # accumulator round-trip through VMEM is needed.
        y = None
        for dh in range(2):
            for dw in range(2):
                off = dh * Wp + dw
                p = jnp.dot(x, w_ref[2 * dh + dw],
                            preferred_element_type=jnp.float32)   # (Rp, Cout)
                p = p[off:off + Mo, :]                             # (Mo, Cout)
                y = p if y is None else y + p

        if apply_in:
            # Two-pass InstanceNorm over the Ho*Wo valid positions (no
            # E[x^2]-E[x]^2 cancellation).  NOTE: for very large Ho*Wo*Cout this
            # epilogue would want HW-chunking; at these layer sizes it stays in
            # registers.
            ym = y * valid
            mean = jnp.sum(ym, axis=0, keepdims=True) * inv_hw    # (1, Cout)
            c = y - mean
            var = jnp.sum((c * c) * valid, axis=0, keepdims=True) * inv_hw
            y = c * jax.lax.rsqrt(var + IN_EPS)

        o_ref[nb] = jnp.where(y >= 0.0, y, NEG_SLOPE * y).astype(o_ref.dtype)


def _final_sigmoid_kernel(p_ref, w_ref, o_ref):
    # p_ref: (M, F) bf16, w_ref: (F, 1) bf16, o_ref: (M, 1) f32.
    z = jnp.dot(p_ref[...], w_ref[...], preferred_element_type=jnp.float32)
    o_ref[...] = (1.0 / (1.0 + jnp.exp(-z))).astype(o_ref.dtype)   # exact sigmoid


# ------------------------------- JAX glue ----------------------------------

def _space_to_depth_pad1(x):
    """(N, H, W, C) -> (N, H//2 + 1, W//2 + 1, 4C): pad=1 then 2x2 space-to-depth.
    Feature order of the 4C axis is (ih, iw, c).  1x-sized (no replication)."""
    N, H, W, C = x.shape
    assert H % 2 == 0 and W % 2 == 0, "spatial dims must be even"
    xp = jnp.pad(x, ((0, 0), (1, 1), (1, 1), (0, 0)))
    Ho, Wo = H // 2, W // 2
    xs = xp.reshape(N, Ho + 1, 2, Wo + 1, 2, C)
    xs = jnp.transpose(xs, (0, 1, 3, 2, 4, 5))
    return xs.reshape(N, Ho + 1, Wo + 1, 4 * C)


def _regroup_weight_s2(w):
    """(Cout, Cin, 4, 4) OIHW -> (4, 4*Cin, Cout).  Block d = 2*dh + dw holds the
    (kh = 2*dh + ih, kw = 2*dw + iw) taps in feature order (ih, iw, cin)."""
    Cout, Cin = w.shape[0], w.shape[1]
    wt = jnp.transpose(w, (2, 3, 1, 0)).reshape(2, 2, 2, 2, Cin, Cout)
    wt = jnp.transpose(wt, (0, 2, 1, 3, 4, 5))        # (dh, dw, ih, iw, cin, cout)
    return wt.reshape(4, 4 * Cin, Cout)


def _im2col_nhwc(x, K, stride, pad):
    """(N, H, W, C) -> (N, Ho*Wo, K*K*C) patches, feature order (kh, kw, c)."""
    N, H, W, C = x.shape
    if pad:
        x = jnp.pad(x, ((0, 0), (pad, pad), (pad, pad), (0, 0)))
    Ho = (H + 2 * pad - K) // stride + 1
    Wo = (W + 2 * pad - K) // stride + 1
    cols = []
    for kh in range(K):
        for kw in range(K):
            cols.append(x[:, kh:kh + stride * Ho:stride,
                          kw:kw + stride * Wo:stride, :])
    p = jnp.stack(cols, axis=3)                       # (N, Ho, Wo, K*K, C)
    return p.reshape(N, Ho * Wo, K * K * C), Ho, Wo


def _pick_block_n(N, per_image_bytes, budget=2 * 1024 * 1024):
    """Images per grid step: amortize per-step overhead on the tiny late layers
    while preferring an even number of >= 2 grid steps (v7x megacore)."""
    cands = [nb for nb in range(1, N + 1)
             if N % nb == 0 and nb * per_image_bytes <= budget and N // nb >= 2]
    if not cands:
        return 1
    even = [nb for nb in cands if (N // nb) % 2 == 0]
    return max(even) if even else max(cands)


def conv_block(x_nhwc, w, apply_in):
    """Conv2d(Cin, Cout, 4, 2, 1, bias=False) [+ InstanceNorm2d] + LeakyReLU.
    Channel-last (N, H, W, C) in, channel-last (N, H//2, W//2, Cout) out."""
    N, H, W, Cin = x_nhwc.shape
    Cout = w.shape[0]
    Ho, Wo = H // 2, W // 2
    Wp = Wo + 1
    Mo = Ho * Wp
    F4 = 4 * Cin

    # 1x-sized layer input: pad + 2x2 space-to-depth, spatial grid flattened into
    # one M axis (row-padded so the in-kernel result shifts stay in range).
    xs = _space_to_depth_pad1(x_nhwc)                          # (N, Ho+1, Wp, F4)
    R = (Ho + 1) * Wp
    Rp = _round_up(R + 1, 8)
    x2 = jnp.pad(xs.reshape(N, R, F4), ((0, 0), (0, Rp - R), (0, 0)))
    x2 = x2.astype(jnp.bfloat16)
    wb = _regroup_weight_s2(w).astype(jnp.bfloat16)            # (4, F4, Cout)

    per_image_bytes = Rp * F4 * 2 + Mo * Cout * 2              # bf16 in + out
    nb = _pick_block_n(N, per_image_bytes)

    kernel = functools.partial(_conv_block_kernel, Ho=Ho, Wo=Wo, apply_in=apply_in)
    out = pl.pallas_call(
        kernel,
        out_shape=jax.ShapeDtypeStruct((N, Mo, Cout), jnp.bfloat16),
        grid=(N // nb,),
        in_specs=[pl.BlockSpec((nb, Rp, F4), lambda i: (i, 0, 0)),
                  pl.BlockSpec((4, F4, Cout), lambda i: (0, 0, 0))],
        out_specs=pl.BlockSpec((nb, Mo, Cout), lambda i: (i, 0, 0)),
        compiler_params=pltpu.CompilerParams(
            dimension_semantics=("parallel",),
            vmem_limit_bytes=VMEM_LIMIT),
    )(x2, wb)

    # Drop the junk column; the slice is lazy and fuses into the next layer's
    # pad + space-to-depth (or the final im2col), so no extra HBM pass.
    return out.reshape(N, Ho, Wp, Cout)[:, :, :Wo, :]


def final_conv_sigmoid(h_nhwc, w):
    """Conv2d(curr_dim, 1, 4, 1, 0, bias=False) + Sigmoid -> NCHW (N, 1, Ho, Wo)."""
    N = h_nhwc.shape[0]
    Cout, Cin, K, _ = w.shape
    patches, Ho, Wo = _im2col_nhwc(h_nhwc, K, 1, 0)   # tiny: (N, Ho*Wo, 16*Cin)
    F = patches.shape[-1]
    p2 = patches.reshape(N * Ho * Wo, F).astype(jnp.bfloat16)
    wm = jnp.transpose(w[0], (1, 2, 0)).reshape(F, Cout).astype(jnp.bfloat16)

    out = pl.pallas_call(
        _final_sigmoid_kernel,
        out_shape=jax.ShapeDtypeStruct((N * Ho * Wo, Cout), jnp.float32),
        in_specs=[pl.BlockSpec(memory_space=pltpu.MemorySpace.VMEM),
                  pl.BlockSpec(memory_space=pltpu.MemorySpace.VMEM)],
        out_specs=pl.BlockSpec(memory_space=pltpu.MemorySpace.VMEM),
        compiler_params=pltpu.CompilerParams(vmem_limit_bytes=VMEM_LIMIT),
    )(p2, wm)
    return jnp.transpose(out.reshape(N, Ho, Wo, Cout), (0, 3, 1, 2))


def netD_forward(x_nchw, conv_weights, final_weight):
    """Mirrors netD.forward: main conv stack -> conv1 -> sigmoid.  Returns NCHW."""
    h = jnp.transpose(x_nchw, (0, 2, 3, 1))           # NCHW -> NHWC (C == 1: cheap)
    h = conv_block(h, conv_weights[0], apply_in=False)          # Conv + LeakyReLU
    for w in conv_weights[1:]:
        h = conv_block(h, w, apply_in=True)           # Conv + InstanceNorm + LeakyReLU
    return final_conv_sigmoid(h, final_weight)


# ------------------------- pure-JAX reference check -------------------------

def _ref_forward(x, conv_weights, final_weight):
    def conv(x, w, stride, pad):
        return jax.lax.conv_general_dilated(
            x, w, (stride, stride), [(pad, pad), (pad, pad)],
            dimension_numbers=("NCHW", "OIHW", "NCHW"),
            precision=jax.lax.Precision.HIGHEST)

    def lrelu(x):
        return jnp.where(x >= 0.0, x, NEG_SLOPE * x)

    def inorm(x):
        mean = jnp.mean(x, axis=(2, 3), keepdims=True)
        var = jnp.mean(jnp.square(x - mean), axis=(2, 3), keepdims=True)
        return (x - mean) * jax.lax.rsqrt(var + IN_EPS)

    h = lrelu(conv(x, conv_weights[0], 2, 1))
    for w in conv_weights[1:]:
        h = lrelu(inorm(conv(h, w, 2, 1)))
    return 1.0 / (1.0 + jnp.exp(-conv(h, final_weight, 1, 0)))


# ------------------------------ param init ---------------------------------

def kaiming_normal(key, shape, a=0.0):
    # nn.init.kaiming_normal_(w, a=0): fan_in mode, leaky_relu gain.
    fan_in = shape[1] * shape[2] * shape[3]
    gain = math.sqrt(2.0 / (1.0 + a * a))
    std = gain / math.sqrt(fan_in)
    return (std * jax.random.normal(key, shape)).astype(jnp.float32)


if __name__ == "__main__":
    # Small configuration consistent with netD's structure:
    # image_size=32, conv_dim=8, repeat_num=3 -> spatial after main = 32/2^3 = 4,
    # so conv1 (k=4, s=1, p=0) yields a 1x1 output, just like the default config.
    image_size, conv_dim, repeat_num, batch = 32, 8, 3, 2

    key = jax.random.PRNGKey(0)
    keys = jax.random.split(key, repeat_num + 2)

    x = jax.random.normal(keys[0], (batch, 1, image_size, image_size),
                          dtype=jnp.float32)

    conv_weights = [kaiming_normal(keys[1], (conv_dim, 1, 4, 4))]
    curr = conv_dim
    for i in range(1, repeat_num):
        conv_weights.append(kaiming_normal(keys[1 + i], (curr * 2, curr, 4, 4)))
        curr *= 2
    final_weight = kaiming_normal(keys[repeat_num + 1], (1, curr, 4, 4))

    forward = jax.jit(netD_forward)
    out = jax.block_until_ready(forward(x, conv_weights, final_weight))

    assert out.shape == (batch, 1, 1, 1), out.shape
    ref = _ref_forward(x, conv_weights, final_weight)
    # bf16 MXU inputs / bf16 inter-layer activations (f32 accumulation & stats).
    err = float(jnp.max(jnp.abs(out - ref)))
    assert err < 2e-2, err

    print("KERNEL_OK")
</pallas_src>

<mosaic_0001>
module attributes {stable_mosaic.version = 11 : i64} {
  func.func @_conv_block_kernel(%arg0: i32, %arg1: memref<1x296x4xbf16, #tpu.memory_space<vmem>>, %arg2: memref<4x4x8xbf16, #tpu.memory_space<vmem>>, %arg3: memref<1x272x8xbf16, #tpu.memory_space<vmem>>) attributes {dimension_semantics = [#tpu.dimension_semantics<parallel>], iteration_bounds = array<i64: 2>, scalar_prefetch = 0 : i64, scratch_operands = 0 : i64, tpu.core_type = #tpu.core_type<tc>, window_params = [{transform_indices = @transform_0, window_bounds = array<i64: 1, 296, 4>}, {pipeline_mode = #tpu.pipeline_mode<synchronous>, transform_indices = @transform_1, window_bounds = array<i64: 4, 4, 8>}, {transform_indices = @transform_2, window_bounds = array<i64: 1, 272, 8>}]} {
    %c0 = arith.constant 0 : index
    %c0_0 = arith.constant 0 : index
    %c0_1 = arith.constant 0 : index
    %0 = vector.load %arg1[%c0, %c0_0, %c0_1] : memref<1x296x4xbf16, #tpu.memory_space<vmem>>, vector<1x296x4xbf16>
    %1 = vector.shape_cast %0 : vector<1x296x4xbf16> to vector<296x4xbf16>
    %c0_2 = arith.constant 0 : index
    %c0_3 = arith.constant 0 : index
    %c0_4 = arith.constant 0 : index
    %2 = vector.load %arg2[%c0_2, %c0_3, %c0_4] : memref<4x4x8xbf16, #tpu.memory_space<vmem>>, vector<1x4x8xbf16>
    %3 = vector.shape_cast %2 : vector<1x4x8xbf16> to vector<4x8xbf16>
    %cst = arith.constant dense<0.000000e+00> : vector<296x8xf32>
    %4 = tpu.matmul %1, %3, %cst {dimension_numbers = #tpu.dot_dimension_numbers<[1], [0], [0], [1], [0, 0, 1, 1], [], []>} : vector<296x4xbf16>, vector<4x8xbf16>, vector<296x8xf32> -> vector<296x8xf32>
    %5 = vector.extract_strided_slice %4 {offsets = [0, 0], sizes = [272, 8], strides = [1, 1]} : vector<296x8xf32> to vector<272x8xf32>
    %c1 = arith.constant 1 : index
    %c0_5 = arith.constant 0 : index
    %c0_6 = arith.constant 0 : index
    %6 = vector.load %arg2[%c1, %c0_5, %c0_6] : memref<4x4x8xbf16, #tpu.memory_space<vmem>>, vector<1x4x8xbf16>
    %7 = vector.shape_cast %6 : vector<1x4x8xbf16> to vector<4x8xbf16>
    %cst_7 = arith.constant dense<0.000000e+00> : vector<296x8xf32>
    %8 = tpu.matmul %1, %7, %cst_7 {dimension_numbers = #tpu.dot_dimension_numbers<[1], [0], [0], [1], [0, 0, 1, 1], [], []>} : vector<296x4xbf16>, vector<4x8xbf16>, vector<296x8xf32> -> vector<296x8xf32>
    %9 = vector.extract_strided_slice %8 {offsets = [1, 0], sizes = [272, 8], strides = [1, 1]} : vector<296x8xf32> to vector<272x8xf32>
    %10 = arith.addf %5, %9 : vector<272x8xf32>
    %c2 = arith.constant 2 : index
    %c0_8 = arith.constant 0 : index
    %c0_9 = arith.constant 0 : index
    %11 = vector.load %arg2[%c2, %c0_8, %c0_9] : memref<4x4x8xbf16, #tpu.memory_space<vmem>>, vector<1x4x8xbf16>
    %12 = vector.shape_cast %11 : vector<1x4x8xbf16> to vector<4x8xbf16>
    %cst_10 = arith.constant dense<0.000000e+00> : vector<296x8xf32>
    %13 = tpu.matmul %1, %12, %cst_10 {dimension_numbers = #tpu.dot_dimension_numbers<[1], [0], [0], [1], [0, 0, 1, 1], [], []>} : vector<296x4xbf16>, vector<4x8xbf16>, vector<296x8xf32> -> vector<296x8xf32>
    %14 = vector.extract_strided_slice %13 {offsets = [17, 0], sizes = [272, 8], strides = [1, 1]} : vector<296x8xf32> to vector<272x8xf32>
    %15 = arith.addf %10, %14 : vector<272x8xf32>
    %c3 = arith.constant 3 : index
    %c0_11 = arith.constant 0 : index
    %c0_12 = arith.constant 0 : index
    %16 = vector.load %arg2[%c3, %c0_11, %c0_12] : memref<4x4x8xbf16, #tpu.memory_space<vmem>>, vector<1x4x8xbf16>
    %17 = vector.shape_cast %16 : vector<1x4x8xbf16> to vector<4x8xbf16>
    %cst_13 = arith.constant dense<0.000000e+00> : vector<296x8xf32>
    %18 = tpu.matmul %1, %17, %cst_13 {dimension_numbers = #tpu.dot_dimension_numbers<[1], [0], [0], [1], [0, 0, 1, 1], [], []>} : vector<296x4xbf16>, vector<4x8xbf16>, vector<296x8xf32> -> vector<296x8xf32>
    %19 = vector.extract_strided_slice %18 {offsets = [18, 0], sizes = [272, 8], strides = [1, 1]} : vector<296x8xf32> to vector<272x8xf32>
    %20 = arith.addf %15, %19 : vector<272x8xf32>
    %cst_14 = arith.constant 0.000000e+00 : f32
    %21 = vector.broadcast %cst_14 : f32 to vector<272x8xf32>
    %22 = arith.cmpf oge, %20, %21 : vector<272x8xf32>
    %cst_15 = arith.constant 0.00999999977 : f32
    %23 = vector.broadcast %cst_15 : f32 to vector<272x8xf32>
    %24 = arith.mulf %23, %20 : vector<272x8xf32>
    %25 = arith.select %22, %20, %24 : vector<272x8xi1>, vector<272x8xf32>
    %26 = arith.truncf %25 : vector<272x8xf32> to vector<272x8xbf16>
    %c0_16 = arith.constant 0 : index
    %c0_17 = arith.constant 0 : index
    %c0_18 = arith.constant 0 : index
    %27 = vector.load %arg3[%c0_16, %c0_17, %c0_18] : memref<1x272x8xbf16, #tpu.memory_space<vmem>>, vector<1x272x8xbf16>
    %28 = vector.shape_cast %27 : vector<1x272x8xbf16> to vector<272x8xbf16>
    %29 = vector.shape_cast %26 : vector<272x8xbf16> to vector<1x272x8xbf16>
    tpu.vector_store %arg3[%c0_16, %c0_17, %c0_18], %29 {strides = array<i32>} : memref<1x272x8xbf16, #tpu.memory_space<vmem>>, vector<1x272x8xbf16>,
    return
  }
  func.func @transform_0(%arg0: i32) -> (i32, i32, i32) {
    %c0_i32 = arith.constant 0 : i32
    %c0_i32_0 = arith.constant 0 : i32
    %c0_i32_1 = arith.constant 0 : i32
    return %arg0, %c0_i32, %c0_i32_0 : i32, i32, i32
  }
  func.func @transform_1(%arg0: i32) -> (i32, i32, i32) {
    %c0_i32 = arith.constant 0 : i32
    %c0_i32_0 = arith.constant 0 : i32
    %c0_i32_1 = arith.constant 0 : i32
    %c0_i32_2 = arith.constant 0 : i32
    return %c0_i32, %c0_i32_0, %c0_i32_1 : i32, i32, i32
  }
  func.func @transform_2(%arg0: i32) -> (i32, i32, i32) {
    %c0_i32 = arith.constant 0 : i32
    %c0_i32_0 = arith.constant 0 : i32
    %c0_i32_1 = arith.constant 0 : i32
    return %arg0, %c0_i32, %c0_i32_0 : i32, i32, i32
  }
}

module attributes {stable_mosaic.version = 11 : i64} {
  func.func @_conv_block_kernel(%arg0: i32, %arg1: memref<1x88x32xbf16, #tpu.memory_space<vmem>>, %arg2: memref<4x32x16xbf16, #tpu.memory_space<vmem>>, %arg3: memref<1x72x16xbf16, #tpu.memory_space<vmem>>) attributes {dimension_semantics = [#tpu.dimension_semantics<parallel>], iteration_bounds = array<i64: 2>, scalar_prefetch = 0 : i64, scratch_operands = 0 : i64, tpu.core_type = #tpu.core_type<tc>, window_params = [{transform_indices = @transform_0, window_bounds = array<i64: 1, 88, 32>}, {pipeline_mode = #tpu.pipeline_mode<synchronous>, transform_indices = @transform_1, window_bounds = array<i64: 4, 32, 16>}, {transform_indices = @transform_2, window_bounds = array<i64: 1, 72, 16>}]} {
    %0 = tpu.iota {dimensions = array<i32: 0>} : vector<72x1xi32>
    %c9_i32 = arith.constant 9 : i32
    %c0_i32 = arith.constant 0 : i32
    %1 = arith.cmpi eq, %c9_i32, %c0_i32 : i32
    %c1_i32 = arith.constant 1 : i32
    %2 = arith.select %1, %c1_i32, %c9_i32 : i32
    %3 = vector.broadcast %2 : i32 to vector<72x1xi32>
    %4 = arith.remsi %0, %3 : vector<72x1xi32>
    %c0_i32_0 = arith.constant 0 : i32
    %5 = vector.broadcast %c0_i32_0 : i32 to vector<72x1xi32>
    %6 = arith.cmpi ne, %4, %5 : vector<72x1xi32>
    %c0_i32_1 = arith.constant 0 : i32
    %7 = vector.broadcast %c0_i32_1 : i32 to vector<72x1xi32>
    %8 = arith.cmpi slt, %4, %7 : vector<72x1xi32>
    %c0_i32_2 = arith.constant 0 : i32
    %9 = arith.cmpi slt, %2, %c0_i32_2 : i32
    %10 = vector.broadcast %9 : i1 to vector<72x1xi1>
    %11 = vector.broadcast %10 : vector<72x1xi1> to vector<72x1xi1>
    %12 = arith.xori %8, %11 : vector<72x1xi1>
    %13 = arith.andi %12, %6 : vector<72x1xi1>
    %14 = vector.broadcast %2 : i32 to vector<72x1xi32>
    %15 = arith.addi %4, %14 : vector<72x1xi32>
    %16 = arith.select %13, %15, %4 : vector<72x1xi1>, vector<72x1xi32>
    %c8_i32 = arith.constant 8 : i32
    %17 = vector.broadcast %c8_i32 : i32 to vector<72x1xi32>
    %18 = arith.cmpi ne, %16, %17 : vector<72x1xi32>
    %19 = arith.extui %18 : vector<72x1xi1> to vector<72x1xi32>
    %20 = arith.sitofp %19 : vector<72x1xi32> to vector<72x1xf32>
    %c0 = arith.constant 0 : index
    %c0_3 = arith.constant 0 : index
    %c0_4 = arith.constant 0 : index
    %21 = vector.load %arg1[%c0, %c0_3, %c0_4] : memref<1x88x32xbf16, #tpu.memory_space<vmem>>, vector<1x88x32xbf16>
    %22 = vector.shape_cast %21 : vector<1x88x32xbf16> to vector<88x32xbf16>
    %c0_5 = arith.constant 0 : index
    %c0_6 = arith.constant 0 : index
    %c0_7 = arith.constant 0 : index
    %23 = vector.load %arg2[%c0_5, %c0_6, %c0_7] : memref<4x32x16xbf16, #tpu.memory_space<vmem>>, vector<1x32x16xbf16>
    %24 = vector.shape_cast %23 : vector<1x32x16xbf16> to vector<32x16xbf16>
    %cst = arith.constant dense<0.000000e+00> : vector<88x16xf32>
    %25 = tpu.matmul %22, %24, %cst {dimension_numbers = #tpu.dot_dimension_numbers<[1], [0], [0], [1], [0, 0, 1, 1], [], []>} : vector<88x32xbf16>, vector<32x16xbf16>, vector<88x16xf32> -> vector<88x16xf32>
    %26 = vector.extract_strided_slice %25 {offsets = [0, 0], sizes = [72, 16], strides = [1, 1]} : vector<88x16xf32> to vector<72x16xf32>
    %c1 = arith.constant 1 : index
    %c0_8 = arith.constant 0 : index
    %c0_9 = arith.constant 0 : index
    %27 = vector.load %arg2[%c1, %c0_8, %c0_9] : memref<4x32x16xbf16, #tpu.memory_space<vmem>>, vector<1x32x16xbf16>
    %28 = vector.shape_cast %27 : vector<1x32x16xbf16> to vector<32x16xbf16>
    %cst_10 = arith.constant dense<0.000000e+00> : vector<88x16xf32>
    %29 = tpu.matmul %22, %28, %cst_10 {dimension_numbers = #tpu.dot_dimension_numbers<[1], [0], [0], [1], [0, 0, 1, 1], [], []>} : vector<88x32xbf16>, vector<32x16xbf16>, vector<88x16xf32> -> vector<88x16xf32>
    %30 = vector.extract_strided_slice %29 {offsets = [1, 0], sizes = [72, 16], strides = [1, 1]} : vector<88x16xf32> to vector<72x16xf32>
    %31 = arith.addf %26, %30 : vector<72x16xf32>
    %c2 = arith.constant 2 : index
    %c0_11 = arith.constant 0 : index
    %c0_12 = arith.constant 0 : index
    %32 = vector.load %arg2[%c2, %c0_11, %c0_12] : memref<4x32x16xbf16, #tpu.memory_space<vmem>>, vector<1x32x16xbf16>
    %33 = vector.shape_cast %32 : vector<1x32x16xbf16> to vector<32x16xbf16>
    %cst_13 = arith.constant dense<0.000000e+00> : vector<88x16xf32>
    %34 = tpu.matmul %22, %33, %cst_13 {dimension_numbers = #tpu.dot_dimension_numbers<[1], [0], [0], [1], [0, 0, 1, 1], [], []>} : vector<88x32xbf16>, vector<32x16xbf16>, vector<88x16xf32> -> vector<88x16xf32>
    %35 = vector.extract_strided_slice %34 {offsets = [9, 0], sizes = [72, 16], strides = [1, 1]} : vector<88x16xf32> to vector<72x16xf32>
    %36 = arith.addf %31, %35 : vector<72x16xf32>
    %c3 = arith.constant 3 : index
    %c0_14 = arith.constant 0 : index
    %c0_15 = arith.constant 0 : index
    %37 = vector.load %arg2[%c3, %c0_14, %c0_15] : memref<4x32x16xbf16, #tpu.memory_space<vmem>>, vector<1x32x16xbf16>
    %38 = vector.shape_cast %37 : vector<1x32x16xbf16> to vector<32x16xbf16>
    %cst_16 = arith.constant dense<0.000000e+00> : vector<88x16xf32>
    %39 = tpu.matmul %22, %38, %cst_16 {dimension_numbers = #tpu.dot_dimension_numbers<[1], [0], [0], [1], [0, 0, 1, 1], [], []>} : vector<88x32xbf16>, vector<32x16xbf16>, vector<88x16xf32> -> vector<88x16xf32>
    %40 = vector.extract_strided_slice %39 {offsets = [10, 0], sizes = [72, 16], strides = [1, 1]} : vector<88x16xf32> to vector<72x16xf32>
    %41 = arith.addf %36, %40 : vector<72x16xf32>
    %42 = vector.broadcast %20 : vector<72x1xf32> to vector<72x16xf32>
    %43 = arith.mulf %41, %42 : vector<72x16xf32>
    %cst_17 = arith.constant dense<0.000000e+00> : vector<16xf32>
    %44 = vector.multi_reduction <add>, %43, %cst_17 [0] : vector<72x16xf32> to vector<16xf32>
    %45 = vector.shape_cast %44 : vector<16xf32> to vector<1x16xf32>
    %cst_18 = arith.constant 1.562500e-02 : f32
    %46 = vector.broadcast %cst_18 : f32 to vector<1x16xf32>
    %47 = arith.mulf %45, %46 : vector<1x16xf32>
    %48 = vector.broadcast %47 : vector<1x16xf32> to vector<72x16xf32>
    %49 = arith.subf %41, %48 : vector<72x16xf32>
    %50 = arith.mulf %49, %49 : vector<72x16xf32>
    %51 = vector.broadcast %20 : vector<72x1xf32> to vector<72x16xf32>
    %52 = arith.mulf %50, %51 : vector<72x16xf32>
    %cst_19 = arith.constant dense<0.000000e+00> : vector<16xf32>
    %53 = vector.multi_reduction <add>, %52, %cst_19 [0] : vector<72x16xf32> to vector<16xf32>
    %54 = vector.shape_cast %53 : vector<16xf32> to vector<1x16xf32>
    %cst_20 = arith.constant 1.562500e-02 : f32
    %55 = vector.broadcast %cst_20 : f32 to vector<1x16xf32>
    %56 = arith.mulf %54, %55 : vector<1x16xf32>
    %cst_21 = arith.constant 9.99999974E-6 : f32
    %57 = vector.broadcast %cst_21 : f32 to vector<1x16xf32>
    %58 = arith.addf %56, %57 : vector<1x16xf32>
    %59 = math.rsqrt %58 : vector<1x16xf32>
    %60 = vector.broadcast %59 : vector<1x16xf32> to vector<72x16xf32>
    %61 = arith.mulf %49, %60 : vector<72x16xf32>
    %cst_22 = arith.constant 0.000000e+00 : f32
    %62 = vector.broadcast %cst_22 : f32 to vector<72x16xf32>
    %63 = arith.cmpf oge, %61, %62 : vector<72x16xf32>
    %cst_23 = arith.constant 0.00999999977 : f32
    %64 = vector.broadcast %cst_23 : f32 to vector<72x16xf32>
    %65 = arith.mulf %64, %61 : vector<72x16xf32>
    %66 = arith.select %63, %61, %65 : vector<72x16xi1>, vector<72x16xf32>
    %67 = arith.truncf %66 : vector<72x16xf32> to vector<72x16xbf16>
    %c0_24 = arith.constant 0 : index
    %c0_25 = arith.constant 0 : index
    %c0_26 = arith.constant 0 : index
    %68 = vector.load %arg3[%c0_24, %c0_25, %c0_26] : memref<1x72x16xbf16, #tpu.memory_space<vmem>>, vector<1x72x16xbf16>
    %69 = vector.shape_cast %68 : vector<1x72x16xbf16> to vector<72x16xbf16>
    %70 = vector.shape_cast %67 : vector<72x16xbf16> to vector<1x72x16xbf16>
    tpu.vector_store %arg3[%c0_24, %c0_25, %c0_26], %70 {strides = array<i32>} : memref<1x72x16xbf16, #tpu.memory_space<vmem>>, vector<1x72x16xbf16>,
    return
  }
  func.func @transform_0(%arg0: i32) -> (i32, i32, i32) {
    %c0_i32 = arith.constant 0 : i32
    %c0_i32_0 = arith.constant 0 : i32
    %c0_i32_1 = arith.constant 0 : i32
    return %arg0, %c0_i32, %c0_i32_0 : i32, i32, i32
  }
  func.func @transform_1(%arg0: i32) -> (i32, i32, i32) {
    %c0_i32 = arith.constant 0 : i32
    %c0_i32_0 = arith.constant 0 : i32
    %c0_i32_1 = arith.constant 0 : i32
    %c0_i32_2 = arith.constant 0 : i32
    return %c0_i32, %c0_i32_0, %c0_i32_1 : i32, i32, i32
  }
  func.func @transform_2(%arg0: i32) -> (i32, i32, i32) {
    %c0_i32 = arith.constant 0 : i32
    %c0_i32_0 = arith.constant 0 : i32
    %c0_i32_1 = arith.constant 0 : i32
    return %arg0, %c0_i32, %c0_i32_0 : i32, i32, i32
  }
}

module attributes {stable_mosaic.version = 11 : i64} {
  func.func @_conv_block_kernel(%arg0: i32, %arg1: memref<1x32x64xbf16, #tpu.memory_space<vmem>>, %arg2: memref<4x64x32xbf16, #tpu.memory_space<vmem>>, %arg3: memref<1x20x32xbf16, #tpu.memory_space<vmem>>) attributes {dimension_semantics = [#tpu.dimension_semantics<parallel>], iteration_bounds = array<i64: 2>, scalar_prefetch = 0 : i64, scratch_operands = 0 : i64, tpu.core_type = #tpu.core_type<tc>, window_params = [{transform_indices = @transform_0, window_bounds = array<i64: 1, 32, 64>}, {pipeline_mode = #tpu.pipeline_mode<synchronous>, transform_indices = @transform_1, window_bounds = array<i64: 4, 64, 32>}, {transform_indices = @transform_2, window_bounds = array<i64: 1, 20, 32>}]} {
    %0 = tpu.iota {dimensions = array<i32: 0>} : vector<20x1xi32>
    %c5_i32 = arith.constant 5 : i32
    %c0_i32 = arith.constant 0 : i32
    %1 = arith.cmpi eq, %c5_i32, %c0_i32 : i32
    %c1_i32 = arith.constant 1 : i32
    %2 = arith.select %1, %c1_i32, %c5_i32 : i32
    %3 = vector.broadcast %2 : i32 to vector<20x1xi32>
    %4 = arith.remsi %0, %3 : vector<20x1xi32>
    %c0_i32_0 = arith.constant 0 : i32
    %5 = vector.broadcast %c0_i32_0 : i32 to vector<20x1xi32>
    %6 = arith.cmpi ne, %4, %5 : vector<20x1xi32>
    %c0_i32_1 = arith.constant 0 : i32
    %7 = vector.broadcast %c0_i32_1 : i32 to vector<20x1xi32>
    %8 = arith.cmpi slt, %4, %7 : vector<20x1xi32>
    %c0_i32_2 = arith.constant 0 : i32
    %9 = arith.cmpi slt, %2, %c0_i32_2 : i32
    %10 = vector.broadcast %9 : i1 to vector<20x1xi1>
    %11 = vector.broadcast %10 : vector<20x1xi1> to vector<20x1xi1>
    %12 = arith.xori %8, %11 : vector<20x1xi1>
    %13 = arith.andi %12, %6 : vector<20x1xi1>
    %14 = vector.broadcast %2 : i32 to vector<20x1xi32>
    %15 = arith.addi %4, %14 : vector<20x1xi32>
    %16 = arith.select %13, %15, %4 : vector<20x1xi1>, vector<20x1xi32>
    %c4_i32 = arith.constant 4 : i32
    %17 = vector.broadcast %c4_i32 : i32 to vector<20x1xi32>
    %18 = arith.cmpi ne, %16, %17 : vector<20x1xi32>
    %19 = arith.extui %18 : vector<20x1xi1> to vector<20x1xi32>
    %20 = arith.sitofp %19 : vector<20x1xi32> to vector<20x1xf32>
    %c0 = arith.constant 0 : index
    %c0_3 = arith.constant 0 : index
    %c0_4 = arith.constant 0 : index
    %21 = vector.load %arg1[%c0, %c0_3, %c0_4] : memref<1x32x64xbf16, #tpu.memory_space<vmem>>, vector<1x32x64xbf16>
    %22 = vector.shape_cast %21 : vector<1x32x64xbf16> to vector<32x64xbf16>
    %c0_5 = arith.constant 0 : index
    %c0_6 = arith.constant 0 : index
    %c0_7 = arith.constant 0 : index
    %23 = vector.load %arg2[%c0_5, %c0_6, %c0_7] : memref<4x64x32xbf16, #tpu.memory_space<vmem>>, vector<1x64x32xbf16>
    %24 = vector.shape_cast %23 : vector<1x64x32xbf16> to vector<64x32xbf16>
    %cst = arith.constant dense<0.000000e+00> : vector<32x32xf32>
    %25 = tpu.matmul %22, %24, %cst {dimension_numbers = #tpu.dot_dimension_numbers<[1], [0], [0], [1], [0, 0, 1, 1], [], []>} : vector<32x64xbf16>, vector<64x32xbf16>, vector<32x32xf32> -> vector<32x32xf32>
    %26 = vector.extract_strided_slice %25 {offsets = [0, 0], sizes = [20, 32], strides = [1, 1]} : vector<32x32xf32> to vector<20x32xf32>
    %c1 = arith.constant 1 : index
    %c0_8 = arith.constant 0 : index
    %c0_9 = arith.constant 0 : index
    %27 = vector.load %arg2[%c1, %c0_8, %c0_9] : memref<4x64x32xbf16, #tpu.memory_space<vmem>>, vector<1x64x32xbf16>
    %28 = vector.shape_cast %27 : vector<1x64x32xbf16> to vector<64x32xbf16>
    %cst_10 = arith.constant dense<0.000000e+00> : vector<32x32xf32>
    %29 = tpu.matmul %22, %28, %cst_10 {dimension_numbers = #tpu.dot_dimension_numbers<[1], [0], [0], [1], [0, 0, 1, 1], [], []>} : vector<32x64xbf16>, vector<64x32xbf16>, vector<32x32xf32> -> vector<32x32xf32>
    %30 = vector.extract_strided_slice %29 {offsets = [1, 0], sizes = [20, 32], strides = [1, 1]} : vector<32x32xf32> to vector<20x32xf32>
    %31 = arith.addf %26, %30 : vector<20x32xf32>
    %c2 = arith.constant 2 : index
    %c0_11 = arith.constant 0 : index
    %c0_12 = arith.constant 0 : index
    %32 = vector.load %arg2[%c2, %c0_11, %c0_12] : memref<4x64x32xbf16, #tpu.memory_space<vmem>>, vector<1x64x32xbf16>
    %33 = vector.shape_cast %32 : vector<1x64x32xbf16> to vector<64x32xbf16>
    %cst_13 = arith.constant dense<0.000000e+00> : vector<32x32xf32>
    %34 = tpu.matmul %22, %33, %cst_13 {dimension_numbers = #tpu.dot_dimension_numbers<[1], [0], [0], [1], [0, 0, 1, 1], [], []>} : vector<32x64xbf16>, vector<64x32xbf16>, vector<32x32xf32> -> vector<32x32xf32>
    %35 = vector.extract_strided_slice %34 {offsets = [5, 0], sizes = [20, 32], strides = [1, 1]} : vector<32x32xf32> to vector<20x32xf32>
    %36 = arith.addf %31, %35 : vector<20x32xf32>
    %c3 = arith.constant 3 : index
    %c0_14 = arith.constant 0 : index
    %c0_15 = arith.constant 0 : index
    %37 = vector.load %arg2[%c3, %c0_14, %c0_15] : memref<4x64x32xbf16, #tpu.memory_space<vmem>>, vector<1x64x32xbf16>
    %38 = vector.shape_cast %37 : vector<1x64x32xbf16> to vector<64x32xbf16>
    %cst_16 = arith.constant dense<0.000000e+00> : vector<32x32xf32>
    %39 = tpu.matmul %22, %38, %cst_16 {dimension_numbers = #tpu.dot_dimension_numbers<[1], [0], [0], [1], [0, 0, 1, 1], [], []>} : vector<32x64xbf16>, vector<64x32xbf16>, vector<32x32xf32> -> vector<32x32xf32>
    %40 = vector.extract_strided_slice %39 {offsets = [6, 0], sizes = [20, 32], strides = [1, 1]} : vector<32x32xf32> to vector<20x32xf32>
    %41 = arith.addf %36, %40 : vector<20x32xf32>
    %42 = vector.broadcast %20 : vector<20x1xf32> to vector<20x32xf32>
    %43 = arith.mulf %41, %42 : vector<20x32xf32>
    %cst_17 = arith.constant dense<0.000000e+00> : vector<32xf32>
    %44 = vector.multi_reduction <add>, %43, %cst_17 [0] : vector<20x32xf32> to vector<32xf32>
    %45 = vector.shape_cast %44 : vector<32xf32> to vector<1x32xf32>
    %cst_18 = arith.constant 6.250000e-02 : f32
    %46 = vector.broadcast %cst_18 : f32 to vector<1x32xf32>
    %47 = arith.mulf %45, %46 : vector<1x32xf32>
    %48 = vector.broadcast %47 : vector<1x32xf32> to vector<20x32xf32>
    %49 = arith.subf %41, %48 : vector<20x32xf32>
    %50 = arith.mulf %49, %49 : vector<20x32xf32>
    %51 = vector.broadcast %20 : vector<20x1xf32> to vector<20x32xf32>
    %52 = arith.mulf %50, %51 : vector<20x32xf32>
    %cst_19 = arith.constant dense<0.000000e+00> : vector<32xf32>
    %53 = vector.multi_reduction <add>, %52, %cst_19 [0] : vector<20x32xf32> to vector<32xf32>
    %54 = vector.shape_cast %53 : vector<32xf32> to vector<1x32xf32>
    %cst_20 = arith.constant 6.250000e-02 : f32
    %55 = vector.broadcast %cst_20 : f32 to vector<1x32xf32>
    %56 = arith.mulf %54, %55 : vector<1x32xf32>
    %cst_21 = arith.constant 9.99999974E-6 : f32
    %57 = vector.broadcast %cst_21 : f32 to vector<1x32xf32>
    %58 = arith.addf %56, %57 : vector<1x32xf32>
    %59 = math.rsqrt %58 : vector<1x32xf32>
    %60 = vector.broadcast %59 : vector<1x32xf32> to vector<20x32xf32>
    %61 = arith.mulf %49, %60 : vector<20x32xf32>
    %cst_22 = arith.constant 0.000000e+00 : f32
    %62 = vector.broadcast %cst_22 : f32 to vector<20x32xf32>
    %63 = arith.cmpf oge, %61, %62 : vector<20x32xf32>
    %cst_23 = arith.constant 0.00999999977 : f32
    %64 = vector.broadcast %cst_23 : f32 to vector<20x32xf32>
    %65 = arith.mulf %64, %61 : vector<20x32xf32>
    %66 = arith.select %63, %61, %65 : vector<20x32xi1>, vector<20x32xf32>
    %67 = arith.truncf %66 : vector<20x32xf32> to vector<20x32xbf16>
    %c0_24 = arith.constant 0 : index
    %c0_25 = arith.constant 0 : index
    %c0_26 = arith.constant 0 : index
    %68 = vector.load %arg3[%c0_24, %c0_25, %c0_26] : memref<1x20x32xbf16, #tpu.memory_space<vmem>>, vector<1x20x32xbf16>
    %69 = vector.shape_cast %68 : vector<1x20x32xbf16> to vector<20x32xbf16>
    %70 = vector.shape_cast %67 : vector<20x32xbf16> to vector<1x20x32xbf16>
    tpu.vector_store %arg3[%c0_24, %c0_25, %c0_26], %70 {strides = array<i32>} : memref<1x20x32xbf16, #tpu.memory_space<vmem>>, vector<1x20x32xbf16>,
    return
  }
  func.func @transform_0(%arg0: i32) -> (i32, i32, i32) {
    %c0_i32 = arith.constant 0 : i32
    %c0_i32_0 = arith.constant 0 : i32
    %c0_i32_1 = arith.constant 0 : i32
    return %arg0, %c0_i32, %c0_i32_0 : i32, i32, i32
  }
  func.func @transform_1(%arg0: i32) -> (i32, i32, i32) {
    %c0_i32 = arith.constant 0 : i32
    %c0_i32_0 = arith.constant 0 : i32
    %c0_i32_1 = arith.constant 0 : i32
    %c0_i32_2 = arith.constant 0 : i32
    return %c0_i32, %c0_i32_0, %c0_i32_1 : i32, i32, i32
  }
  func.func @transform_2(%arg0: i32) -> (i32, i32, i32) {
    %c0_i32 = arith.constant 0 : i32
    %c0_i32_0 = arith.constant 0 : i32
    %c0_i32_1 = arith.constant 0 : i32
    return %arg0, %c0_i32, %c0_i32_0 : i32, i32, i32
  }
}

module attributes {stable_mosaic.version = 11 : i64} {
  func.func @_final_sigmoid_kernel(%arg0: memref<2x512xbf16, #tpu.memory_space<vmem>>, %arg1: memref<512x1xbf16, #tpu.memory_space<vmem>>, %arg2: memref<2x1xf32, #tpu.memory_space<vmem>>) attributes {dimension_semantics = [], scalar_prefetch = 0 : i64, scratch_operands = 0 : i64, tpu.core_type = #tpu.core_type<tc>} {
    %c0 = arith.constant 0 : index
    %c0_0 = arith.constant 0 : index
    %0 = vector.load %arg0[%c0, %c0_0] : memref<2x512xbf16, #tpu.memory_space<vmem>>, vector<2x512xbf16>
    %c0_1 = arith.constant 0 : index
    %c0_2 = arith.constant 0 : index
    %1 = vector.load %arg1[%c0_1, %c0_2] : memref<512x1xbf16, #tpu.memory_space<vmem>>, vector<512x1xbf16>
    %cst = arith.constant dense<0.000000e+00> : vector<2x1xf32>
    %2 = tpu.matmul %0, %1, %cst {dimension_numbers = #tpu.dot_dimension_numbers<[1], [0], [0], [1], [0, 0, 1, 1], [], []>} : vector<2x512xbf16>, vector<512x1xbf16>, vector<2x1xf32> -> vector<2x1xf32>
    %cst_3 = arith.constant 0.000000e+00 : f32
    %3 = vector.broadcast %cst_3 : f32 to vector<2x1xf32>
    %4 = arith.subf %3, %2 : vector<2x1xf32>
    %5 = math.exp %4 : vector<2x1xf32>
    %cst_4 = arith.constant 1.000000e+00 : f32
    %6 = vector.broadcast %cst_4 : f32 to vector<2x1xf32>
    %7 = arith.addf %6, %5 : vector<2x1xf32>
    %cst_5 = arith.constant 1.000000e+00 : f32
    %8 = vector.broadcast %cst_5 : f32 to vector<2x1xf32>
    %9 = arith.divf %8, %7 : vector<2x1xf32>
    %c0_6 = arith.constant 0 : index
    %c0_7 = arith.constant 0 : index
    %10 = vector.load %arg2[%c0_6, %c0_7] : memref<2x1xf32, #tpu.memory_space<vmem>>, vector<2x1xf32>
    tpu.vector_store %arg2[%c0_6, %c0_7], %9 {strides = array<i32>} : memref<2x1xf32, #tpu.memory_space<vmem>>, vector<2x1xf32>,
    return
  }
}

</mosaic_0001>

<llo_original>
// kernel: netD_forward.4
$region0: #{netD_forward.4}
  #allocation0 [shape = 'u32[]', space=smem, size = 0x4, offset = 0x4, fixed_abs, tag = 'smem constant byte address 0x4 - core index']
  #allocation1 [shape = 'u32[144,128]{1,0:T(1,128)}', space=vmem, size = 0x12000, scoped, tag = 'internal scratch']
  %s0 = inlined_call_operand.vmem [shape: bf16[2,296,4], index: 0, kind: input, shape index: {}]
  %s1 = inlined_call_operand.vmem [shape: bf16[4,4,8], index: 1, kind: input, shape index: {}]
  %s2 = inlined_call_operand.vmem [shape: bf16[2,272,8], index: 2, kind: output, shape index: {}]
  %s3 = sld [smem:[#allocation0]]
  $region41: #{netD_forward.4} parent=0
    _
  %s5 = ssub.s32 1, %s3
  %s6 = scalar_select 0, %s5, %s3
  loop: start=0, step=1, limit=4
  $region2: #{netD_forward.4} parent=0 // loop_pre_header
    _
  $region3: #{netD_forward.4} parent=0 // loop_header
    %s8 = sphi 0, %s12
    %p9 = scmp.ge.s32.totalorder %s8, 4
    %s18 = sphi 0, %s20
    %s21 = sphi 0, %s18
    %s22 = sphi 0, %s21
    %s38 = sphi 0, %s22
    %s42 = sphi 0, %s42
    %s44 = sphi 0, %s42
    %s45 = sphi 0, %s44
    %s59 = sphi 0, %s45
    %s65 = sphi 0, %s67
    %s68 = sphi 0, %s65
    %s69 = sphi 0, %s68
    %s85 = sphi 0, %s69
  $region4: #{netD_forward.4} parent=0 // loop_header_branch
    %11 = sbr.rel (%p9) target = $region8
  $region5: #{netD_forward.4} parent=0 // loop_body
    %s13 = ssub.s32 %s8, 1
    %s14 = ssub.s32 %s8, 2
    %s15 = sadd.s32 %s8, 1
    %s16 = ssub.s32 %s8, %s15
    %p17 = scmp.eq.s32.totalorder %s16, 0
    %s19 = sadd.s32 %s18, 1
    %s20 = scalar_select %p17, %s18, %s19
    %p23 = pneg %p17
    %p24 = scmp.eq.s32.totalorder %s8, 1
    %p25 = por %p23, %p24
    %p26 = scmp.ne.s32.totalorder %s18, %s21
    %p27 = scmp.eq.s32.totalorder %s8, 0
    %p28 = por %p26, %p27
    %p29 = scmp.ne.s32.totalorder %s18, %s21
    %p30 = scmp.eq.s32.totalorder %s13, 1
    %p31 = por %p29, %p30
    %p32 = scmp.ne.s32.totalorder %s21, %s22
    %p33 = scmp.eq.s32.totalorder %s13, 0
    %p34 = por %p32, %p33
    %p35 = scmp.ne.s32.totalorder %s21, %s22
    %p36 = scmp.eq.s32.totalorder %s14, 1
    %p37 = por %p35, %p36
    %p39 = scmp.ne.s32.totalorder %s22, %s38
    %p40 = scmp.eq.s32.totalorder %s14, 0
    %p41 = por %p39, %p40
    %s43 = sadd.s32 %s42, 1
    %p46 = scmp.eq.s32.totalorder %s8, 1
    %p47 = scmp.ne.s32.totalorder %s42, %s44
    %p48 = scmp.eq.s32.totalorder %s8, 0
    %p49 = por %p47, %p48
    %p50 = scmp.ne.s32.totalorder %s42, %s44
    %p51 = scmp.eq.s32.totalorder %s13, 1
    %p52 = por %p50, %p51
    %p53 = scmp.ne.s32.totalorder %s44, %s45
    %p54 = scmp.eq.s32.totalorder %s13, 0
    %p55 = por %p53, %p54
    %p56 = scmp.ne.s32.totalorder %s44, %s45
    %p57 = scmp.eq.s32.totalorder %s14, 1
    %p58 = por %p56, %p57
    %p60 = scmp.ne.s32.totalorder %s45, %s59
    %p61 = scmp.eq.s32.totalorder %s14, 0
    %p62 = por %p60, %p61
    %s63 = ssub.s32 %s8, %s15
    %p64 = scmp.eq.s32.totalorder %s63, 0
    %s66 = sadd.s32 %s65, 1
    %s67 = scalar_select %p64, %s65, %s66
    %p70 = pneg %p64
    %p71 = scmp.eq.s32.totalorder %s8, 1
    %p72 = por %p70, %p71
    %p73 = scmp.ne.s32.totalorder %s65, %s68
    %p74 = scmp.eq.s32.totalorder %s8, 0
    %p75 = por %p73, %p74
    %p76 = scmp.ne.s32.totalorder %s65, %s68
    %p77 = scmp.eq.s32.totalorder %s13, 1
    %p78 = por %p76, %p77
    %p79 = scmp.ne.s32.totalorder %s68, %s69
    %p80 = scmp.eq.s32.totalorder %s13, 0
    %p81 = por %p79, %p80
    %p82 = scmp.ne.s32.totalorder %s68, %s69
    %p83 = scmp.eq.s32.totalorder %s14, 1
    %p84 = por %p82, %p83
    %p86 = scmp.ne.s32.totalorder %s69, %s85
    %p87 = scmp.eq.s32.totalorder %s14, 0
    %p88 = por %p86, %p87
    %p89 = scmp.le.s32.totalorder 1, %s8
    %p90 = scmp.lt.s32.totalorder %s8, 3
    %p91 = pnand %p89, %p90
    %p92 = pneg %p91
    // Predicated region
    $region9: #{netD_forward.4} parent=5 // pred_check
      _
    $region10: #{netD_forward.4} parent=5 // pred_check_branch
      %94 = sbr.rel (%p91) target = $region12
    $region11: #{netD_forward.4} parent=5 // pred_region
      %s95 = ssub.s32 %s8, 1
      // Predicated region
      $region13: #{netD_forward.4} parent=11 // pred_check
        %p96 = pneg %p55
      $region14: #{netD_forward.4} parent=11 // pred_check_branch
        %98 = sbr.rel (%p96) target = $region16
      $region15: #{netD_forward.4} parent=11 // pred_region
        _
      $region16: #{netD_forward.4} parent=11 // pred_fallthru
        _
    $region12: #{netD_forward.4} parent=5 // pred_fallthru
      _
    %p99 = scmp.lt.s32.totalorder %s8, 2
    // Predicated region
    $region17: #{netD_forward.4} parent=5 // pred_check
      %p100 = pneg %p99
    $region18: #{netD_forward.4} parent=5 // pred_check_branch
      %102 = sbr.rel (%p100) target = $region20
    $region19: #{netD_forward.4} parent=5 // pred_region
      // Predicated region
      $region21: #{netD_forward.4} parent=19 // pred_check
        %p103 = pneg %p28
      $region22: #{netD_forward.4} parent=19 // pred_check_branch
        %105 = sbr.rel (%p103) target = $region24
      $region23: #{netD_forward.4} parent=19 // pred_region
        %p106 = scmp.lt.s32.totalorder %s8, 1
        %s107 = scalar_select %p106, %s8, 1
        %s108 = smul.addr %s107, 37
        %s109 = smul.addr %s108, 4
        %s110 = scalar_lea.vmem %s0, %s109
      $region24: #{netD_forward.4} parent=19 // pred_fallthru
        _
    $region20: #{netD_forward.4} parent=5 // pred_fallthru
      _
    %p111 = scmp.le.s32.totalorder 1, %s8
    %p112 = scmp.lt.s32.totalorder %s8, 3
    %p113 = pnand %p111, %p112
    %p114 = pneg %p113
    // Predicated region
    $region25: #{netD_forward.4} parent=5 // pred_check
      _
    $region26: #{netD_forward.4} parent=5 // pred_check_branch
      %116 = sbr.rel (%p113) target = $region28
    $region27: #{netD_forward.4} parent=5 // pred_region
      %s117 = ssub.s32 %s8, 1
      %p118 = scmp.lt.s32.totalorder %s13, 1
      %s119 = scalar_select %p118, %s13, 1
      %s120 = smul.addr %s119, 37
      %s121 = smul.addr %s120, 4
      %s122 = scalar_lea.vmem %s0, %s121
      %p123 = pneg %p34
      %p124 = pneg %p31
      %p125 = pneg %p55
      %p126 = pneg %p52
      %p127 = pneg %p81
      %p128 = pneg %p78
      %p129 = scmp.lt.s32.totalorder %s13, 1
      %s130 = scalar_select %p129, %s13, 1
      %s131 = smul.addr %s130, 34
      %s132 = smul.addr %s131, 4
      %s133 = scalar_lea.vmem %s2, %s132
      %p134 = scmp.lt.s32.totalorder %s13, 1
      %s135 = scalar_select %p134, %s13, 1
      %s136 = smul.addr %s135, 37
      %s137 = smul.addr %s136, 4
      %s138 = scalar_lea.vmem %s0, %s137
      %p139 = scmp.lt.s32.totalorder %s13, 1
      %s140 = scalar_select %p139, %s13, 1
      %s141 = smul.addr %s140, 34
      %s142 = smul.addr %s141, 4
      %s143 = scalar_lea.vmem %s2, %s142
      %v145 = vld [vmem:[%s138] sm:$0xf]
      %v146 = vld [vmem:[%s138 + $0x4] sm:$0xf]
      %v147 = vld [vmem:[%s138 + $0x8] sm:$0xf]
      %v148 = vld [vmem:[%s138 + $0xc] sm:$0xf]
      %v149 = vld [vmem:[%s138 + $0x10] sm:$0xf]
      %v150 = vld [vmem:[%s138 + $0x14] sm:$0xf]
      %v151 = vld [vmem:[%s138 + $0x18] sm:$0xf]
      %v152 = vld [vmem:[%s138 + $0x1c] sm:$0xf]
      %v153 = vld [vmem:[%s138 + $0x20] sm:$0xf]
      %v154 = vld [vmem:[%s138 + $0x24] sm:$0xf]
      %v155 = vld [vmem:[%s138 + $0x28] sm:$0xf]
      %v156 = vld [vmem:[%s138 + $0x2c] sm:$0xf]
      %v157 = vld [vmem:[%s138 + $0x30] sm:$0xf]
      %v158 = vld [vmem:[%s138 + $0x34] sm:$0xf]
      %v159 = vld [vmem:[%s138 + $0x38] sm:$0xf]
      %v160 = vld [vmem:[%s138 + $0x3c] sm:$0xf]
      %v161 = vld [vmem:[%s138 + $0x40] sm:$0xf]
      %v162 = vld [vmem:[%s138 + $0x44] sm:$0xf]
      %v163 = vld [vmem:[%s138 + $0x48] sm:$0xf]
      %v164 = vld [vmem:[%s138 + $0x4c] sm:$0xf]
      %v165 = vld [vmem:[%s138 + $0x50] sm:$0xf]
      %v166 = vld [vmem:[%s138 + $0x54] sm:$0xf]
      %v167 = vld [vmem:[%s138 + $0x58] sm:$0xf]
      %v168 = vld [vmem:[%s138 + $0x5c] sm:$0xf]
      %v169 = vld [vmem:[%s138 + $0x60] sm:$0xf]
      %v170 = vld [vmem:[%s138 + $0x64] sm:$0xf]
      %v171 = vld [vmem:[%s138 + $0x68] sm:$0xf]
      %v172 = vld [vmem:[%s138 + $0x6c] sm:$0xf]
      %v173 = vld [vmem:[%s138 + $0x70] sm:$0xf]
      %v174 = vld [vmem:[%s138 + $0x74] sm:$0xf]
      %v175 = vld [vmem:[%s138 + $0x78] sm:$0xf]
      %v176 = vld [vmem:[%s138 + $0x7c] sm:$0xf]
      %v177 = vld [vmem:[%s138 + $0x80] sm:$0xf]
      %v178 = vld [vmem:[%s138 + $0x84] sm:$0xf]
      %v179 = vld [vmem:[%s138 + $0x88] sm:$0xf]
      %v180 = vld [vmem:[%s138 + $0x8c] sm:$0xf]
      %v181 = vld [vmem:[%s138 + $0x90] sm:$0xf]
      %v182 = vld [vmem:[%s1] sm:$0x3]
      %v220 = vunpack.c.l.b16 %v145
      %v221 = vunpack.c.l.b16 %v146
      %v222 = vunpack.c.l.b16 %v147
      %v223 = vunpack.c.l.b16 %v148
      %v224 = vunpack.c.l.b16 %v149
      %v225 = vunpack.c.l.b16 %v150
      %v226 = vunpack.c.l.b16 %v151
      %v227 = vunpack.c.l.b16 %v152
      %v228 = vunpack.c.l.b16 %v153
      %v229 = vunpack.c.l.b16 %v154
      %v230 = vunpack.c.l.b16 %v155
      %v231 = vunpack.c.l.b16 %v156
      %v232 = vunpack.c.l.b16 %v157
      %v233 = vunpack.c.l.b16 %v158
      %v234 = vunpack.c.l.b16 %v159
      %v235 = vunpack.c.l.b16 %v160
      %v236 = vunpack.c.l.b16 %v161
      %v237 = vunpack.c.l.b16 %v162
      %v238 = vunpack.c.l.b16 %v163
      %v239 = vunpack.c.l.b16 %v164
      %v240 = vunpack.c.l.b16 %v165
      %v241 = vunpack.c.l.b16 %v166
      %v242 = vunpack.c.l.b16 %v167
      %v243 = vunpack.c.l.b16 %v168
      %v244 = vunpack.c.l.b16 %v169
      %v245 = vunpack.c.l.b16 %v170
      %v246 = vunpack.c.l.b16 %v171
      %v247 = vunpack.c.l.b16 %v172
      %v248 = vunpack.c.l.b16 %v173
      %v249 = vunpack.c.l.b16 %v174
      %v250 = vunpack.c.l.b16 %v175
      %v251 = vunpack.c.l.b16 %v176
      %v252 = vunpack.c.l.b16 %v177
      %v253 = vunpack.c.l.b16 %v178
      %v254 = vunpack.c.l.b16 %v179
      %v255 = vunpack.c.l.b16 %v180
      %v256 = vunpack.c.l.b16 %v181
      %v257 = vpack.c.b16 %v221, %v220
      %v258 = vpack.c.b16 %v223, %v222
      %v259 = vpack.c.b16 %v225, %v224
      %v260 = vpack.c.b16 %v227, %v226
      %v261 = vpack.c.b16 %v229, %v228
      %v262 = vpack.c.b16 %v231, %v230
      %v263 = vpack.c.b16 %v233, %v232
      %v264 = vpack.c.b16 %v235, %v234
      %v265 = vpack.c.b16 %v237, %v236
      %v266 = vpack.c.b16 %v239, %v238
      %v267 = vpack.c.b16 %v241, %v240
      %v268 = vpack.c.b16 %v243, %v242
      %v269 = vpack.c.b16 %v245, %v244
      %v270 = vpack.c.b16 %v247, %v246
      %v271 = vpack.c.b16 %v249, %v248
      %v272 = vpack.c.b16 %v251, %v250
      %v273 = vpack.c.b16 %v253, %v252
      %v274 = vpack.c.b16 %v255, %v254
      %v275 = vpack.c.b16 %v256, %v256
      %vm276 = vcmask 31744
      %v278 = vsel %vm276, %v257, 0
      %v281 = vsel %vm276, %v258, 0
      %v284 = vsel %vm276, %v259, 0
      %v287 = vsel %vm276, %v260, 0
      %v290 = vsel %vm276, %v261, 0
      %v293 = vsel %vm276, %v262, 0
      %v296 = vsel %vm276, %v263, 0
      %v299 = vsel %vm276, %v264, 0
      %v302 = vsel %vm276, %v265, 0
      %v305 = vsel %vm276, %v266, 0
      %v308 = vsel %vm276, %v267, 0
      %v311 = vsel %vm276, %v268, 0
      %v314 = vsel %vm276, %v269, 0
      %v317 = vsel %vm276, %v270, 0
      %v320 = vsel %vm276, %v271, 0
      %v323 = vsel %vm276, %v272, 0
      %v326 = vsel %vm276, %v273, 0
      %v329 = vsel %vm276, %v274, 0
      %v332 = vsel %vm276, %v275, 0
      %vm334 = vcmask 1041408
      %v336 = vsel %vm334, %v182, 0
      %338 = vmatprep.subr.bf16.mxu0 0
      %339 = vmatpush1.bf16.msra.mxu0 %v336
      %340 = vmatprep.subr.bf16.mxu0 0
      %341 = vmatpush1.bf16.msra.mxu0 0
      %342 = vmatprep.subr.bf16.mxu0 0
      %343 = vmatpush1.bf16.msra.mxu0 0
      %344 = vmatprep.subr.bf16.mxu0 0
      %345 = vmatpush1.bf16.msra.mxu0 0
      %346 = vmatprep.subr.bf16.mxu0 0
      %347 = vmatpush1.bf16.msra.mxu0 0
      %348 = vmatprep.subr.bf16.mxu0 0
      %349 = vmatpush1.bf16.msra.mxu0 0
      %350 = vmatprep.subr.bf16.mxu0 0
      %351 = vmatpush1.bf16.msra.mxu0 0
      %352 = vmatprep.subr.bf16.mxu0 0
      %353 = vmatpush1.bf16.msra.mxu0 0
      %354 = vmatprep.subr.bf16.mxu0 0
      %355 = vmatpush1.bf16.msra.mxu0 0
      %356 = vmatprep.subr.bf16.mxu0 0
      %357 = vmatpush1.bf16.msra.mxu0 0
      %358 = vmatprep.subr.bf16.mxu0 0
      %359 = vmatpush1.bf16.msra.mxu0 0
      %360 = vmatprep.subr.bf16.mxu0 0
      %361 = vmatpush1.bf16.msra.mxu0 0
      %362 = vmatprep.subr.bf16.mxu0 0
      %363 = vmatpush1.bf16.msra.mxu0 0
      %364 = vmatprep.subr.bf16.mxu0 0
      %365 = vmatpush1.bf16.msra.mxu0 0
      %366 = vmatprep.subr.bf16.mxu0 0
      %367 = vmatpush1.bf16.msra.mxu0 0
      %368 = vmatprep.subr.bf16.mxu0 0
      %369 = vmatpush1.bf16.msra.mxu0 0
      %370 = vmatprep.mubr.bf16.mxu0 0
      %371 = vmatmul.mubr.bf16.gmra.mrb[0].mxu0 %v278
      %v372 = vpop.f32.mrb[0].mxu0
      %v373 = vadd.f32 0.0, %v372
      %v374 = vpop.f32.mrb[0].mxu0
      %v375 = vpop.f32.mrb[0].mxu0
      %v376 = vadd.f32 0.0, %v375
      %v377 = vpop.f32.mrb[0].mxu0
      %378 = vmatprep.mubr.bf16.mxu0 0
      %379 = vmatmul.mubr.bf16.gmra.mrb[0].mxu0 %v281
      %v380 = vpop.f32.mrb[0].mxu0
      %v381 = vadd.f32 0.0, %v380
      %v382 = vpop.f32.mrb[0].mxu0
      %v383 = vpop.f32.mrb[0].mxu0
      %v384 = vadd.f32 0.0, %v383
      %v385 = vpop.f32.mrb[0].mxu0
      %386 = vmatprep.mubr.bf16.mxu0 0
      %387 = vmatmul.mubr.bf16.gmra.mrb[0].mxu0 %v284
      %v388 = vpop.f32.mrb[0].mxu0
      %v389 = vadd.f32 0.0, %v388
      %v390 = vpop.f32.mrb[0].mxu0
      %v391 = vpop.f32.mrb[0].mxu0
      %v392 = vadd.f32 0.0, %v391
      %v393 = vpop.f32.mrb[0].mxu0
      %394 = vmatprep.mubr.bf16.mxu0 0
      %395 = vmatmul.mubr.bf16.gmra.mrb[0].mxu0 %v287
      %v396 = vpop.f32.mrb[0].mxu0
      %v397 = vadd.f32 0.0, %v396
      %v398 = vpop.f32.mrb[0].mxu0
      %v399 = vpop.f32.mrb[0].mxu0
      %v400 = vadd.f32 0.0, %v399
      %v401 = vpop.f32.mrb[0].mxu0
      %402 = vmatprep.mubr.bf16.mxu0 0
      %403 = vmatmul.mubr.bf16.gmra.mrb[0].mxu0 %v290
      %v404 = vpop.f32.mrb[0].mxu0
      %v405 = vadd.f32 0.0, %v404
      %v406 = vpop.f32.mrb[0].mxu0
      %v407 = vpop.f32.mrb[0].mxu0
      %v408 = vadd.f32 0.0, %v407
      %v409 = vpop.f32.mrb[0].mxu0
      %410 = vmatprep.mubr.bf16.mxu0 0
      %411 = vmatmul.mubr.bf16.gmra.mrb[0].mxu0 %v293
      %v412 = vpop.f32.mrb[0].mxu0
      %v413 = vadd.f32 0.0, %v412
      %v414 = vpop.f32.mrb[0].mxu0
      %v415 = vpop.f32.mrb[0].mxu0
      %v416 = vadd.f32 0.0, %v415
      %v417 = vpop.f32.mrb[0].mxu0
      %418 = vmatprep.mubr.bf16.mxu0 0
      %419 = vmatmul.mubr.bf16.gmra.mrb[0].mxu0 %v296
      %v420 = vpop.f32.mrb[0].mxu0
      %v421 = vadd.f32 0.0, %v420
      %v422 = vpop.f32.mrb[0].mxu0
      %v423 = vpop.f32.mrb[0].mxu0
      %v424 = vadd.f32 0.0, %v423
      %v425 = vpop.f32.mrb[0].mxu0
      %426 = vmatprep.mubr.bf16.mxu0 0
      %427 = vmatmul.mubr.bf16.gmra.mrb[0].mxu0 %v299
      %v428 = vpop.f32.mrb[0].mxu0
      %v429 = vadd.f32 0.0, %v428
      %v430 = vpop.f32.mrb[0].mxu0
      %v431 = vpop.f32.mrb[0].mxu0
      %v432 = vadd.f32 0.0, %v431
      %v433 = vpop.f32.mrb[0].mxu0
      %434 = vmatprep.mubr.bf16.mxu0 0
      %435 = vmatmul.mubr.bf16.gmra.mrb[0].mxu0 %v302
      %v436 = vpop.f32.mrb[0].mxu0
      %v437 = vadd.f32 0.0, %v436
      %v438 = vpop.f32.mrb[0].mxu0
      %v439 = vpop.f32.mrb[0].mxu0
      %v440 = vadd.f32 0.0, %v439
      %v441 = vpop.f32.mrb[0].mxu0
      %442 = vmatprep.mubr.bf16.mxu0 0
      %443 = vmatmul.mubr.bf16.gmra.mrb[0].mxu0 %v305
      %v444 = vpop.f32.mrb[0].mxu0
      %v445 = vadd.f32 0.0, %v444
      %v446 = vpop.f32.mrb[0].mxu0
      %v447 = vpop.f32.mrb[0].mxu0
      %v448 = vadd.f32 0.0, %v447
      %v449 = vpop.f32.mrb[0].mxu0
      %450 = vmatprep.mubr.bf16.mxu0 0
      %451 = vmatmul.mubr.bf16.gmra.mrb[0].mxu0 %v308
      %v452 = vpop.f32.mrb[0].mxu0
      %v453 = vadd.f32 0.0, %v452
      %v454 = vpop.f32.mrb[0].mxu0
      %v455 = vpop.f32.mrb[0].mxu0
      %v456 = vadd.f32 0.0, %v455
      %v457 = vpop.f32.mrb[0].mxu0
      %458 = vmatprep.mubr.bf16.mxu0 0
      %459 = vmatmul.mubr.bf16.gmra.mrb[0].mxu0 %v311
      %v460 = vpop.f32.mrb[0].mxu0
      %v461 = vadd.f32 0.0, %v460
      %v462 = vpop.f32.mrb[0].mxu0
      %v463 = vpop.f32.mrb[0].mxu0
      %v464 = vadd.f32 0.0, %v463
      %v465 = vpop.f32.mrb[0].mxu0
      %466 = vmatprep.mubr.bf16.mxu0 0
      %467 = vmatmul.mubr.bf16.gmra.mrb[0].mxu0 %v314
      %v468 = vpop.f32.mrb[0].mxu0
      %v469 = vadd.f32 0.0, %v468
      %v470 = vpop.f32.mrb[0].mxu0
      %v471 = vpop.f32.mrb[0].mxu0
      %v472 = vadd.f32 0.0, %v471
      %v473 = vpop.f32.mrb[0].mxu0
      %474 = vmatprep.mubr.bf16.mxu0 0
      %475 = vmatmul.mubr.bf16.gmra.mrb[0].mxu0 %v317
      %v476 = vpop.f32.mrb[0].mxu0
      %v477 = vadd.f32 0.0, %v476
      %v478 = vpop.f32.mrb[0].mxu0
      %v479 = vpop.f32.mrb[0].mxu0
      %v480 = vadd.f32 0.0, %v479
      %v481 = vpop.f32.mrb[0].mxu0
      %482 = vmatprep.mubr.bf16.mxu0 0
      %483 = vmatmul.mubr.bf16.gmra.mrb[0].mxu0 %v320
      %v484 = vpop.f32.mrb[0].mxu0
      %v485 = vadd.f32 0.0, %v484
      %v486 = vpop.f32.mrb[0].mxu0
      %v487 = vpop.f32.mrb[0].mxu0
      %v488 = vadd.f32 0.0, %v487
      %v489 = vpop.f32.mrb[0].mxu0
      %490 = vmatprep.mubr.bf16.mxu0 0
      %491 = vmatmul.mubr.bf16.gmra.mrb[0].mxu0 %v323
      %v492 = vpop.f32.mrb[0].mxu0
      %v493 = vadd.f32 0.0, %v492
      %v494 = vpop.f32.mrb[0].mxu0
      %v495 = vpop.f32.mrb[0].mxu0
      %v496 = vadd.f32 0.0, %v495
      %v497 = vpop.f32.mrb[0].mxu0
      %498 = vmatprep.mubr.bf16.mxu0 0
      %499 = vmatmul.mubr.bf16.gmra.mrb[0].mxu0 %v326
      %v500 = vpop.f32.mrb[0].mxu0
      %v501 = vadd.f32 0.0, %v500
      %v502 = vpop.f32.mrb[0].mxu0
      %v503 = vpop.f32.mrb[0].mxu0
      %v504 = vadd.f32 0.0, %v503
      %v505 = vpop.f32.mrb[0].mxu0
      %506 = vmatprep.mubr.bf16.mxu0 0
      %507 = vmatmul.mubr.bf16.gmra.mrb[0].mxu0 %v329
      %v508 = vpop.f32.mrb[0].mxu0
      %v509 = vpop.f32.mrb[0].mxu0
      %v510 = vpop.f32.mrb[0].mxu0
      %v511 = vpop.f32.mrb[0].mxu0
      %512 = vmatprep.mubr.bf16.mxu0 0
      %513 = vmatmul.mubr.bf16.gmra.mrb[0].mxu0 %v332
      %v514 = vpop.f32.mrb[0].mxu0
      %v515 = vpop.f32.mrb[0].mxu0
      %v516 = vpop.f32.mrb[0].mxu0
      %v517 = vpop.f32.mrb[0].mxu0
      %518 = vdwg.mxu0
      %s519 = scalar_lea.vmem %s1, 2
      %v520 = vld [vmem:[%s519] sm:$0x3]
      %v522 = vsel %vm334, %v520, 0
      %524 = vmatprep.subr.bf16.mxu0 0
      %525 = vmatpush1.bf16.msra.mxu0 %v522
      %526 = vmatprep.subr.bf16.mxu0 0
      %527 = vmatpush1.bf16.msra.mxu0 0
      %528 = vmatprep.subr.bf16.mxu0 0
      %529 = vmatpush1.bf16.msra.mxu0 0
      %530 = vmatprep.subr.bf16.mxu0 0
      %531 = vmatpush1.bf16.msra.mxu0 0
      %532 = vmatprep.subr.bf16.mxu0 0
      %533 = vmatpush1.bf16.msra.mxu0 0
      %534 = vmatprep.subr.bf16.mxu0 0
      %535 = vmatpush1.bf16.msra.mxu0 0
      %536 = vmatprep.subr.bf16.mxu0 0
      %537 = vmatpush1.bf16.msra.mxu0 0
      %538 = vmatprep.subr.bf16.mxu0 0
      %539 = vmatpush1.bf16.msra.mxu0 0
      %540 = vmatprep.subr.bf16.mxu0 0
      %541 = vmatpush1.bf16.msra.mxu0 0
      %542 = vmatprep.subr.bf16.mxu0 0
      %543 = vmatpush1.bf16.msra.mxu0 0
      %544 = vmatprep.subr.bf16.mxu0 0
      %545 = vmatpush1.bf16.msra.mxu0 0
      %546 = vmatprep.subr.bf16.mxu0 0
      %547 = vmatpush1.bf16.msra.mxu0 0
      %548 = vmatprep.subr.bf16.mxu0 0
      %549 = vmatpush1.bf16.msra.mxu0 0
      %550 = vmatprep.subr.bf16.mxu0 0
      %551 = vmatpush1.bf16.msra.mxu0 0
      %552 = vmatprep.subr.bf16.mxu0 0
      %553 = vmatpush1.bf16.msra.mxu0 0
      %554 = vmatprep.subr.bf16.mxu0 0
      %555 = vmatpush1.bf16.msra.mxu0 0
      %556 = vmatprep.mubr.bf16.mxu0 0
      %557 = vmatmul.mubr.bf16.gmra.mrb[0].mxu0 %v278
      %v558 = vpop.f32.mrb[0].mxu0
      %v559 = vadd.f32 0.0, %v558
      %v560 = vpop.f32.mrb[0].mxu0
      %v561 = vpop.f32.mrb[0].mxu0
      %v562 = vadd.f32 0.0, %v561
      %v563 = vpop.f32.mrb[0].mxu0
      %564 = vmatprep.mubr.bf16.mxu0 0
      %565 = vmatmul.mubr.bf16.gmra.mrb[0].mxu0 %v281
      %v566 = vpop.f32.mrb[0].mxu0
      %v567 = vadd.f32 0.0, %v566
      %v568 = vpop.f32.mrb[0].mxu0
      %v569 = vpop.f32.mrb[0].mxu0
      %v570 = vadd.f32 0.0, %v569
      %v571 = vpop.f32.mrb[0].mxu0
      %572 = vmatprep.mubr.bf16.mxu0 0
      %573 = vmatmul.mubr.bf16.gmra.mrb[0].mxu0 %v284
      %v574 = vpop.f32.mrb[0].mxu0
      %v575 = vadd.f32 0.0, %v574
      %v576 = vpop.f32.mrb[0].mxu0
      %v577 = vpop.f32.mrb[0].mxu0
      %v578 = vadd.f32 0.0, %v577
      %v579 = vpop.f32.mrb[0].mxu0
      %580 = vmatprep.mubr.bf16.mxu0 0
      %581 = vmatmul.mubr.bf16.gmra.mrb[0].mxu0 %v287
      %v582 = vpop.f32.mrb[0].mxu0
      %v583 = vadd.f32 0.0, %v582
      %v584 = vpop.f32.mrb[0].mxu0
      %v585 = vpop.f32.mrb[0].mxu0
      %v586 = vadd.f32 0.0, %v585
      %v587 = vpop.f32.mrb[0].mxu0
      %588 = vmatprep.mubr.bf16.mxu0 0
      %589 = vmatmul.mubr.bf16.gmra.mrb[0].mxu0 %v290
      %v590 = vpop.f32.mrb[0].mxu0
      %v591 = vadd.f32 0.0, %v590
      %v592 = vpop.f32.mrb[0].mxu0
      %v593 = vpop.f32.mrb[0].mxu0
      %v594 = vadd.f32 0.0, %v593
      %v595 = vpop.f32.mrb[0].mxu0
      %596 = vmatprep.mubr.bf16.mxu0 0
      %597 = vmatmul.mubr.bf16.gmra.mrb[0].mxu0 %v293
      %v598 = vpop.f32.mrb[0].mxu0
      %v599 = vadd.f32 0.0, %v598
      %v600 = vpop.f32.mrb[0].mxu0
      %v601 = vpop.f32.mrb[0].mxu0
      %v602 = vadd.f32 0.0, %v601
      %v603 = vpop.f32.mrb[0].mxu0
      %604 = vmatprep.mubr.bf16.mxu0 0
      %605 = vmatmul.mubr.bf16.gmra.mrb[0].mxu0 %v296
      %v606 = vpop.f32.mrb[0].mxu0
      %v607 = vadd.f32 0.0, %v606
      %v608 = vpop.f32.mrb[0].mxu0
      %v609 = vpop.f32.mrb[0].mxu0
      %v610 = vadd.f32 0.0, %v609
      %v611 = vpop.f32.mrb[0].mxu0
      %612 = vmatprep.mubr.bf16.mxu0 0
      %613 = vmatmul.mubr.bf16.gmra.mrb[0].mxu0 %v299
      %v614 = vpop.f32.mrb[0].mxu0
      %v615 = vadd.f32 0.0, %v614
      %v616 = vpop.f32.mrb[0].mxu0
      %v617 = vpop.f32.mrb[0].mxu0
      %v618 = vadd.f32 0.0, %v617
      %v619 = vpop.f32.mrb[0].mxu0
      %620 = vmatprep.mubr.bf16.mxu0 0
      %621 = vmatmul.mubr.bf16.gmra.mrb[0].mxu0 %v302
      %v622 = vpop.f32.mrb[0].mxu0
      %v623 = vadd.f32 0.0, %v622
      %v624 = vpop.f32.mrb[0].mxu0
      %v625 = vpop.f32.mrb[0].mxu0
      %v626 = vadd.f32 0.0, %v625
      %v627 = vpop.f32.mrb[0].mxu0
      %628 = vmatprep.mubr.bf16.mxu0 0
      %629 = vmatmul.mubr.bf16.gmra.mrb[0].mxu0 %v305
      %v630 = vpop.f32.mrb[0].mxu0
      %v631 = vadd.f32 0.0, %v630
      %v632 = vpop.f32.mrb[0].mxu0
      %v633 = vpop.f32.mrb[0].mxu0
      %v634 = vadd.f32 0.0, %v633
      %v635 = vpop.f32.mrb[0].mxu0
      %636 = vmatprep.mubr.bf16.mxu0 0
      %637 = vmatmul.mubr.bf16.gmra.mrb[0].mxu0 %v308
      %v638 = vpop.f32.mrb[0].mxu0
      %v639 = vadd.f32 0.0, %v638
      %v640 = vpop.f32.mrb[0].mxu0
      %v641 = vpop.f32.mrb[0].mxu0
      %v642 = vadd.f32 0.0, %v641
      %v643 = vpop.f32.mrb[0].mxu0
      %644 = vmatprep.mubr.bf16.mxu0 0
      %645 = vmatmul.mubr.bf16.gmra.mrb[0].mxu0 %v311
      %v646 = vpop.f32.mrb[0].mxu0
      %v647 = vadd.f32 0.0, %v646
      %v648 = vpop.f32.mrb[0].mxu0
      %v649 = vpop.f32.mrb[0].mxu0
      %v650 = vadd.f32 0.0, %v649
      %v651 = vpop.f32.mrb[0].mxu0
      %652 = vmatprep.mubr.bf16.mxu0 0
      %653 = vmatmul.mubr.bf16.gmra.mrb[0].mxu0 %v314
      %v654 = vpop.f32.mrb[0].mxu0
      %v655 = vadd.f32 0.0, %v654
      %v656 = vpop.f32.mrb[0].mxu0
      %v657 = vpop.f32.mrb[0].mxu0
      %v658 = vadd.f32 0.0, %v657
      %v659 = vpop.f32.mrb[0].mxu0
      %660 = vmatprep.mubr.bf16.mxu0 0
      %661 = vmatmul.mubr.bf16.gmra.mrb[0].mxu0 %v317
      %v662 = vpop.f32.mrb[0].mxu0
      %v663 = vadd.f32 0.0, %v662
      %v664 = vpop.f32.mrb[0].mxu0
      %v665 = vpop.f32.mrb[0].mxu0
      %v666 = vadd.f32 0.0, %v665
      %v667 = vpop.f32.mrb[0].mxu0
      %668 = vmatprep.mubr.bf16.mxu0 0
      %669 = vmatmul.mubr.bf16.gmra.mrb[0].mxu0 %v320
      %v670 = vpop.f32.mrb[0].mxu0
      %v671 = vadd.f32 0.0, %v670
      %v672 = vpop.f32.mrb[0].mxu0
      %v673 = vpop.f32.mrb[0].mxu0
      %v674 = vadd.f32 0.0, %v673
      %v675 = vpop.f32.mrb[0].mxu0
      %676 = vmatprep.mubr.bf16.mxu0 0
      %677 = vmatmul.mubr.bf16.gmra.mrb[0].mxu0 %v323
      %v678 = vpop.f32.mrb[0].mxu0
      %v679 = vadd.f32 0.0, %v678
      %v680 = vpop.f32.mrb[0].mxu0
      %v681 = vpop.f32.mrb[0].mxu0
      %v682 = vadd.f32 0.0, %v681
      %v683 = vpop.f32.mrb[0].mxu0
      %684 = vmatprep.mubr.bf16.mxu0 0
      %685 = vmatmul.mubr.bf16.gmra.mrb[0].mxu0 %v326
      %v686 = vpop.f32.mrb[0].mxu0
      %v687 = vadd.f32 0.0, %v686
      %v688 = vpop.f32.mrb[0].mxu0
      %v689 = vpop.f32.mrb[0].mxu0
      %v690 = vadd.f32 0.0, %v689
      %v691 = vpop.f32.mrb[0].mxu0
      %692 = vmatprep.mubr.bf16.mxu0 0
      %693 = vmatmul.mubr.bf16.gmra.mrb[0].mxu0 %v329
      %v694 = vpop.f32.mrb[0].mxu0
      %v695 = vadd.f32 0.0, %v694
      %v696 = vpop.f32.mrb[0].mxu0
      %v697 = vpop.f32.mrb[0].mxu0
      %v698 = vpop.f32.mrb[0].mxu0
      %699 = vmatprep.mubr.bf16.mxu0 0
      %700 = vmatmul.mubr.bf16.gmra.mrb[0].mxu0 %v332
      %v701 = vpop.f32.mrb[0].mxu0
      %v702 = vpop.f32.mrb[0].mxu0
      %v703 = vpop.f32.mrb[0].mxu0
      %v704 = vpop.f32.mrb[0].mxu0
      %705 = vdwg.mxu0
      %vm741 = vcmask 1046528
      %v742 = vrot.slane %v559, 1
      %v743 = vrot.slane %v562, 1
      %v744 = vsel %vm741, %v742, %v743
      %v745 = vrot.slane %v567, 1
      %v746 = vsel %vm741, %v743, %v745
      %v747 = vrot.slane %v570, 1
      %v748 = vsel %vm741, %v745, %v747
      %v749 = vrot.slane %v575, 1
      %v750 = vsel %vm741, %v747, %v749
      %v751 = vrot.slane %v578, 1
      %v752 = vsel %vm741, %v749, %v751
      %v753 = vrot.slane %v583, 1
      %v754 = vsel %vm741, %v751, %v753
      %v755 = vrot.slane %v586, 1
      %v756 = vsel %vm741, %v753, %v755
      %v757 = vrot.slane %v591, 1
      %v758 = vsel %vm741, %v755, %v757
      %v759 = vrot.slane %v594, 1
      %v760 = vsel %vm741, %v757, %v759
      %v761 = vrot.slane %v599, 1
      %v762 = vsel %vm741, %v759, %v761
      %v763 = vrot.slane %v602, 1
      %v764 = vsel %vm741, %v761, %v763
      %v765 = vrot.slane %v607, 1
      %v766 = vsel %vm741, %v763, %v765
      %v767 = vrot.slane %v610, 1
      %v768 = vsel %vm741, %v765, %v767
      %v769 = vrot.slane %v615, 1
      %v770 = vsel %vm741, %v767, %v769
      %v771 = vrot.slane %v618, 1
      %v772 = vsel %vm741, %v769, %v771
      %v773 = vrot.slane %v623, 1
      %v774 = vsel %vm741, %v771, %v773
      %v775 = vrot.slane %v626, 1
      %v776 = vsel %vm741, %v773, %v775
      %v777 = vrot.slane %v631, 1
      %v778 = vsel %vm741, %v775, %v777
      %v779 = vrot.slane %v634, 1
      %v780 = vsel %vm741, %v777, %v779
      %v781 = vrot.slane %v639, 1
      %v782 = vsel %vm741, %v779, %v781
      %v783 = vrot.slane %v642, 1
      %v784 = vsel %vm741, %v781, %v783
      %v785 = vrot.slane %v647, 1
      %v786 = vsel %vm741, %v783, %v785
      %v787 = vrot.slane %v650, 1
      %v788 = vsel %vm741, %v785, %v787
      %v789 = vrot.slane %v655, 1
      %v790 = vsel %vm741, %v787, %v789
      %v791 = vrot.slane %v658, 1
      %v792 = vsel %vm741, %v789, %v791
      %v793 = vrot.slane %v663, 1
      %v794 = vsel %vm741, %v791, %v793
      %v795 = vrot.slane %v666, 1
      %v796 = vsel %vm741, %v793, %v795
      %v797 = vrot.slane %v671, 1
      %v798 = vsel %vm741, %v795, %v797
      %v799 = vrot.slane %v674, 1
      %v800 = vsel %vm741, %v797, %v799
      %v801 = vrot.slane %v679, 1
      %v802 = vsel %vm741, %v799, %v801
      %v803 = vrot.slane %v682, 1
      %v804 = vsel %vm741, %v801, %v803
      %v805 = vrot.slane %v687, 1
      %v806 = vsel %vm741, %v803, %v805
      %v807 = vrot.slane %v690, 1
      %v808 = vsel %vm741, %v805, %v807
      %v809 = vrot.slane %v695, 1
      %v810 = vsel %vm741, %v807, %v809
      %v845 = vadd.f32 %v373, %v744
      %v846 = vadd.f32 %v376, %v746
      %v847 = vadd.f32 %v381, %v748
      %v848 = vadd.f32 %v384, %v750
      %v849 = vadd.f32 %v389, %v752
      %v850 = vadd.f32 %v392, %v754
      %v851 = vadd.f32 %v397, %v756
      %v852 = vadd.f32 %v400, %v758
      %v853 = vadd.f32 %v405, %v760
      %v854 = vadd.f32 %v408, %v762
      %v855 = vadd.f32 %v413, %v764
      %v856 = vadd.f32 %v416, %v766
      %v857 = vadd.f32 %v421, %v768
      %v858 = vadd.f32 %v424, %v770
      %v859 = vadd.f32 %v429, %v772
      %v860 = vadd.f32 %v432, %v774
      %v861 = vadd.f32 %v437, %v776
      %v862 = vadd.f32 %v440, %v778
      %v863 = vadd.f32 %v445, %v780
      %v864 = vadd.f32 %v448, %v782
      %v865 = vadd.f32 %v453, %v784
      %v866 = vadd.f32 %v456, %v786
      %v867 = vadd.f32 %v461, %v788
      %v868 = vadd.f32 %v464, %v790
      %v869 = vadd.f32 %v469, %v792
      %v870 = vadd.f32 %v472, %v794
      %v871 = vadd.f32 %v477, %v796
      %v872 = vadd.f32 %v480, %v798
      %v873 = vadd.f32 %v485, %v800
      %v874 = vadd.f32 %v488, %v802
      %v875 = vadd.f32 %v493, %v804
      %v876 = vadd.f32 %v496, %v806
      %v877 = vadd.f32 %v501, %v808
      %v878 = vadd.f32 %v504, %v810
      %s879 = scalar_lea.vmem %s1, 4
      %v880 = vld [vmem:[%s879] sm:$0x3]
      %v882 = vsel %vm334, %v880, 0
      %884 = vmatprep.subr.bf16.mxu0 0
      %885 = vmatpush1.bf16.msra.mxu0 %v882
      %886 = vmatprep.subr.bf16.mxu0 0
      %887 = vmatpush1.bf16.msra.mxu0 0
      %888 = vmatprep.subr.bf16.mxu0 0
      %889 = vmatpush1.bf16.msra.mxu0 0
      %890 = vmatprep.subr.bf16.mxu0 0
      %891 = vmatpush1.bf16.msra.mxu0 0
      %892 = vmatprep.subr.bf16.mxu0 0
      %893 = vmatpush1.bf16.msra.mxu0 0
      %894 = vmatprep.subr.bf16.mxu0 0
      %895 = vmatpush1.bf16.msra.mxu0 0
      %896 = vmatprep.subr.bf16.mxu0 0
      %897 = vmatpush1.bf16.msra.mxu0 0
      %898 = vmatprep.subr.bf16.mxu0 0
      %899 = vmatpush1.bf16.msra.mxu0 0
      %900 = vmatprep.subr.bf16.mxu0 0
      %901 = vmatpush1.bf16.msra.mxu0 0
      %902 = vmatprep.subr.bf16.mxu0 0
      %903 = vmatpush1.bf16.msra.mxu0 0
      %904 = vmatprep.subr.bf16.mxu0 0
      %905 = vmatpush1.bf16.msra.mxu0 0
      %906 = vmatprep.subr.bf16.mxu0 0
      %907 = vmatpush1.bf16.msra.mxu0 0
      %908 = vmatprep.subr.bf16.mxu0 0
      %909 = vmatpush1.bf16.msra.mxu0 0
      %910 = vmatprep.subr.bf16.mxu0 0
      %911 = vmatpush1.bf16.msra.mxu0 0
      %912 = vmatprep.subr.bf16.mxu0 0
      %913 = vmatpush1.bf16.msra.mxu0 0
      %914 = vmatprep.subr.bf16.mxu0 0
      %915 = vmatpush1.bf16.msra.mxu0 0
      %916 = vmatprep.mubr.bf16.mxu0 0
      %917 = vmatmul.mubr.bf16.gmra.mrb[0].mxu0 %v278
      %v918 = vpop.f32.mrb[0].mxu0
      %v919 = vpop.f32.mrb[0].mxu0
      %v920 = vpop.f32.mrb[0].mxu0
      %v921 = vpop.f32.mrb[0].mxu0
      %922 = vmatprep.mubr.bf16.mxu0 0
      %923 = vmatmul.mubr.bf16.gmra.mrb[0].mxu0 %v281
      %v924 = vpop.f32.mrb[0].mxu0
      %v925 = vadd.f32 0.0, %v924
      %v926 = vpop.f32.mrb[0].mxu0
      %v927 = vpop.f32.mrb[0].mxu0
      %v928 = vadd.f32 0.0, %v927
      %v929 = vpop.f32.mrb[0].mxu0
      %930 = vmatprep.mubr.bf16.mxu0 0
      %931 = vmatmul.mubr.bf16.gmra.mrb[0].mxu0 %v284
      %v932 = vpop.f32.mrb[0].mxu0
      %v933 = vadd.f32 0.0, %v932
      %v934 = vpop.f32.mrb[0].mxu0
      %v935 = vpop.f32.mrb[0].mxu0
      %v936 = vadd.f32 0.0, %v935
      %v937 = vpop.f32.mrb[0].mxu0
      %938 = vmatprep.mubr.bf16.mxu0 0
      %939 = vmatmul.mubr.bf16.gmra.mrb[0].mxu0 %v287
      %v940 = vpop.f32.mrb[0].mxu0
      %v941 = vadd.f32 0.0, %v940
      %v942 = vpop.f32.mrb[0].mxu0
      %v943 = vpop.f32.mrb[0].mxu0
      %v944 = vadd.f32 0.0, %v943
      %v945 = vpop.f32.mrb[0].mxu0
      %946 = vmatprep.mubr.bf16.mxu0 0
      %947 = vmatmul.mubr.bf16.gmra.mrb[0].mxu0 %v290
      %v948 = vpop.f32.mrb[0].mxu0
      %v949 = vadd.f32 0.0, %v948
      %v950 = vpop.f32.mrb[0].mxu0
      %v951 = vpop.f32.mrb[0].mxu0
      %v952 = vadd.f32 0.0, %v951
      %v953 = vpop.f32.mrb[0].mxu0
      %954 = vmatprep.mubr.bf16.mxu0 0
      %955 = vmatmul.mubr.bf16.gmra.mrb[0].mxu0 %v293
      %v956 = vpop.f32.mrb[0].mxu0
      %v957 = vadd.f32 0.0, %v956
      %v958 = vpop.f32.mrb[0].mxu0
      %v959 = vpop.f32.mrb[0].mxu0
      %v960 = vadd.f32 0.0, %v959
      %v961 = vpop.f32.mrb[0].mxu0
      %962 = vmatprep.mubr.bf16.mxu0 0
      %963 = vmatmul.mubr.bf16.gmra.mrb[0].mxu0 %v296
      %v964 = vpop.f32.mrb[0].mxu0
      %v965 = vadd.f32 0.0, %v964
      %v966 = vpop.f32.mrb[0].mxu0
      %v967 = vpop.f32.mrb[0].mxu0
      %v968 = vadd.f32 0.0, %v967
      %v969 = vpop.f32.mrb[0].mxu0
      %970 = vmatprep.mubr.bf16.mxu0 0
      %971 = vmatmul.mubr.bf16.gmra.mrb[0].mxu0 %v299
      %v972 = vpop.f32.mrb[0].mxu0
      %v973 = vadd.f32 0.0, %v972
      %v974 = vpop.f32.mrb[0].mxu0
      %v975 = vpop.f32.mrb[0].mxu0
      %v976 = vadd.f32 0.0, %v975
      %v977 = vpop.f32.mrb[0].mxu0
      %978 = vmatprep.mubr.bf16.mxu0 0
      %979 = vmatmul.mubr.bf16.gmra.mrb[0].mxu0 %v302
      %v980 = vpop.f32.mrb[0].mxu0
      %v981 = vadd.f32 0.0, %v980
      %v982 = vpop.f32.mrb[0].mxu0
      %v983 = vpop.f32.mrb[0].mxu0
      %v984 = vadd.f32 0.0, %v983
      %v985 = vpop.f32.mrb[0].mxu0
      %986 = vmatprep.mubr.bf16.mxu0 0
      %987 = vmatmul.mubr.bf16.gmra.mrb[0].mxu0 %v305
      %v988 = vpop.f32.mrb[0].mxu0
      %v989 = vadd.f32 0.0, %v988
      %v990 = vpop.f32.mrb[0].mxu0
      %v991 = vpop.f32.mrb[0].mxu0
      %v992 = vadd.f32 0.0, %v991
      %v993 = vpop.f32.mrb[0].mxu0
      %994 = vmatprep.mubr.bf16.mxu0 0
      %995 = vmatmul.mubr.bf16.gmra.mrb[0].mxu0 %v308
      %v996 = vpop.f32.mrb[0].mxu0
      %v997 = vadd.f32 0.0, %v996
      %v998 = vpop.f32.mrb[0].mxu0
      %v999 = vpop.f32.mrb[0].mxu0
      %v1000 = vadd.f32 0.0, %v999
      %v1001 = vpop.f32.mrb[0].mxu0
      %1002 = vmatprep.mubr.bf16.mxu0 0
      %1003 = vmatmul.mubr.bf16.gmra.mrb[0].mxu0 %v311
      %v1004 = vpop.f32.mrb[0].mxu0
      %v1005 = vadd.f32 0.0, %v1004
      %v1006 = vpop.f32.mrb[0].mxu0
      %v1007 = vpop.f32.mrb[0].mxu0
      %v1008 = vadd.f32 0.0, %v1007
      %v1009 = vpop.f32.mrb[0].mxu0
      %1010 = vmatprep.mubr.bf16.mxu0 0
      %1011 = vmatmul.mubr.bf16.gmra.mrb[0].mxu0 %v314
      %v1012 = vpop.f32.mrb[0].mxu0
      %v1013 = vadd.f32 0.0, %v1012
      %v1014 = vpop.f32.mrb[0].mxu0
      %v1015 = vpop.f32.mrb[0].mxu0
      %v1016 = vadd.f32 0.0, %v1015
      %v1017 = vpop.f32.mrb[0].mxu0
      %1018 = vmatprep.mubr.bf16.mxu0 0
      %1019 = vmatmul.mubr.bf16.gmra.mrb[0].mxu0 %v317
      %v1020 = vpop.f32.mrb[0].mxu0
      %v1021 = vadd.f32 0.0, %v1020
      %v1022 = vpop.f32.mrb[0].mxu0
      %v1023 = vpop.f32.mrb[0].mxu0
      %v1024 = vadd.f32 0.0, %v1023
      %v1025 = vpop.f32.mrb[0].mxu0
      %1026 = vmatprep.mubr.bf16.mxu0 0
      %1027 = vmatmul.mubr.bf16.gmra.mrb[0].mxu0 %v320
      %v1028 = vpop.f32.mrb[0].mxu0
      %v1029 = vadd.f32 0.0, %v1028
      %v1030 = vpop.f32.mrb[0].mxu0
      %v1031 = vpop.f32.mrb[0].mxu0
      %v1032 = vadd.f32 0.0, %v1031
      %v1033 = vpop.f32.mrb[0].mxu0
      %1034 = vmatprep.mubr.bf16.mxu0 0
      %1035 = vmatmul.mubr.bf16.gmra.mrb[0].mxu0 %v323
      %v1036 = vpop.f32.mrb[0].mxu0
      %v1037 = vadd.f32 0.0, %v1036
      %v1038 = vpop.f32.mrb[0].mxu0
      %v1039 = vpop.f32.mrb[0].mxu0
      %v1040 = vadd.f32 0.0, %v1039
      %v1041 = vpop.f32.mrb[0].mxu0
      %1042 = vmatprep.mubr.bf16.mxu0 0
      %1043 = vmatmul.mubr.bf16.gmra.mrb[0].mxu0 %v326
      %v1044 = vpop.f32.mrb[0].mxu0
      %v1045 = vadd.f32 0.0, %v1044
      %v1046 = vpop.f32.mrb[0].mxu0
      %v1047 = vpop.f32.mrb[0].mxu0
      %v1048 = vadd.f32 0.0, %v1047
      %v1049 = vpop.f32.mrb[0].mxu0
      %1050 = vmatprep.mubr.bf16.mxu0 0
      %1051 = vmatmul.mubr.bf16.gmra.mrb[0].mxu0 %v329
      %v1052 = vpop.f32.mrb[0].mxu0
      %v1053 = vadd.f32 0.0, %v1052
      %v1054 = vpop.f32.mrb[0].mxu0
      %v1055 = vpop.f32.mrb[0].mxu0
      %v1056 = vadd.f32 0.0, %v1055
      %v1057 = vpop.f32.mrb[0].mxu0
      %1058 = vmatprep.mubr.bf16.mxu0 0
      %1059 = vmatmul.mubr.bf16.gmra.mrb[0].mxu0 %v332
      %v1060 = vpop.f32.mrb[0].mxu0
      %v1061 = vadd.f32 0.0, %v1060
      %v1062 = vpop.f32.mrb[0].mxu0
      %v1063 = vpop.f32.mrb[0].mxu0
      %v1064 = vpop.f32.mrb[0].mxu0
      %1065 = vdwg.mxu0
      %v1101 = vrot.slane %v925, 1
      %v1102 = vrot.slane %v928, 1
      %v1103 = vsel %vm741, %v1101, %v1102
      %v1104 = vrot.slane %v933, 1
      %v1105 = vsel %vm741, %v1102, %v1104
      %v1106 = vrot.slane %v936, 1
      %v1107 = vsel %vm741, %v1104, %v1106
      %v1108 = vrot.slane %v941, 1
      %v1109 = vsel %vm741, %v1106, %v1108
      %v1110 = vrot.slane %v944, 1
      %v1111 = vsel %vm741, %v1108, %v1110
      %v1112 = vrot.slane %v949, 1
      %v1113 = vsel %vm741, %v1110, %v1112
      %v1114 = vrot.slane %v952, 1
      %v1115 = vsel %vm741, %v1112, %v1114
      %v1116 = vrot.slane %v957, 1
      %v1117 = vsel %vm741, %v1114, %v1116
      %v1118 = vrot.slane %v960, 1
      %v1119 = vsel %vm741, %v1116, %v1118
      %v1120 = vrot.slane %v965, 1
      %v1121 = vsel %vm741, %v1118, %v1120
      %v1122 = vrot.slane %v968, 1
      %v1123 = vsel %vm741, %v1120, %v1122
      %v1124 = vrot.slane %v973, 1
      %v1125 = vsel %vm741, %v1122, %v1124
      %v1126 = vrot.slane %v976, 1
      %v1127 = vsel %vm741, %v1124, %v1126
      %v1128 = vrot.slane %v981, 1
      %v1129 = vsel %vm741, %v1126, %v1128
      %v1130 = vrot.slane %v984, 1
      %v1131 = vsel %vm741, %v1128, %v1130
      %v1132 = vrot.slane %v989, 1
      %v1133 = vsel %vm741, %v1130, %v1132
      %v1134 = vrot.slane %v992, 1
      %v1135 = vsel %vm741, %v1132, %v1134
      %v1136 = vrot.slane %v997, 1
      %v1137 = vsel %vm741, %v1134, %v1136
      %v1138 = vrot.slane %v1000, 1
      %v1139 = vsel %vm741, %v1136, %v1138
      %v1140 = vrot.slane %v1005, 1
      %v1141 = vsel %vm741, %v1138, %v1140
      %v1142 = vrot.slane %v1008, 1
      %v1143 = vsel %vm741, %v1140, %v1142
      %v1144 = vrot.slane %v1013, 1
      %v1145 = vsel %vm741, %v1142, %v1144
      %v1146 = vrot.slane %v1016, 1
      %v1147 = vsel %vm741, %v1144, %v1146
      %v1148 = vrot.slane %v1021, 1
      %v1149 = vsel %vm741, %v1146, %v1148
      %v1150 = vrot.slane %v1024, 1
      %v1151 = vsel %vm741, %v1148, %v1150
      %v1152 = vrot.slane %v1029, 1
      %v1153 = vsel %vm741, %v1150, %v1152
      %v1154 = vrot.slane %v1032, 1
      %v1155 = vsel %vm741, %v1152, %v1154
      %v1156 = vrot.slane %v1037, 1
      %v1157 = vsel %vm741, %v1154, %v1156
      %v1158 = vrot.slane %v1040, 1
      %v1159 = vsel %vm741, %v1156, %v1158
      %v1160 = vrot.slane %v1045, 1
      %v1161 = vsel %vm741, %v1158, %v1160
      %v1162 = vrot.slane %v1048, 1
      %v1163 = vsel %vm741, %v1160, %v1162
      %v1164 = vrot.slane %v1053, 1
      %v1165 = vsel %vm741, %v1162, %v1164
      %v1166 = vrot.slane %v1056, 1
      %v1167 = vsel %vm741, %v1164, %v1166
      %v1168 = vrot.slane %v1061, 1
      %v1169 = vsel %vm741, %v1166, %v1168
      %v1204 = vadd.f32 %v845, %v1103
      %v1205 = vadd.f32 %v846, %v1105
      %v1206 = vadd.f32 %v847, %v1107
      %v1207 = vadd.f32 %v848, %v1109
      %v1208 = vadd.f32 %v849, %v1111
      %v1209 = vadd.f32 %v850, %v1113
      %v1210 = vadd.f32 %v851, %v1115
      %v1211 = vadd.f32 %v852, %v1117
      %v1212 = vadd.f32 %v853, %v1119
      %v1213 = vadd.f32 %v854, %v1121
      %v1214 = vadd.f32 %v855, %v1123
      %v1215 = vadd.f32 %v856, %v1125
      %v1216 = vadd.f32 %v857, %v1127
      %v1217 = vadd.f32 %v858, %v1129
      %v1218 = vadd.f32 %v859, %v1131
      %v1219 = vadd.f32 %v860, %v1133
      %v1220 = vadd.f32 %v861, %v1135
      %v1221 = vadd.f32 %v862, %v1137
      %v1222 = vadd.f32 %v863, %v1139
      %v1223 = vadd.f32 %v864, %v1141
      %v1224 = vadd.f32 %v865, %v1143
      %v1225 = vadd.f32 %v866, %v1145
      %v1226 = vadd.f32 %v867, %v1147
      %v1227 = vadd.f32 %v868, %v1149
      %v1228 = vadd.f32 %v869, %v1151
      %v1229 = vadd.f32 %v870, %v1153
      %v1230 = vadd.f32 %v871, %v1155
      %v1231 = vadd.f32 %v872, %v1157
      %v1232 = vadd.f32 %v873, %v1159
      %v1233 = vadd.f32 %v874, %v1161
      %v1234 = vadd.f32 %v875, %v1163
      %v1235 = vadd.f32 %v876, %v1165
      %v1236 = vadd.f32 %v877, %v1167
      %v1237 = vadd.f32 %v878, %v1169
      %s1238 = scalar_lea.vmem %s1, 6
      %v1239 = vld [vmem:[%s1238] sm:$0x3]
      %v1241 = vsel %vm334, %v1239, 0
      %1243 = vmatprep.subr.bf16.mxu0 0
      %1244 = vmatpush1.bf16.msra.mxu0 %v1241
      %1245 = vmatprep.subr.bf16.mxu0 0
      %1246 = vmatpush1.bf16.msra.mxu0 0
      %1247 = vmatprep.subr.bf16.mxu0 0
      %1248 = vmatpush1.bf16.msra.mxu0 0
      %1249 = vmatprep.subr.bf16.mxu0 0
      %1250 = vmatpush1.bf16.msra.mxu0 0
      %1251 = vmatprep.subr.bf16.mxu0 0
      %1252 = vmatpush1.bf16.msra.mxu0 0
      %1253 = vmatprep.subr.bf16.mxu0 0
      %1254 = vmatpush1.bf16.msra.mxu0 0
      %1255 = vmatprep.subr.bf16.mxu0 0
      %1256 = vmatpush1.bf16.msra.mxu0 0
      %1257 = vmatprep.subr.bf16.mxu0 0
      %1258 = vmatpush1.bf16.msra.mxu0 0
      %1259 = vmatprep.subr.bf16.mxu0 0
      %1260 = vmatpush1.bf16.msra.mxu0 0
      %1261 = vmatprep.subr.bf16.mxu0 0
      %1262 = vmatpush1.bf16.msra.mxu0 0
      %1263 = vmatprep.subr.bf16.mxu0 0
      %1264 = vmatpush1.bf16.msra.mxu0 0
      %1265 = vmatprep.subr.bf16.mxu0 0
      %1266 = vmatpush1.bf16.msra.mxu0 0
      %1267 = vmatprep.subr.bf16.mxu0 0
      %1268 = vmatpush1.bf16.msra.mxu0 0
      %1269 = vmatprep.subr.bf16.mxu0 0
      %1270 = vmatpush1.bf16.msra.mxu0 0
      %1271 = vmatprep.subr.bf16.mxu0 0
      %1272 = vmatpush1.bf16.msra.mxu0 0
      %1273 = vmatprep.subr.bf16.mxu0 0
      %1274 = vmatpush1.bf16.msra.mxu0 0
      %1275 = vmatprep.mubr.bf16.mxu0 0
      %1276 = vmatmul.mubr.bf16.gmra.mrb[0].mxu0 %v278
      %v1277 = vpop.f32.mrb[0].mxu0
      %v1278 = vpop.f32.mrb[0].mxu0
      %v1279 = vpop.f32.mrb[0].mxu0
      %v1280 = vpop.f32.mrb[0].mxu0
      %1281 = vmatprep.mubr.bf16.mxu0 0
      %1282 = vmatmul.mubr.bf16.gmra.mrb[0].mxu0 %v281
      %v1283 = vpop.f32.mrb[0].mxu0
      %v1284 = vadd.f32 0.0, %v1283
      %v1285 = vpop.f32.mrb[0].mxu0
      %v1286 = vpop.f32.mrb[0].mxu0
      %v1287 = vadd.f32 0.0, %v1286
      %v1288 = vpop.f32.mrb[0].mxu0
      %1289 = vmatprep.mubr.bf16.mxu0 0
      %1290 = vmatmul.mubr.bf16.gmra.mrb[0].mxu0 %v284
      %v1291 = vpop.f32.mrb[0].mxu0
      %v1292 = vadd.f32 0.0, %v1291
      %v1293 = vpop.f32.mrb[0].mxu0
      %v1294 = vpop.f32.mrb[0].mxu0
      %v1295 = vadd.f32 0.0, %v1294
      %v1296 = vpop.f32.mrb[0].mxu0
      %1297 = vmatprep.mubr.bf16.mxu0 0
      %1298 = vmatmul.mubr.bf16.gmra.mrb[0].mxu0 %v287
      %v1299 = vpop.f32.mrb[0].mxu0
      %v1300 = vadd.f32 0.0, %v1299
      %v1301 = vpop.f32.mrb[0].mxu0
      %v1302 = vpop.f32.mrb[0].mxu0
      %v1303 = vadd.f32 0.0, %v1302
      %v1304 = vpop.f32.mrb[0].mxu0
      %1305 = vmatprep.mubr.bf16.mxu0 0
      %1306 = vmatmul.mubr.bf16.gmra.mrb[0].mxu0 %v290
      %v1307 = vpop.f32.mrb[0].mxu0
      %v1308 = vadd.f32 0.0, %v1307
      %v1309 = vpop.f32.mrb[0].mxu0
      %v1310 = vpop.f32.mrb[0].mxu0
      %v1311 = vadd.f32 0.0, %v1310
      %v1312 = vpop.f32.mrb[0].mxu0
      %1313 = vmatprep.mubr.bf16.mxu0 0
      %1314 = vmatmul.mubr.bf16.gmra.mrb[0].mxu0 %v293
      %v1315 = vpop.f32.mrb[0].mxu0
      %v1316 = vadd.f32 0.0, %v1315
      %v1317 = vpop.f32.mrb[0].mxu0
      %v1318 = vpop.f32.mrb[0].mxu0
      %v1319 = vadd.f32 0.0, %v1318
      %v1320 = vpop.f32.mrb[0].mxu0
      %1321 = vmatprep.mubr.bf16.mxu0 0
      %1322 = vmatmul.mubr.bf16.gmra.mrb[0].mxu0 %v296
      %v1323 = vpop.f32.mrb[0].mxu0
      %v1324 = vadd.f32 0.0, %v1323
      %v1325 = vpop.f32.mrb[0].mxu0
      %v1326 = vpop.f32.mrb[0].mxu0
      %v1327 = vadd.f32 0.0, %v1326
      %v1328 = vpop.f32.mrb[0].mxu0
      %1329 = vmatprep.mubr.bf16.mxu0 0
      %1330 = vmatmul.mubr.bf16.gmra.mrb[0].mxu0 %v299
      %v1331 = vpop.f32.mrb[0].mxu0
      %v1332 = vadd.f32 0.0, %v1331
      %v1333 = vpop.f32.mrb[0].mxu0
      %v1334 = vpop.f32.mrb[0].mxu0
      %v1335 = vadd.f32 0.0, %v1334
      %v1336 = vpop.f32.mrb[0].mxu0
      %1337 = vmatprep.mubr.bf16.mxu0 0
      %1338 = vmatmul.mubr.bf16.gmra.mrb[0].mxu0 %v302
      %v1339 = vpop.f32.mrb[0].mxu0
      %v1340 = vadd.f32 0.0, %v1339
      %v1341 = vpop.f32.mrb[0].mxu0
      %v1342 = vpop.f32.mrb[0].mxu0
      %v1343 = vadd.f32 0.0, %v1342
      %v1344 = vpop.f32.mrb[0].mxu0
      %1345 = vmatprep.mubr.bf16.mxu0 0
      %1346 = vmatmul.mubr.bf16.gmra.mrb[0].mxu0 %v305
      %v1347 = vpop.f32.mrb[0].mxu0
      %v1348 = vadd.f32 0.0, %v1347
      %v1349 = vpop.f32.mrb[0].mxu0
      %v1350 = vpop.f32.mrb[0].mxu0
      %v1351 = vadd.f32 0.0, %v1350
      %v1352 = vpop.f32.mrb[0].mxu0
      %1353 = vmatprep.mubr.bf16.mxu0 0
      %1354 = vmatmul.mubr.bf16.gmra.mrb[0].mxu0 %v308
      %v1355 = vpop.f32.mrb[0].mxu0
      %v1356 = vadd.f32 0.0, %v1355
      %v1357 = vpop.f32.mrb[0].mxu0
      %v1358 = vpop.f32.mrb[0].mxu0
      %v1359 = vadd.f32 0.0, %v1358
      %v1360 = vpop.f32.mrb[0].mxu0
      %1361 = vmatprep.mubr.bf16.mxu0 0
      %1362 = vmatmul.mubr.bf16.gmra.mrb[0].mxu0 %v311
      %v1363 = vpop.f32.mrb[0].mxu0
      %v1364 = vadd.f32 0.0, %v1363
      %v1365 = vpop.f32.mrb[0].mxu0
      %v1366 = vpop.f32.mrb[0].mxu0
      %v1367 = vadd.f32 0.0, %v1366
      %v1368 = vpop.f32.mrb[0].mxu0
      %1369 = vmatprep.mubr.bf16.mxu0 0
      %1370 = vmatmul.mubr.bf16.gmra.mrb[0].mxu0 %v314
      %v1371 = vpop.f32.mrb[0].mxu0
      %v1372 = vadd.f32 0.0, %v1371
      %v1373 = vpop.f32.mrb[0].mxu0
      %v1374 = vpop.f32.mrb[0].mxu0
      %v1375 = vadd.f32 0.0, %v1374
      %v1376 = vpop.f32.mrb[0].mxu0
      %1377 = vmatprep.mubr.bf16.mxu0 0
      %1378 = vmatmul.mubr.bf16.gmra.mrb[0].mxu0 %v317
      %v1379 = vpop.f32.mrb[0].mxu0
      %v1380 = vadd.f32 0.0, %v1379
      %v1381 = vpop.f32.mrb[0].mxu0
      %v1382 = vpop.f32.mrb[0].mxu0
      %v1383 = vadd.f32 0.0, %v1382
      %v1384 = vpop.f32.mrb[0].mxu0
      %1385 = vmatprep.mubr.bf16.mxu0 0
      %1386 = vmatmul.mubr.bf16.gmra.mrb[0].mxu0 %v320
      %v1387 = vpop.f32.mrb[0].mxu0
      %v1388 = vadd.f32 0.0, %v1387
      %v1389 = vpop.f32.mrb[0].mxu0
      %v1390 = vpop.f32.mrb[0].mxu0
      %v1391 = vadd.f32 0.0, %v1390
      %v1392 = vpop.f32.mrb[0].mxu0
      %1393 = vmatprep.mubr.bf16.mxu0 0
      %1394 = vmatmul.mubr.bf16.gmra.mrb[0].mxu0 %v323
      %v1395 = vpop.f32.mrb[0].mxu0
      %v1396 = vadd.f32 0.0, %v1395
      %v1397 = vpop.f32.mrb[0].mxu0
      %v1398 = vpop.f32.mrb[0].mxu0
      %v1399 = vadd.f32 0.0, %v1398
      %v1400 = vpop.f32.mrb[0].mxu0
      %1401 = vmatprep.mubr.bf16.mxu0 0
      %1402 = vmatmul.mubr.bf16.gmra.mrb[0].mxu0 %v326
      %v1403 = vpop.f32.mrb[0].mxu0
      %v1404 = vadd.f32 0.0, %v1403
      %v1405 = vpop.f32.mrb[0].mxu0
      %v1406 = vpop.f32.mrb[0].mxu0
      %v1407 = vadd.f32 0.0, %v1406
      %v1408 = vpop.f32.mrb[0].mxu0
      %1409 = vmatprep.mubr.bf16.mxu0 0
      %1410 = vmatmul.mubr.bf16.gmra.mrb[0].mxu0 %v329
      %v1411 = vpop.f32.mrb[0].mxu0
      %v1412 = vadd.f32 0.0, %v1411
      %v1413 = vpop.f32.mrb[0].mxu0
      %v1414 = vpop.f32.mrb[0].mxu0
      %v1415 = vadd.f32 0.0, %v1414
      %v1416 = vpop.f32.mrb[0].mxu0
      %1417 = vmatprep.mubr.bf16.mxu0 0
      %1418 = vmatmul.mubr.bf16.gmra.mrb[0].mxu0 %v332
      %v1419 = vpop.f32.mrb[0].mxu0
      %v1420 = vadd.f32 0.0, %v1419
      %v1421 = vpop.f32.mrb[0].mxu0
      %v1422 = vpop.f32.mrb[0].mxu0
      %v1423 = vpop.f32.mrb[0].mxu0
      %1424 = vdwg.mxu0
      %vm1460 = vcmask 1045504
      %v1461 = vrot.slane %v1284, 2
      %v1462 = vrot.slane %v1287, 2
      %v1463 = vsel %vm1460, %v1461, %v1462
      %v1464 = vrot.slane %v1292, 2
      %v1465 = vsel %vm1460, %v1462, %v1464
      %v1466 = vrot.slane %v1295, 2
      %v1467 = vsel %vm1460, %v1464, %v1466
      %v1468 = vrot.slane %v1300, 2
      %v1469 = vsel %vm1460, %v1466, %v1468
      %v1470 = vrot.slane %v1303, 2
      %v1471 = vsel %vm1460, %v1468, %v1470
      %v1472 = vrot.slane %v1308, 2
      %v1473 = vsel %vm1460, %v1470, %v1472
      %v1474 = vrot.slane %v1311, 2
      %v1475 = vsel %vm1460, %v1472, %v1474
      %v1476 = vrot.slane %v1316, 2
      %v1477 = vsel %vm1460, %v1474, %v1476
      %v1478 = vrot.slane %v1319, 2
      %v1479 = vsel %vm1460, %v1476, %v1478
      %v1480 = vrot.slane %v1324, 2
      %v1481 = vsel %vm1460, %v1478, %v1480
      %v1482 = vrot.slane %v1327, 2
      %v1483 = vsel %vm1460, %v1480, %v1482
      %v1484 = vrot.slane %v1332, 2
      %v1485 = vsel %vm1460, %v1482, %v1484
      %v1486 = vrot.slane %v1335, 2
      %v1487 = vsel %vm1460, %v1484, %v1486
      %v1488 = vrot.slane %v1340, 2
      %v1489 = vsel %vm1460, %v1486, %v1488
      %v1490 = vrot.slane %v1343, 2
      %v1491 = vsel %vm1460, %v1488, %v1490
      %v1492 = vrot.slane %v1348, 2
      %v1493 = vsel %vm1460, %v1490, %v1492
      %v1494 = vrot.slane %v1351, 2
      %v1495 = vsel %vm1460, %v1492, %v1494
      %v1496 = vrot.slane %v1356, 2
      %v1497 = vsel %vm1460, %v1494, %v1496
      %v1498 = vrot.slane %v1359, 2
      %v1499 = vsel %vm1460, %v1496, %v1498
      %v1500 = vrot.slane %v1364, 2
      %v1501 = vsel %vm1460, %v1498, %v1500
      %v1502 = vrot.slane %v1367, 2
      %v1503 = vsel %vm1460, %v1500, %v1502
      %v1504 = vrot.slane %v1372, 2
      %v1505 = vsel %vm1460, %v1502, %v1504
      %v1506 = vrot.slane %v1375, 2
      %v1507 = vsel %vm1460, %v1504, %v1506
      %v1508 = vrot.slane %v1380, 2
      %v1509 = vsel %vm1460, %v1506, %v1508
      %v1510 = vrot.slane %v1383, 2
      %v1511 = vsel %vm1460, %v1508, %v1510
      %v1512 = vrot.slane %v1388, 2
      %v1513 = vsel %vm1460, %v1510, %v1512
      %v1514 = vrot.slane %v1391, 2
      %v1515 = vsel %vm1460, %v1512, %v1514
      %v1516 = vrot.slane %v1396, 2
      %v1517 = vsel %vm1460, %v1514, %v1516
      %v1518 = vrot.slane %v1399, 2
      %v1519 = vsel %vm1460, %v1516, %v1518
      %v1520 = vrot.slane %v1404, 2
      %v1521 = vsel %vm1460, %v1518, %v1520
      %v1522 = vrot.slane %v1407, 2
      %v1523 = vsel %vm1460, %v1520, %v1522
      %v1524 = vrot.slane %v1412, 2
      %v1525 = vsel %vm1460, %v1522, %v1524
      %v1526 = vrot.slane %v1415, 2
      %v1527 = vsel %vm1460, %v1524, %v1526
      %v1528 = vrot.slane %v1420, 2
      %v1529 = vsel %vm1460, %v1526, %v1528
      %v1564 = vadd.f32 %v1204, %v1463
      %v1565 = vadd.f32 %v1205, %v1465
      %v1566 = vadd.f32 %v1206, %v1467
      %v1567 = vadd.f32 %v1207, %v1469
      %v1568 = vadd.f32 %v1208, %v1471
      %v1569 = vadd.f32 %v1209, %v1473
      %v1570 = vadd.f32 %v1210, %v1475
      %v1571 = vadd.f32 %v1211, %v1477
      %v1572 = vadd.f32 %v1212, %v1479
      %v1573 = vadd.f32 %v1213, %v1481
      %v1574 = vadd.f32 %v1214, %v1483
      %v1575 = vadd.f32 %v1215, %v1485
      %v1576 = vadd.f32 %v1216, %v1487
      %v1577 = vadd.f32 %v1217, %v1489
      %v1578 = vadd.f32 %v1218, %v1491
      %v1579 = vadd.f32 %v1219, %v1493
      %v1580 = vadd.f32 %v1220, %v1495
      %v1581 = vadd.f32 %v1221, %v1497
      %v1582 = vadd.f32 %v1222, %v1499
      %v1583 = vadd.f32 %v1223, %v1501
      %v1584 = vadd.f32 %v1224, %v1503
      %v1585 = vadd.f32 %v1225, %v1505
      %v1586 = vadd.f32 %v1226, %v1507
      %v1587 = vadd.f32 %v1227, %v1509
      %v1588 = vadd.f32 %v1228, %v1511
      %v1589 = vadd.f32 %v1229, %v1513
      %v1590 = vadd.f32 %v1230, %v1515
      %v1591 = vadd.f32 %v1231, %v1517
      %v1592 = vadd.f32 %v1232, %v1519
      %v1593 = vadd.f32 %v1233, %v1521
      %v1594 = vadd.f32 %v1234, %v1523
      %v1595 = vadd.f32 %v1235, %v1525
      %v1596 = vadd.f32 %v1236, %v1527
      %v1597 = vadd.f32 %v1237, %v1529
      %vm1598 = vcmp.ge.f32.partialorder %v1564, 0.0
      %vm1599 = vcmp.ge.f32.partialorder %v1565, 0.0
      %vm1600 = vcmp.ge.f32.partialorder %v1566, 0.0
      %vm1601 = vcmp.ge.f32.partialorder %v1567, 0.0
      %vm1602 = vcmp.ge.f32.partialorder %v1568, 0.0
      %vm1603 = vcmp.ge.f32.partialorder %v1569, 0.0
      %vm1604 = vcmp.ge.f32.partialorder %v1570, 0.0
      %vm1605 = vcmp.ge.f32.partialorder %v1571, 0.0
      %vm1606 = vcmp.ge.f32.partialorder %v1572, 0.0
      %vm1607 = vcmp.ge.f32.partialorder %v1573, 0.0
      %vm1608 = vcmp.ge.f32.partialorder %v1574, 0.0
      %vm1609 = vcmp.ge.f32.partialorder %v1575, 0.0
      %vm1610 = vcmp.ge.f32.partialorder %v1576, 0.0
      %vm1611 = vcmp.ge.f32.partialorder %v1577, 0.0
      %vm1612 = vcmp.ge.f32.partialorder %v1578, 0.0
      %vm1613 = vcmp.ge.f32.partialorder %v1579, 0.0
      %vm1614 = vcmp.ge.f32.partialorder %v1580, 0.0
      %vm1615 = vcmp.ge.f32.partialorder %v1581, 0.0
      %vm1616 = vcmp.ge.f32.partialorder %v1582, 0.0
      %vm1617 = vcmp.ge.f32.partialorder %v1583, 0.0
      %vm1618 = vcmp.ge.f32.partialorder %v1584, 0.0
      %vm1619 = vcmp.ge.f32.partialorder %v1585, 0.0
      %vm1620 = vcmp.ge.f32.partialorder %v1586, 0.0
      %vm1621 = vcmp.ge.f32.partialorder %v1587, 0.0
      %vm1622 = vcmp.ge.f32.partialorder %v1588, 0.0
      %vm1623 = vcmp.ge.f32.partialorder %v1589, 0.0
      %vm1624 = vcmp.ge.f32.partialorder %v1590, 0.0
      %vm1625 = vcmp.ge.f32.partialorder %v1591, 0.0
      %vm1626 = vcmp.ge.f32.partialorder %v1592, 0.0
      %vm1627 = vcmp.ge.f32.partialorder %v1593, 0.0
      %vm1628 = vcmp.ge.f32.partialorder %v1594, 0.0
      %vm1629 = vcmp.ge.f32.partialorder %v1595, 0.0
      %vm1630 = vcmp.ge.f32.partialorder %v1596, 0.0
      %vm1631 = vcmp.ge.f32.partialorder %v1597, 0.0
      %v1632 = vmul.f32 %v1564, 0.01
      %v1633 = vmul.f32 %v1565, 0.01
      %v1634 = vmul.f32 %v1566, 0.01
      %v1635 = vmul.f32 %v1567, 0.01
      %v1636 = vmul.f32 %v1568, 0.01
      %v1637 = vmul.f32 %v1569, 0.01
      %v1638 = vmul.f32 %v1570, 0.01
      %v1639 = vmul.f32 %v1571, 0.01
      %v1640 = vmul.f32 %v1572, 0.01
      %v1641 = vmul.f32 %v1573, 0.01
      %v1642 = vmul.f32 %v1574, 0.01
      %v1643 = vmul.f32 %v1575, 0.01
      %v1644 = vmul.f32 %v1576, 0.01
      %v1645 = vmul.f32 %v1577, 0.01
      %v1646 = vmul.f32 %v1578, 0.01
      %v1647 = vmul.f32 %v1579, 0.01
      %v1648 = vmul.f32 %v1580, 0.01
      %v1649 = vmul.f32 %v1581, 0.01
      %v1650 = vmul.f32 %v1582, 0.01
      %v1651 = vmul.f32 %v1583, 0.01
      %v1652 = vmul.f32 %v1584, 0.01
      %v1653 = vmul.f32 %v1585, 0.01
      %v1654 = vmul.f32 %v1586, 0.01
      %v1655 = vmul.f32 %v1587, 0.01
      %v1656 = vmul.f32 %v1588, 0.01
      %v1657 = vmul.f32 %v1589, 0.01
      %v1658 = vmul.f32 %v1590, 0.01
      %v1659 = vmul.f32 %v1591, 0.01
      %v1660 = vmul.f32 %v1592, 0.01
      %v1661 = vmul.f32 %v1593, 0.01
      %v1662 = vmul.f32 %v1594, 0.01
      %v1663 = vmul.f32 %v1595, 0.01
      %v1664 = vmul.f32 %v1596, 0.01
      %v1665 = vmul.f32 %v1597, 0.01
      %v1666 = vsel %vm1598, %v1564, %v1632
      %v1667 = vsel %vm1599, %v1565, %v1633
      %v1668 = vsel %vm1600, %v1566, %v1634
      %v1669 = vsel %vm1601, %v1567, %v1635
      %v1670 = vsel %vm1602, %v1568, %v1636
      %v1671 = vsel %vm1603, %v1569, %v1637
      %v1672 = vsel %vm1604, %v1570, %v1638
      %v1673 = vsel %vm1605, %v1571, %v1639
      %v1674 = vsel %vm1606, %v1572, %v1640
      %v1675 = vsel %vm1607, %v1573, %v1641
      %v1676 = vsel %vm1608, %v1574, %v1642
      %v1677 = vsel %vm1609, %v1575, %v1643
      %v1678 = vsel %vm1610, %v1576, %v1644
      %v1679 = vsel %vm1611, %v1577, %v1645
      %v1680 = vsel %vm1612, %v1578, %v1646
      %v1681 = vsel %vm1613, %v1579, %v1647
      %v1682 = vsel %vm1614, %v1580, %v1648
      %v1683 = vsel %vm1615, %v1581, %v1649
      %v1684 = vsel %vm1616, %v1582, %v1650
      %v1685 = vsel %vm1617, %v1583, %v1651
      %v1686 = vsel %vm1618, %v1584, %v1652
      %v1687 = vsel %vm1619, %v1585, %v1653
      %v1688 = vsel %vm1620, %v1586, %v1654
      %v1689 = vsel %vm1621, %v1587, %v1655
      %v1690 = vsel %vm1622, %v1588, %v1656
      %v1691 = vsel %vm1623, %v1589, %v1657
      %v1692 = vsel %vm1624, %v1590, %v1658
      %v1693 = vsel %vm1625, %v1591, %v1659
      %v1694 = vsel %vm1626, %v1592, %v1660
      %v1695 = vsel %vm1627, %v1593, %v1661
      %v1696 = vsel %vm1628, %v1594, %v1662
      %v1697 = vsel %vm1629, %v1595, %v1663
      %v1698 = vsel %vm1630, %v1596, %v1664
      %v1699 = vsel %vm1631, %v1597, %v1665
      %v1700 = vpack.c.bf16 %v1667, %v1666
      %v1701 = vpack.c.bf16 %v1669, %v1668
      %v1702 = vpack.c.bf16 %v1671, %v1670
      %v1703 = vpack.c.bf16 %v1673, %v1672
      %v1704 = vpack.c.bf16 %v1675, %v1674
      %v1705 = vpack.c.bf16 %v1677, %v1676
      %v1706 = vpack.c.bf16 %v1679, %v1678
      %v1707 = vpack.c.bf16 %v1681, %v1680
      %v1708 = vpack.c.bf16 %v1683, %v1682
      %v1709 = vpack.c.bf16 %v1685, %v1684
      %v1710 = vpack.c.bf16 %v1687, %v1686
      %v1711 = vpack.c.bf16 %v1689, %v1688
      %v1712 = vpack.c.bf16 %v1691, %v1690
      %v1713 = vpack.c.bf16 %v1693, %v1692
      %v1714 = vpack.c.bf16 %v1695, %v1694
      %v1715 = vpack.c.bf16 %v1697, %v1696
      %v1716 = vpack.c.bf16 %v1699, %v1698
      %v1734 = vunpack.c.l.b16 %v1700
      %v1735 = vunpack.c.h.b16 %v1700
      %v1736 = vunpack.c.l.b16 %v1701
      %v1737 = vunpack.c.h.b16 %v1701
      %v1738 = vunpack.c.l.b16 %v1702
      %v1739 = vunpack.c.h.b16 %v1702
      %v1740 = vunpack.c.l.b16 %v1703
      %v1741 = vunpack.c.h.b16 %v1703
      %v1742 = vunpack.c.l.b16 %v1704
      %v1743 = vunpack.c.h.b16 %v1704
      %v1744 = vunpack.c.l.b16 %v1705
      %v1745 = vunpack.c.h.b16 %v1705
      %v1746 = vunpack.c.l.b16 %v1706
      %v1747 = vunpack.c.h.b16 %v1706
      %v1748 = vunpack.c.l.b16 %v1707
      %v1749 = vunpack.c.h.b16 %v1707
      %v1750 = vunpack.c.l.b16 %v1708
      %v1751 = vunpack.c.h.b16 %v1708
      %v1752 = vunpack.c.l.b16 %v1709
      %v1753 = vunpack.c.h.b16 %v1709
      %v1754 = vunpack.c.l.b16 %v1710
      %v1755 = vunpack.c.h.b16 %v1710
      %v1756 = vunpack.c.l.b16 %v1711
      %v1757 = vunpack.c.h.b16 %v1711
      %v1758 = vunpack.c.l.b16 %v1712
      %v1759 = vunpack.c.h.b16 %v1712
      %v1760 = vunpack.c.l.b16 %v1713
      %v1761 = vunpack.c.h.b16 %v1713
      %v1762 = vunpack.c.l.b16 %v1714
      %v1763 = vunpack.c.h.b16 %v1714
      %v1764 = vunpack.c.l.b16 %v1715
      %v1765 = vunpack.c.h.b16 %v1715
      %v1766 = vunpack.c.l.b16 %v1716
      %v1767 = vunpack.c.h.b16 %v1716
      %v1768 = vpack.c.b16 %v1734, %v1734
      %v1769 = vpack.c.b16 %v1735, %v1735
      %v1770 = vpack.c.b16 %v1736, %v1736
      %v1771 = vpack.c.b16 %v1737, %v1737
      %v1772 = vpack.c.b16 %v1738, %v1738
      %v1773 = vpack.c.b16 %v1739, %v1739
      %v1774 = vpack.c.b16 %v1740, %v1740
      %v1775 = vpack.c.b16 %v1741, %v1741
      %v1776 = vpack.c.b16 %v1742, %v1742
      %v1777 = vpack.c.b16 %v1743, %v1743
      %v1778 = vpack.c.b16 %v1744, %v1744
      %v1779 = vpack.c.b16 %v1745, %v1745
      %v1780 = vpack.c.b16 %v1746, %v1746
      %v1781 = vpack.c.b16 %v1747, %v1747
      %v1782 = vpack.c.b16 %v1748, %v1748
      %v1783 = vpack.c.b16 %v1749, %v1749
      %v1784 = vpack.c.b16 %v1750, %v1750
      %v1785 = vpack.c.b16 %v1751, %v1751
      %v1786 = vpack.c.b16 %v1752, %v1752
      %v1787 = vpack.c.b16 %v1753, %v1753
      %v1788 = vpack.c.b16 %v1754, %v1754
      %v1789 = vpack.c.b16 %v1755, %v1755
      %v1790 = vpack.c.b16 %v1756, %v1756
      %v1791 = vpack.c.b16 %v1757, %v1757
      %v1792 = vpack.c.b16 %v1758, %v1758
      %v1793 = vpack.c.b16 %v1759, %v1759
      %v1794 = vpack.c.b16 %v1760, %v1760
      %v1795 = vpack.c.b16 %v1761, %v1761
      %v1796 = vpack.c.b16 %v1762, %v1762
      %v1797 = vpack.c.b16 %v1763, %v1763
      %v1798 = vpack.c.b16 %v1764, %v1764
      %v1799 = vpack.c.b16 %v1765, %v1765
      %v1800 = vpack.c.b16 %v1766, %v1766
      %v1801 = vpack.c.b16 %v1767, %v1767
      %vm1836 = vcmask 60416
      %1837 = vst.msk [vmem:[%s143] sm:$0xf] %vm1836, %v1768
      %1838 = vst.msk [vmem:[%s143 + $0x4] sm:$0xf] %vm1836, %v1769
      %1839 = vst.msk [vmem:[%s143 + $0x8] sm:$0xf] %vm1836, %v1770
      %1840 = vst.msk [vmem:[%s143 + $0xc] sm:$0xf] %vm1836, %v1771
      %1841 = vst.msk [vmem:[%s143 + $0x10] sm:$0xf] %vm1836, %v1772
      %1842 = vst.msk [vmem:[%s143 + $0x14] sm:$0xf] %vm1836, %v1773
      %1843 = vst.msk [vmem:[%s143 + $0x18] sm:$0xf] %vm1836, %v1774
      %1844 = vst.msk [vmem:[%s143 + $0x1c] sm:$0xf] %vm1836, %v1775
      %1845 = vst.msk [vmem:[%s143 + $0x20] sm:$0xf] %vm1836, %v1776
      %1846 = vst.msk [vmem:[%s143 + $0x24] sm:$0xf] %vm1836, %v1777
      %1847 = vst.msk [vmem:[%s143 + $0x28] sm:$0xf] %vm1836, %v1778
      %1848 = vst.msk [vmem:[%s143 + $0x2c] sm:$0xf] %vm1836, %v1779
      %1849 = vst.msk [vmem:[%s143 + $0x30] sm:$0xf] %vm1836, %v1780
      %1850 = vst.msk [vmem:[%s143 + $0x34] sm:$0xf] %vm1836, %v1781
      %1851 = vst.msk [vmem:[%s143 + $0x38] sm:$0xf] %vm1836, %v1782
      %1852 = vst.msk [vmem:[%s143 + $0x3c] sm:$0xf] %vm1836, %v1783
      %1853 = vst.msk [vmem:[%s143 + $0x40] sm:$0xf] %vm1836, %v1784
      %1854 = vst.msk [vmem:[%s143 + $0x44] sm:$0xf] %vm1836, %v1785
      %1855 = vst.msk [vmem:[%s143 + $0x48] sm:$0xf] %vm1836, %v1786
      %1856 = vst.msk [vmem:[%s143 + $0x4c] sm:$0xf] %vm1836, %v1787
      %1857 = vst.msk [vmem:[%s143 + $0x50] sm:$0xf] %vm1836, %v1788
      %1858 = vst.msk [vmem:[%s143 + $0x54] sm:$0xf] %vm1836, %v1789
      %1859 = vst.msk [vmem:[%s143 + $0x58] sm:$0xf] %vm1836, %v1790
      %1860 = vst.msk [vmem:[%s143 + $0x5c] sm:$0xf] %vm1836, %v1791
      %1861 = vst.msk [vmem:[%s143 + $0x60] sm:$0xf] %vm1836, %v1792
      %1862 = vst.msk [vmem:[%s143 + $0x64] sm:$0xf] %vm1836, %v1793
      %1863 = vst.msk [vmem:[%s143 + $0x68] sm:$0xf] %vm1836, %v1794
      %1864 = vst.msk [vmem:[%s143 + $0x6c] sm:$0xf] %vm1836, %v1795
      %1865 = vst.msk [vmem:[%s143 + $0x70] sm:$0xf] %vm1836, %v1796
      %1866 = vst.msk [vmem:[%s143 + $0x74] sm:$0xf] %vm1836, %v1797
      %1867 = vst.msk [vmem:[%s143 + $0x78] sm:$0xf] %vm1836, %v1798
      %1868 = vst.msk [vmem:[%s143 + $0x7c] sm:$0xf] %vm1836, %v1799
      %1869 = vst.msk [vmem:[%s143 + $0x80] sm:$0xf] %vm1836, %v1800
      %1870 = vst.msk [vmem:[%s143 + $0x84] sm:$0xf] %vm1836, %v1801
      %p1871 = scmp.lt.s32.totalorder %s13, 1
      %s1872 = scalar_select %p1871, %s13, 1
      %s1873 = smul.addr %s1872, 34
      %s1874 = smul.addr %s1873, 4
      %s1875 = scalar_lea.vmem %s2, %s1874
      // Predicated region
      $region29: #{netD_forward.4} parent=27 // pred_check
        %p1876 = pneg %p78
      $region30: #{netD_forward.4} parent=27 // pred_check_branch
        %1878 = sbr.rel (%p1876) target = $region32
      $region31: #{netD_forward.4} parent=27 // pred_region
        _
      $region32: #{netD_forward.4} parent=27 // pred_fallthru
        _
    $region28: #{netD_forward.4} parent=5 // pred_fallthru
      _
    %p1879 = scmp.le.s32.totalorder 2, %s8
    // Predicated region
    $region33: #{netD_forward.4} parent=5 // pred_check
      %p1880 = pneg %p1879
    $region34: #{netD_forward.4} parent=5 // pred_check_branch
      %1882 = sbr.rel (%p1880) target = $region36
    $region35: #{netD_forward.4} parent=5 // pred_region
      %s1883 = ssub.s32 %s8, 2
      // Predicated region
      $region37: #{netD_forward.4} parent=35 // pred_check
        %p1884 = pneg %p84
      $region38: #{netD_forward.4} parent=35 // pred_check_branch
        %1886 = sbr.rel (%p1884) target = $region40
      $region39: #{netD_forward.4} parent=35 // pred_region
        %p1887 = scmp.lt.s32.totalorder %s14, 1
        %s1888 = scalar_select %p1887, %s14, 1
        %s1889 = smul.addr %s1888, 34
        %s1890 = smul.addr %s1889, 4
        %s1891 = scalar_lea.vmem %s2, %s1890
      $region40: #{netD_forward.4} parent=35 // pred_fallthru
        _
    $region36: #{netD_forward.4} parent=5 // pred_fallthru
      _
  $region6: #{netD_forward.4} parent=0 // loop_footer
    %s12 = sadd.s32 1, %s8
  $region7: #{netD_forward.4} parent=0 // loop_footer_branch
    %7 = sbr.rel target = $region3
  $region8: #{netD_forward.4} parent=0 // loop_exit
    _

// kernel: netD_forward.5
$region0: #{netD_forward.5}
  #allocation0 [shape = 'u32[]', space=smem, size = 0x4, offset = 0x4, fixed_abs, tag = 'smem constant byte address 0x4 - core index']
  #allocation1 [shape = 'u32[144,128]{1,0:T(1,128)}', space=vmem, size = 0x12000, scoped, tag = 'internal scratch']
  %s0 = inlined_call_operand.vmem [shape: bf16[2,88,32], index: 0, kind: input, shape index: {}]
  %s1 = inlined_call_operand.vmem [shape: bf16[4,32,16], index: 1, kind: input, shape index: {}]
  %s2 = inlined_call_operand.vmem [shape: bf16[2,72,16], index: 2, kind: output, shape index: {}]
  %s3 = sld [smem:[#allocation0]]
  $region41: #{netD_forward.5} parent=0
    _
  %s5 = ssub.s32 1, %s3
  %s6 = scalar_select 0, %s5, %s3
  loop: start=0, step=1, limit=4
  $region2: #{netD_forward.5} parent=0 // loop_pre_header
    _
  $region3: #{netD_forward.5} parent=0 // loop_header
    %s8 = sphi 0, %s12
    %p9 = scmp.ge.s32.totalorder %s8, 4
    %s18 = sphi 0, %s20
    %s21 = sphi 0, %s18
    %s22 = sphi 0, %s21
    %s38 = sphi 0, %s22
    %s42 = sphi 0, %s42
    %s44 = sphi 0, %s42
    %s45 = sphi 0, %s44
    %s59 = sphi 0, %s45
    %s65 = sphi 0, %s67
    %s68 = sphi 0, %s65
    %s69 = sphi 0, %s68
    %s85 = sphi 0, %s69
  $region4: #{netD_forward.5} parent=0 // loop_header_branch
    %11 = sbr.rel (%p9) target = $region8
  $region5: #{netD_forward.5} parent=0 // loop_body
    %s13 = ssub.s32 %s8, 1
    %s14 = ssub.s32 %s8, 2
    %s15 = sadd.s32 %s8, 1
    %s16 = ssub.s32 %s8, %s15
    %p17 = scmp.eq.s32.totalorder %s16, 0
    %s19 = sadd.s32 %s18, 1
    %s20 = scalar_select %p17, %s18, %s19
    %p23 = pneg %p17
    %p24 = scmp.eq.s32.totalorder %s8, 1
    %p25 = por %p23, %p24
    %p26 = scmp.ne.s32.totalorder %s18, %s21
    %p27 = scmp.eq.s32.totalorder %s8, 0
    %p28 = por %p26, %p27
    %p29 = scmp.ne.s32.totalorder %s18, %s21
    %p30 = scmp.eq.s32.totalorder %s13, 1
    %p31 = por %p29, %p30
    %p32 = scmp.ne.s32.totalorder %s21, %s22
    %p33 = scmp.eq.s32.totalorder %s13, 0
    %p34 = por %p32, %p33
    %p35 = scmp.ne.s32.totalorder %s21, %s22
    %p36 = scmp.eq.s32.totalorder %s14, 1
    %p37 = por %p35, %p36
    %p39 = scmp.ne.s32.totalorder %s22, %s38
    %p40 = scmp.eq.s32.totalorder %s14, 0
    %p41 = por %p39, %p40
    %s43 = sadd.s32 %s42, 1
    %p46 = scmp.eq.s32.totalorder %s8, 1
    %p47 = scmp.ne.s32.totalorder %s42, %s44
    %p48 = scmp.eq.s32.totalorder %s8, 0
    %p49 = por %p47, %p48
    %p50 = scmp.ne.s32.totalorder %s42, %s44
    %p51 = scmp.eq.s32.totalorder %s13, 1
    %p52 = por %p50, %p51
    %p53 = scmp.ne.s32.totalorder %s44, %s45
    %p54 = scmp.eq.s32.totalorder %s13, 0
    %p55 = por %p53, %p54
    %p56 = scmp.ne.s32.totalorder %s44, %s45
    %p57 = scmp.eq.s32.totalorder %s14, 1
    %p58 = por %p56, %p57
    %p60 = scmp.ne.s32.totalorder %s45, %s59
    %p61 = scmp.eq.s32.totalorder %s14, 0
    %p62 = por %p60, %p61
    %s63 = ssub.s32 %s8, %s15
    %p64 = scmp.eq.s32.totalorder %s63, 0
    %s66 = sadd.s32 %s65, 1
    %s67 = scalar_select %p64, %s65, %s66
    %p70 = pneg %p64
    %p71 = scmp.eq.s32.totalorder %s8, 1
    %p72 = por %p70, %p71
    %p73 = scmp.ne.s32.totalorder %s65, %s68
    %p74 = scmp.eq.s32.totalorder %s8, 0
    %p75 = por %p73, %p74
    %p76 = scmp.ne.s32.totalorder %s65, %s68
    %p77 = scmp.eq.s32.totalorder %s13, 1
    %p78 = por %p76, %p77
    %p79 = scmp.ne.s32.totalorder %s68, %s69
    %p80 = scmp.eq.s32.totalorder %s13, 0
    %p81 = por %p79, %p80
    %p82 = scmp.ne.s32.totalorder %s68, %s69
    %p83 = scmp.eq.s32.totalorder %s14, 1
    %p84 = por %p82, %p83
    %p86 = scmp.ne.s32.totalorder %s69, %s85
    %p87 = scmp.eq.s32.totalorder %s14, 0
    %p88 = por %p86, %p87
    %p89 = scmp.le.s32.totalorder 1, %s8
    %p90 = scmp.lt.s32.totalorder %s8, 3
    %p91 = pnand %p89, %p90
    %p92 = pneg %p91
    // Predicated region
    $region9: #{netD_forward.5} parent=5 // pred_check
      _
    $region10: #{netD_forward.5} parent=5 // pred_check_branch
      %94 = sbr.rel (%p91) target = $region12
    $region11: #{netD_forward.5} parent=5 // pred_region
      %s95 = ssub.s32 %s8, 1
      // Predicated region
      $region13: #{netD_forward.5} parent=11 // pred_check
        %p96 = pneg %p55
      $region14: #{netD_forward.5} parent=11 // pred_check_branch
        %98 = sbr.rel (%p96) target = $region16
      $region15: #{netD_forward.5} parent=11 // pred_region
        _
      $region16: #{netD_forward.5} parent=11 // pred_fallthru
        _
    $region12: #{netD_forward.5} parent=5 // pred_fallthru
      _
    %p99 = scmp.lt.s32.totalorder %s8, 2
    // Predicated region
    $region17: #{netD_forward.5} parent=5 // pred_check
      %p100 = pneg %p99
    $region18: #{netD_forward.5} parent=5 // pred_check_branch
      %102 = sbr.rel (%p100) target = $region20
    $region19: #{netD_forward.5} parent=5 // pred_region
      // Predicated region
      $region21: #{netD_forward.5} parent=19 // pred_check
        %p103 = pneg %p28
      $region22: #{netD_forward.5} parent=19 // pred_check_branch
        %105 = sbr.rel (%p103) target = $region24
      $region23: #{netD_forward.5} parent=19 // pred_region
        %p106 = scmp.lt.s32.totalorder %s8, 1
        %s107 = scalar_select %p106, %s8, 1
        %s108 = smul.addr %s107, 11
        %s109 = smul.addr %s108, 4
        %s110 = scalar_lea.vmem %s0, %s109
      $region24: #{netD_forward.5} parent=19 // pred_fallthru
        _
    $region20: #{netD_forward.5} parent=5 // pred_fallthru
      _
    %p111 = scmp.le.s32.totalorder 1, %s8
    %p112 = scmp.lt.s32.totalorder %s8, 3
    %p113 = pnand %p111, %p112
    %p114 = pneg %p113
    // Predicated region
    $region25: #{netD_forward.5} parent=5 // pred_check
      _
    $region26: #{netD_forward.5} parent=5 // pred_check_branch
      %116 = sbr.rel (%p113) target = $region28
    $region27: #{netD_forward.5} parent=5 // pred_region
      %s117 = ssub.s32 %s8, 1
      %p118 = scmp.lt.s32.totalorder %s13, 1
      %s119 = scalar_select %p118, %s13, 1
      %s120 = smul.addr %s119, 11
      %s121 = smul.addr %s120, 4
      %s122 = scalar_lea.vmem %s0, %s121
      %p123 = pneg %p34
      %p124 = pneg %p31
      %p125 = pneg %p55
      %p126 = pneg %p52
      %p127 = pneg %p81
      %p128 = pneg %p78
      %p129 = scmp.lt.s32.totalorder %s13, 1
      %s130 = scalar_select %p129, %s13, 1
      %s131 = smul.addr %s130, 9
      %s132 = smul.addr %s131, 4
      %s133 = scalar_lea.vmem %s2, %s132
      %p134 = scmp.lt.s32.totalorder %s13, 1
      %s135 = scalar_select %p134, %s13, 1
      %s136 = smul.addr %s135, 11
      %s137 = smul.addr %s136, 4
      %s138 = scalar_lea.vmem %s0, %s137
      %p139 = scmp.lt.s32.totalorder %s13, 1
      %s140 = scalar_select %p139, %s13, 1
      %s141 = smul.addr %s140, 9
      %s142 = smul.addr %s141, 4
      %s143 = scalar_lea.vmem %s2, %s142
      %v145 = vlaneseq
      %v146 = vshrl.u32 %v145, 7
      %v147 = vadd.s32 %v146, 8
      %v148 = vadd.s32 %v146, 16
      %v149 = vadd.s32 %v146, 24
      %v150 = vadd.s32 %v146, 32
      %v151 = vadd.s32 %v146, 40
      %v152 = vadd.s32 %v146, 48
      %v153 = vadd.s32 %v146, 56
      %v154 = vadd.s32 %v146, 64
      %vm155 = vcmp.lt.s32.totalorder %v146, 0
      %v156 = vsub.s32 0, %v146
      %v157 = vsel %vm155, %v156, %v146
      %v158 = vmul.u32.u64.compose %v157, 3817748708
      %v159 = vextract.low.u32 %v158
      %v160 = vextract.high.u32 %v158
      %v161 = vshrl.u32 %v160, 3
      %v162 = vmul.u32 %v161, 9
      %v163 = vsub.s32 %v157, %v162
      %v164 = vsub.s32 0, %v163
      %v165 = vsel %vm155, %v164, %v163
      %vm166 = vcmp.lt.s32.totalorder %v147, 0
      %v167 = vsub.s32 0, %v147
      %v168 = vsel %vm166, %v167, %v147
      %v169 = vmul.u32.u64.compose %v168, 3817748708
      %v170 = vextract.low.u32 %v169
      %v171 = vextract.high.u32 %v169
      %v172 = vshrl.u32 %v171, 3
      %v173 = vmul.u32 %v172, 9
      %v174 = vsub.s32 %v168, %v173
      %v175 = vsub.s32 0, %v174
      %v176 = vsel %vm166, %v175, %v174
      %vm177 = vcmp.lt.s32.totalorder %v148, 0
      %v178 = vsub.s32 0, %v148
      %v179 = vsel %vm177, %v178, %v148
      %v180 = vmul.u32.u64.compose %v179, 3817748708
      %v181 = vextract.low.u32 %v180
      %v182 = vextract.high.u32 %v180
      %v183 = vshrl.u32 %v182, 3
      %v184 = vmul.u32 %v183, 9
      %v185 = vsub.s32 %v179, %v184
      %v186 = vsub.s32 0, %v185
      %v187 = vsel %vm177, %v186, %v185
      %vm188 = vcmp.lt.s32.totalorder %v149, 0
      %v189 = vsub.s32 0, %v149
      %v190 = vsel %vm188, %v189, %v149
      %v191 = vmul.u32.u64.compose %v190, 3817748708
      %v192 = vextract.low.u32 %v191
      %v193 = vextract.high.u32 %v191
      %v194 = vshrl.u32 %v193, 3
      %v195 = vmul.u32 %v194, 9
      %v196 = vsub.s32 %v190, %v195
      %v197 = vsub.s32 0, %v196
      %v198 = vsel %vm188, %v197, %v196
      %vm199 = vcmp.lt.s32.totalorder %v150, 0
      %v200 = vsub.s32 0, %v150
      %v201 = vsel %vm199, %v200, %v150
      %v202 = vmul.u32.u64.compose %v201, 3817748708
      %v203 = vextract.low.u32 %v202
      %v204 = vextract.high.u32 %v202
      %v205 = vshrl.u32 %v204, 3
      %v206 = vmul.u32 %v205, 9
      %v207 = vsub.s32 %v201, %v206
      %v208 = vsub.s32 0, %v207
      %v209 = vsel %vm199, %v208, %v207
      %vm210 = vcmp.lt.s32.totalorder %v151, 0
      %v211 = vsub.s32 0, %v151
      %v212 = vsel %vm210, %v211, %v151
      %v213 = vmul.u32.u64.compose %v212, 3817748708
      %v214 = vextract.low.u32 %v213
      %v215 = vextract.high.u32 %v213
      %v216 = vshrl.u32 %v215, 3
      %v217 = vmul.u32 %v216, 9
      %v218 = vsub.s32 %v212, %v217
      %v219 = vsub.s32 0, %v218
      %v220 = vsel %vm210, %v219, %v218
      %vm221 = vcmp.lt.s32.totalorder %v152, 0
      %v222 = vsub.s32 0, %v152
      %v223 = vsel %vm221, %v222, %v152
      %v224 = vmul.u32.u64.compose %v223, 3817748708
      %v225 = vextract.low.u32 %v224
      %v226 = vextract.high.u32 %v224
      %v227 = vshrl.u32 %v226, 3
      %v228 = vmul.u32 %v227, 9
      %v229 = vsub.s32 %v223, %v228
      %v230 = vsub.s32 0, %v229
      %v231 = vsel %vm221, %v230, %v229
      %vm232 = vcmp.lt.s32.totalorder %v153, 0
      %v233 = vsub.s32 0, %v153
      %v234 = vsel %vm232, %v233, %v153
      %v235 = vmul.u32.u64.compose %v234, 3817748708
      %v236 = vextract.low.u32 %v235
      %v237 = vextract.high.u32 %v235
      %v238 = vshrl.u32 %v237, 3
      %v239 = vmul.u32 %v238, 9
      %v240 = vsub.s32 %v234, %v239
      %v241 = vsub.s32 0, %v240
      %v242 = vsel %vm232, %v241, %v240
      %vm243 = vcmp.lt.s32.totalorder %v154, 0
      %v244 = vsub.s32 0, %v154
      %v245 = vsel %vm243, %v244, %v154
      %v246 = vmul.u32.u64.compose %v245, 3817748708
      %v247 = vextract.low.u32 %v246
      %v248 = vextract.high.u32 %v246
      %v249 = vshrl.u32 %v248, 3
      %v250 = vmul.u32 %v249, 9
      %v251 = vsub.s32 %v245, %v250
      %v252 = vsub.s32 0, %v251
      %v253 = vsel %vm243, %v252, %v251
      %vm254 = vcmp.ne.s32.totalorder %v165, 0
      %vm255 = vcmp.ne.s32.totalorder %v176, 0
      %vm256 = vcmp.ne.s32.totalorder %v187, 0
      %vm257 = vcmp.ne.s32.totalorder %v198, 0
      %vm258 = vcmp.ne.s32.totalorder %v209, 0
      %vm259 = vcmp.ne.s32.totalorder %v220, 0
      %vm260 = vcmp.ne.s32.totalorder %v231, 0
      %vm261 = vcmp.ne.s32.totalorder %v242, 0
      %vm262 = vcmp.ne.s32.totalorder %v253, 0
      %vm263 = vcmp.lt.s32.totalorder %v165, 0
      %vm264 = vcmp.lt.s32.totalorder %v176, 0
      %vm265 = vcmp.lt.s32.totalorder %v187, 0
      %vm266 = vcmp.lt.s32.totalorder %v198, 0
      %vm267 = vcmp.lt.s32.totalorder %v209, 0
      %vm268 = vcmp.lt.s32.totalorder %v220, 0
      %vm269 = vcmp.lt.s32.totalorder %v231, 0
      %vm270 = vcmp.lt.s32.totalorder %v242, 0
      %vm271 = vcmp.lt.s32.totalorder %v253, 0
      %vm272 = vmand %vm263, %vm254
      %vm273 = vmand %vm264, %vm255
      %vm274 = vmand %vm265, %vm256
      %vm275 = vmand %vm266, %vm257
      %vm276 = vmand %vm267, %vm258
      %vm277 = vmand %vm268, %vm259
      %vm278 = vmand %vm269, %vm260
      %vm279 = vmand %vm270, %vm261
      %vm280 = vmand %vm271, %vm262
      %v281 = vadd.s32 %v165, 9
      %v282 = vadd.s32 %v176, 9
      %v283 = vadd.s32 %v187, 9
      %v284 = vadd.s32 %v198, 9
      %v285 = vadd.s32 %v209, 9
      %v286 = vadd.s32 %v220, 9
      %v287 = vadd.s32 %v231, 9
      %v288 = vadd.s32 %v242, 9
      %v289 = vadd.s32 %v253, 9
      %v290 = vsel %vm272, %v281, %v165
      %v291 = vsel %vm273, %v282, %v176
      %v292 = vsel %vm274, %v283, %v187
      %v293 = vsel %vm275, %v284, %v198
      %v294 = vsel %vm276, %v285, %v209
      %v295 = vsel %vm277, %v286, %v220
      %v296 = vsel %vm278, %v287, %v231
      %v297 = vsel %vm279, %v288, %v242
      %v298 = vsel %vm280, %v289, %v253
      %vm299 = vcmp.ne.s32.totalorder %v290, 8
      %vm300 = vcmp.ne.s32.totalorder %v291, 8
      %vm301 = vcmp.ne.s32.totalorder %v292, 8
      %vm302 = vcmp.ne.s32.totalorder %v293, 8
      %vm303 = vcmp.ne.s32.totalorder %v294, 8
      %vm304 = vcmp.ne.s32.totalorder %v295, 8
      %vm305 = vcmp.ne.s32.totalorder %v296, 8
      %vm306 = vcmp.ne.s32.totalorder %v297, 8
      %vm307 = vcmp.ne.s32.totalorder %v298, 8
      %v308 = vsel %vm299, 1, 0
      %v309 = vsel %vm300, 1, 0
      %v310 = vsel %vm301, 1, 0
      %v311 = vsel %vm302, 1, 0
      %v312 = vsel %vm303, 1, 0
      %v313 = vsel %vm304, 1, 0
      %v314 = vsel %vm305, 1, 0
      %v315 = vsel %vm306, 1, 0
      %v316 = vsel %vm307, 1, 0
      %v317 = vcvt.s32.f32 %v308
      %v318 = vcvt.s32.f32 %v309
      %v319 = vcvt.s32.f32 %v310
      %v320 = vcvt.s32.f32 %v311
      %v321 = vcvt.s32.f32 %v312
      %v322 = vcvt.s32.f32 %v313
      %v323 = vcvt.s32.f32 %v314
      %v324 = vcvt.s32.f32 %v315
      %v325 = vcvt.s32.f32 %v316
      %v326 = vld [vmem:[%s138] sm:$0xf]
      %v327 = vld [vmem:[%s138 + $0x4] sm:$0xf]
      %v328 = vld [vmem:[%s138 + $0x8] sm:$0xf]
      %v329 = vld [vmem:[%s138 + $0xc] sm:$0xf]
      %v330 = vld [vmem:[%s138 + $0x10] sm:$0xf]
      %v331 = vld [vmem:[%s138 + $0x14] sm:$0xf]
      %v332 = vld [vmem:[%s138 + $0x18] sm:$0xf]
      %v333 = vld [vmem:[%s138 + $0x1c] sm:$0xf]
      %v334 = vld [vmem:[%s138 + $0x20] sm:$0xf]
      %v335 = vld [vmem:[%s138 + $0x24] sm:$0xf]
      %v336 = vld [vmem:[%s138 + $0x28] sm:$0xf]
      %v337 = vld [vmem:[%s1] sm:$0xf]
      %v338 = vld [vmem:[%s1 + $0x4] sm:$0xf]
      %v339 = vld [vmem:[%s1 + $0x8] sm:$0xf]
      %v340 = vld [vmem:[%s1 + $0xc] sm:$0xf]
      %v352 = vunpack.c.l.b16 %v326
      %v353 = vunpack.c.l.b16 %v327
      %v354 = vunpack.c.l.b16 %v328
      %v355 = vunpack.c.l.b16 %v329
      %v356 = vunpack.c.l.b16 %v330
      %v357 = vunpack.c.l.b16 %v331
      %v358 = vunpack.c.l.b16 %v332
      %v359 = vunpack.c.l.b16 %v333
      %v360 = vunpack.c.l.b16 %v334
      %v361 = vunpack.c.l.b16 %v335
      %v362 = vunpack.c.l.b16 %v336
      %v363 = vpack.c.b16 %v353, %v352
      %v364 = vpack.c.b16 %v355, %v354
      %v365 = vpack.c.b16 %v357, %v356
      %v366 = vpack.c.b16 %v359, %v358
      %v367 = vpack.c.b16 %v361, %v360
      %v368 = vpack.c.b16 %v362, %v362
      %v373 = vunpack.c.l.b16 %v337
      %v374 = vunpack.c.l.b16 %v338
      %v375 = vunpack.c.l.b16 %v339
      %v376 = vunpack.c.l.b16 %v340
      %v377 = vpack.c.b16 %v374, %v373
      %v378 = vpack.c.b16 %v376, %v375
      %vm381 = vcmask 261120
      %v383 = vsel %vm381, %v363, 0
      %v386 = vsel %vm381, %v364, 0
      %v389 = vsel %vm381, %v365, 0
      %v392 = vsel %vm381, %v366, 0
      %v395 = vsel %vm381, %v367, 0
      %v398 = vsel %vm381, %v368, 0
      %400 = vmatprep.subr.bf16.mxu0 0
      %401 = vmatpush1.bf16.msra.mxu0 %v377
      %402 = vmatprep.subr.bf16.mxu0 0
      %403 = vmatpush1.bf16.msra.mxu0 %v378
      %404 = vmatprep.subr.bf16.mxu0 0
      %405 = vmatpush1.bf16.msra.mxu0 0
      %406 = vmatprep.subr.bf16.mxu0 0
      %407 = vmatpush1.bf16.msra.mxu0 0
      %408 = vmatprep.subr.bf16.mxu0 0
      %409 = vmatpush1.bf16.msra.mxu0 0
      %410 = vmatprep.subr.bf16.mxu0 0
      %411 = vmatpush1.bf16.msra.mxu0 0
      %412 = vmatprep.subr.bf16.mxu0 0
      %413 = vmatpush1.bf16.msra.mxu0 0
      %414 = vmatprep.subr.bf16.mxu0 0
      %415 = vmatpush1.bf16.msra.mxu0 0
      %416 = vmatprep.subr.bf16.mxu0 0
      %417 = vmatpush1.bf16.msra.mxu0 0
      %418 = vmatprep.subr.bf16.mxu0 0
      %419 = vmatpush1.bf16.msra.mxu0 0
      %420 = vmatprep.subr.bf16.mxu0 0
      %421 = vmatpush1.bf16.msra.mxu0 0
      %422 = vmatprep.subr.bf16.mxu0 0
      %423 = vmatpush1.bf16.msra.mxu0 0
      %424 = vmatprep.subr.bf16.mxu0 0
      %425 = vmatpush1.bf16.msra.mxu0 0
      %426 = vmatprep.subr.bf16.mxu0 0
      %427 = vmatpush1.bf16.msra.mxu0 0
      %428 = vmatprep.subr.bf16.mxu0 0
      %429 = vmatpush1.bf16.msra.mxu0 0
      %430 = vmatprep.subr.bf16.mxu0 0
      %431 = vmatpush1.bf16.msra.mxu0 0
      %432 = vmatprep.mubr.bf16.mxu0 0
      %433 = vmatmul.mubr.bf16.gmra.mrb[0].mxu0 %v383
      %v434 = vpop.f32.mrb[0].mxu0
      %v435 = vadd.f32 0.0, %v434
      %v436 = vpop.f32.mrb[0].mxu0
      %v437 = vpop.f32.mrb[0].mxu0
      %v438 = vadd.f32 0.0, %v437
      %v439 = vpop.f32.mrb[0].mxu0
      %440 = vmatprep.mubr.bf16.mxu0 0
      %441 = vmatmul.mubr.bf16.gmra.mrb[0].mxu0 %v386
      %v442 = vpop.f32.mrb[0].mxu0
      %v443 = vadd.f32 0.0, %v442
      %v444 = vpop.f32.mrb[0].mxu0
      %v445 = vpop.f32.mrb[0].mxu0
      %v446 = vadd.f32 0.0, %v445
      %v447 = vpop.f32.mrb[0].mxu0
      %448 = vmatprep.mubr.bf16.mxu0 0
      %449 = vmatmul.mubr.bf16.gmra.mrb[0].mxu0 %v389
      %v450 = vpop.f32.mrb[0].mxu0
      %v451 = vadd.f32 0.0, %v450
      %v452 = vpop.f32.mrb[0].mxu0
      %v453 = vpop.f32.mrb[0].mxu0
      %v454 = vadd.f32 0.0, %v453
      %v455 = vpop.f32.mrb[0].mxu0
      %456 = vmatprep.mubr.bf16.mxu0 0
      %457 = vmatmul.mubr.bf16.gmra.mrb[0].mxu0 %v392
      %v458 = vpop.f32.mrb[0].mxu0
      %v459 = vadd.f32 0.0, %v458
      %v460 = vpop.f32.mrb[0].mxu0
      %v461 = vpop.f32.mrb[0].mxu0
      %v462 = vadd.f32 0.0, %v461
      %v463 = vpop.f32.mrb[0].mxu0
      %464 = vmatprep.mubr.bf16.mxu0 0
      %465 = vmatmul.mubr.bf16.gmra.mrb[0].mxu0 %v395
      %v466 = vpop.f32.mrb[0].mxu0
      %v467 = vadd.f32 0.0, %v466
      %v468 = vpop.f32.mrb[0].mxu0
      %v469 = vpop.f32.mrb[0].mxu0
      %v470 = vpop.f32.mrb[0].mxu0
      %471 = vmatprep.mubr.bf16.mxu0 0
      %472 = vmatmul.mubr.bf16.gmra.mrb[0].mxu0 %v398
      %v473 = vpop.f32.mrb[0].mxu0
      %v474 = vpop.f32.mrb[0].mxu0
      %v475 = vpop.f32.mrb[0].mxu0
      %v476 = vpop.f32.mrb[0].mxu0
      %477 = vdwg.mxu0
      %s478 = scalar_lea.vmem %s1, 16
      %v479 = vld [vmem:[%s478] sm:$0xf]
      %v480 = vld [vmem:[%s478 + $0x4] sm:$0xf]
      %v481 = vld [vmem:[%s478 + $0x8] sm:$0xf]
      %v482 = vld [vmem:[%s478 + $0xc] sm:$0xf]
      %v487 = vunpack.c.l.b16 %v479
      %v488 = vunpack.c.l.b16 %v480
      %v489 = vunpack.c.l.b16 %v481
      %v490 = vunpack.c.l.b16 %v482
      %v491 = vpack.c.b16 %v488, %v487
      %v492 = vpack.c.b16 %v490, %v489
      %495 = vmatprep.subr.bf16.mxu0 0
      %496 = vmatpush1.bf16.msra.mxu0 %v491
      %497 = vmatprep.subr.bf16.mxu0 0
      %498 = vmatpush1.bf16.msra.mxu0 %v492
      %499 = vmatprep.subr.bf16.mxu0 0
      %500 = vmatpush1.bf16.msra.mxu0 0
      %501 = vmatprep.subr.bf16.mxu0 0
      %502 = vmatpush1.bf16.msra.mxu0 0
      %503 = vmatprep.subr.bf16.mxu0 0
      %504 = vmatpush1.bf16.msra.mxu0 0
      %505 = vmatprep.subr.bf16.mxu0 0
      %506 = vmatpush1.bf16.msra.mxu0 0
      %507 = vmatprep.subr.bf16.mxu0 0
      %508 = vmatpush1.bf16.msra.mxu0 0
      %509 = vmatprep.subr.bf16.mxu0 0
      %510 = vmatpush1.bf16.msra.mxu0 0
      %511 = vmatprep.subr.bf16.mxu0 0
      %512 = vmatpush1.bf16.msra.mxu0 0
      %513 = vmatprep.subr.bf16.mxu0 0
      %514 = vmatpush1.bf16.msra.mxu0 0
      %515 = vmatprep.subr.bf16.mxu0 0
      %516 = vmatpush1.bf16.msra.mxu0 0
      %517 = vmatprep.subr.bf16.mxu0 0
      %518 = vmatpush1.bf16.msra.mxu0 0
      %519 = vmatprep.subr.bf16.mxu0 0
      %520 = vmatpush1.bf16.msra.mxu0 0
      %521 = vmatprep.subr.bf16.mxu0 0
      %522 = vmatpush1.bf16.msra.mxu0 0
      %523 = vmatprep.subr.bf16.mxu0 0
      %524 = vmatpush1.bf16.msra.mxu0 0
      %525 = vmatprep.subr.bf16.mxu0 0
      %526 = vmatpush1.bf16.msra.mxu0 0
      %527 = vmatprep.mubr.bf16.mxu0 0
      %528 = vmatmul.mubr.bf16.gmra.mrb[0].mxu0 %v383
      %v529 = vpop.f32.mrb[0].mxu0
      %v530 = vadd.f32 0.0, %v529
      %v531 = vpop.f32.mrb[0].mxu0
      %v532 = vpop.f32.mrb[0].mxu0
      %v533 = vadd.f32 0.0, %v532
      %v534 = vpop.f32.mrb[0].mxu0
      %535 = vmatprep.mubr.bf16.mxu0 0
      %536 = vmatmul.mubr.bf16.gmra.mrb[0].mxu0 %v386
      %v537 = vpop.f32.mrb[0].mxu0
      %v538 = vadd.f32 0.0, %v537
      %v539 = vpop.f32.mrb[0].mxu0
      %v540 = vpop.f32.mrb[0].mxu0
      %v541 = vadd.f32 0.0, %v540
      %v542 = vpop.f32.mrb[0].mxu0
      %543 = vmatprep.mubr.bf16.mxu0 0
      %544 = vmatmul.mubr.bf16.gmra.mrb[0].mxu0 %v389
      %v545 = vpop.f32.mrb[0].mxu0
      %v546 = vadd.f32 0.0, %v545
      %v547 = vpop.f32.mrb[0].mxu0
      %v548 = vpop.f32.mrb[0].mxu0
      %v549 = vadd.f32 0.0, %v548
      %v550 = vpop.f32.mrb[0].mxu0
      %551 = vmatprep.mubr.bf16.mxu0 0
      %552 = vmatmul.mubr.bf16.gmra.mrb[0].mxu0 %v392
      %v553 = vpop.f32.mrb[0].mxu0
      %v554 = vadd.f32 0.0, %v553
      %v555 = vpop.f32.mrb[0].mxu0
      %v556 = vpop.f32.mrb[0].mxu0
      %v557 = vadd.f32 0.0, %v556
      %v558 = vpop.f32.mrb[0].mxu0
      %559 = vmatprep.mubr.bf16.mxu0 0
      %560 = vmatmul.mubr.bf16.gmra.mrb[0].mxu0 %v395
      %v561 = vpop.f32.mrb[0].mxu0
      %v562 = vadd.f32 0.0, %v561
      %v563 = vpop.f32.mrb[0].mxu0
      %v564 = vpop.f32.mrb[0].mxu0
      %v565 = vadd.f32 0.0, %v564
      %v566 = vpop.f32.mrb[0].mxu0
      %567 = vmatprep.mubr.bf16.mxu0 0
      %568 = vmatmul.mubr.bf16.gmra.mrb[0].mxu0 %v398
      %v569 = vpop.f32.mrb[0].mxu0
      %v570 = vpop.f32.mrb[0].mxu0
      %v571 = vpop.f32.mrb[0].mxu0
      %v572 = vpop.f32.mrb[0].mxu0
      %573 = vdwg.mxu0
      %vm584 = vcmask 1046528
      %v585 = vrot.slane %v530, 1
      %v586 = vrot.slane %v533, 1
      %v587 = vsel %vm584, %v585, %v586
      %v588 = vrot.slane %v538, 1
      %v589 = vsel %vm584, %v586, %v588
      %v590 = vrot.slane %v541, 1
      %v591 = vsel %vm584, %v588, %v590
      %v592 = vrot.slane %v546, 1
      %v593 = vsel %vm584, %v590, %v592
      %v594 = vrot.slane %v549, 1
      %v595 = vsel %vm584, %v592, %v594
      %v596 = vrot.slane %v554, 1
      %v597 = vsel %vm584, %v594, %v596
      %v598 = vrot.slane %v557, 1
      %v599 = vsel %vm584, %v596, %v598
      %v600 = vrot.slane %v562, 1
      %v601 = vsel %vm584, %v598, %v600
      %v602 = vrot.slane %v565, 1
      %v603 = vsel %vm584, %v600, %v602
      %v613 = vadd.f32 %v435, %v587
      %v614 = vadd.f32 %v438, %v589
      %v615 = vadd.f32 %v443, %v591
      %v616 = vadd.f32 %v446, %v593
      %v617 = vadd.f32 %v451, %v595
      %v618 = vadd.f32 %v454, %v597
      %v619 = vadd.f32 %v459, %v599
      %v620 = vadd.f32 %v462, %v601
      %v621 = vadd.f32 %v467, %v603
      %s622 = scalar_lea.vmem %s1, 32
      %v623 = vld [vmem:[%s622] sm:$0xf]
      %v624 = vld [vmem:[%s622 + $0x4] sm:$0xf]
      %v625 = vld [vmem:[%s622 + $0x8] sm:$0xf]
      %v626 = vld [vmem:[%s622 + $0xc] sm:$0xf]
      %v631 = vunpack.c.l.b16 %v623
      %v632 = vunpack.c.l.b16 %v624
      %v633 = vunpack.c.l.b16 %v625
      %v634 = vunpack.c.l.b16 %v626
      %v635 = vpack.c.b16 %v632, %v631
      %v636 = vpack.c.b16 %v634, %v633
      %639 = vmatprep.subr.bf16.mxu0 0
      %640 = vmatpush1.bf16.msra.mxu0 %v635
      %641 = vmatprep.subr.bf16.mxu0 0
      %642 = vmatpush1.bf16.msra.mxu0 %v636
      %643 = vmatprep.subr.bf16.mxu0 0
      %644 = vmatpush1.bf16.msra.mxu0 0
      %645 = vmatprep.subr.bf16.mxu0 0
      %646 = vmatpush1.bf16.msra.mxu0 0
      %647 = vmatprep.subr.bf16.mxu0 0
      %648 = vmatpush1.bf16.msra.mxu0 0
      %649 = vmatprep.subr.bf16.mxu0 0
      %650 = vmatpush1.bf16.msra.mxu0 0
      %651 = vmatprep.subr.bf16.mxu0 0
      %652 = vmatpush1.bf16.msra.mxu0 0
      %653 = vmatprep.subr.bf16.mxu0 0
      %654 = vmatpush1.bf16.msra.mxu0 0
      %655 = vmatprep.subr.bf16.mxu0 0
      %656 = vmatpush1.bf16.msra.mxu0 0
      %657 = vmatprep.subr.bf16.mxu0 0
      %658 = vmatpush1.bf16.msra.mxu0 0
      %659 = vmatprep.subr.bf16.mxu0 0
      %660 = vmatpush1.bf16.msra.mxu0 0
      %661 = vmatprep.subr.bf16.mxu0 0
      %662 = vmatpush1.bf16.msra.mxu0 0
      %663 = vmatprep.subr.bf16.mxu0 0
      %664 = vmatpush1.bf16.msra.mxu0 0
      %665 = vmatprep.subr.bf16.mxu0 0
      %666 = vmatpush1.bf16.msra.mxu0 0
      %667 = vmatprep.subr.bf16.mxu0 0
      %668 = vmatpush1.bf16.msra.mxu0 0
      %669 = vmatprep.subr.bf16.mxu0 0
      %670 = vmatpush1.bf16.msra.mxu0 0
      %671 = vmatprep.mubr.bf16.mxu0 0
      %672 = vmatmul.mubr.bf16.gmra.mrb[0].mxu0 %v383
      %v673 = vpop.f32.mrb[0].mxu0
      %v674 = vpop.f32.mrb[0].mxu0
      %v675 = vpop.f32.mrb[0].mxu0
      %v676 = vadd.f32 0.0, %v675
      %v677 = vpop.f32.mrb[0].mxu0
      %678 = vmatprep.mubr.bf16.mxu0 0
      %679 = vmatmul.mubr.bf16.gmra.mrb[0].mxu0 %v386
      %v680 = vpop.f32.mrb[0].mxu0
      %v681 = vadd.f32 0.0, %v680
      %v682 = vpop.f32.mrb[0].mxu0
      %v683 = vpop.f32.mrb[0].mxu0
      %v684 = vadd.f32 0.0, %v683
      %v685 = vpop.f32.mrb[0].mxu0
      %686 = vmatprep.mubr.bf16.mxu0 0
      %687 = vmatmul.mubr.bf16.gmra.mrb[0].mxu0 %v389
      %v688 = vpop.f32.mrb[0].mxu0
      %v689 = vadd.f32 0.0, %v688
      %v690 = vpop.f32.mrb[0].mxu0
      %v691 = vpop.f32.mrb[0].mxu0
      %v692 = vadd.f32 0.0, %v691
      %v693 = vpop.f32.mrb[0].mxu0
      %694 = vmatprep.mubr.bf16.mxu0 0
      %695 = vmatmul.mubr.bf16.gmra.mrb[0].mxu0 %v392
      %v696 = vpop.f32.mrb[0].mxu0
      %v697 = vadd.f32 0.0, %v696
      %v698 = vpop.f32.mrb[0].mxu0
      %v699 = vpop.f32.mrb[0].mxu0
      %v700 = vadd.f32 0.0, %v699
      %v701 = vpop.f32.mrb[0].mxu0
      %702 = vmatprep.mubr.bf16.mxu0 0
      %703 = vmatmul.mubr.bf16.gmra.mrb[0].mxu0 %v395
      %v704 = vpop.f32.mrb[0].mxu0
      %v705 = vadd.f32 0.0, %v704
      %v706 = vpop.f32.mrb[0].mxu0
      %v707 = vpop.f32.mrb[0].mxu0
      %v708 = vadd.f32 0.0, %v707
      %v709 = vpop.f32.mrb[0].mxu0
      %710 = vmatprep.mubr.bf16.mxu0 0
      %711 = vmatmul.mubr.bf16.gmra.mrb[0].mxu0 %v398
      %v712 = vpop.f32.mrb[0].mxu0
      %v713 = vadd.f32 0.0, %v712
      %v714 = vpop.f32.mrb[0].mxu0
      %v715 = vpop.f32.mrb[0].mxu0
      %v716 = vpop.f32.mrb[0].mxu0
      %717 = vdwg.mxu0
      %v728 = vrot.slane %v676, 1
      %v729 = vrot.slane %v681, 1
      %v730 = vsel %vm584, %v728, %v729
      %v731 = vrot.slane %v684, 1
      %v732 = vsel %vm584, %v729, %v731
      %v733 = vrot.slane %v689, 1
      %v734 = vsel %vm584, %v731, %v733
      %v735 = vrot.slane %v692, 1
      %v736 = vsel %vm584, %v733, %v735
      %v737 = vrot.slane %v697, 1
      %v738 = vsel %vm584, %v735, %v737
      %v739 = vrot.slane %v700, 1
      %v740 = vsel %vm584, %v737, %v739
      %v741 = vrot.slane %v705, 1
      %v742 = vsel %vm584, %v739, %v741
      %v743 = vrot.slane %v708, 1
      %v744 = vsel %vm584, %v741, %v743
      %v745 = vrot.slane %v713, 1
      %v746 = vsel %vm584, %v743, %v745
      %v756 = vadd.f32 %v613, %v730
      %v757 = vadd.f32 %v614, %v732
      %v758 = vadd.f32 %v615, %v734
      %v759 = vadd.f32 %v616, %v736
      %v760 = vadd.f32 %v617, %v738
      %v761 = vadd.f32 %v618, %v740
      %v762 = vadd.f32 %v619, %v742
      %v763 = vadd.f32 %v620, %v744
      %v764 = vadd.f32 %v621, %v746
      %s765 = scalar_lea.vmem %s1, 48
      %v766 = vld [vmem:[%s765] sm:$0xf]
      %v767 = vld [vmem:[%s765 + $0x4] sm:$0xf]
      %v768 = vld [vmem:[%s765 + $0x8] sm:$0xf]
      %v769 = vld [vmem:[%s765 + $0xc] sm:$0xf]
      %v774 = vunpack.c.l.b16 %v766
      %v775 = vunpack.c.l.b16 %v767
      %v776 = vunpack.c.l.b16 %v768
      %v777 = vunpack.c.l.b16 %v769
      %v778 = vpack.c.b16 %v775, %v774
      %v779 = vpack.c.b16 %v777, %v776
      %782 = vmatprep.subr.bf16.mxu0 0
      %783 = vmatpush1.bf16.msra.mxu0 %v778
      %784 = vmatprep.subr.bf16.mxu0 0
      %785 = vmatpush1.bf16.msra.mxu0 %v779
      %786 = vmatprep.subr.bf16.mxu0 0
      %787 = vmatpush1.bf16.msra.mxu0 0
      %788 = vmatprep.subr.bf16.mxu0 0
      %789 = vmatpush1.bf16.msra.mxu0 0
      %790 = vmatprep.subr.bf16.mxu0 0
      %791 = vmatpush1.bf16.msra.mxu0 0
      %792 = vmatprep.subr.bf16.mxu0 0
      %793 = vmatpush1.bf16.msra.mxu0 0
      %794 = vmatprep.subr.bf16.mxu0 0
      %795 = vmatpush1.bf16.msra.mxu0 0
      %796 = vmatprep.subr.bf16.mxu0 0
      %797 = vmatpush1.bf16.msra.mxu0 0
      %798 = vmatprep.subr.bf16.mxu0 0
      %799 = vmatpush1.bf16.msra.mxu0 0
      %800 = vmatprep.subr.bf16.mxu0 0
      %801 = vmatpush1.bf16.msra.mxu0 0
      %802 = vmatprep.subr.bf16.mxu0 0
      %803 = vmatpush1.bf16.msra.mxu0 0
      %804 = vmatprep.subr.bf16.mxu0 0
      %805 = vmatpush1.bf16.msra.mxu0 0
      %806 = vmatprep.subr.bf16.mxu0 0
      %807 = vmatpush1.bf16.msra.mxu0 0
      %808 = vmatprep.subr.bf16.mxu0 0
      %809 = vmatpush1.bf16.msra.mxu0 0
      %810 = vmatprep.subr.bf16.mxu0 0
      %811 = vmatpush1.bf16.msra.mxu0 0
      %812 = vmatprep.subr.bf16.mxu0 0
      %813 = vmatpush1.bf16.msra.mxu0 0
      %814 = vmatprep.mubr.bf16.mxu0 0
      %815 = vmatmul.mubr.bf16.gmra.mrb[0].mxu0 %v383
      %v816 = vpop.f32.mrb[0].mxu0
      %v817 = vpop.f32.mrb[0].mxu0
      %v818 = vpop.f32.mrb[0].mxu0
      %v819 = vadd.f32 0.0, %v818
      %v820 = vpop.f32.mrb[0].mxu0
      %821 = vmatprep.mubr.bf16.mxu0 0
      %822 = vmatmul.mubr.bf16.gmra.mrb[0].mxu0 %v386
      %v823 = vpop.f32.mrb[0].mxu0
      %v824 = vadd.f32 0.0, %v823
      %v825 = vpop.f32.mrb[0].mxu0
      %v826 = vpop.f32.mrb[0].mxu0
      %v827 = vadd.f32 0.0, %v826
      %v828 = vpop.f32.mrb[0].mxu0
      %829 = vmatprep.mubr.bf16.mxu0 0
      %830 = vmatmul.mubr.bf16.gmra.mrb[0].mxu0 %v389
      %v831 = vpop.f32.mrb[0].mxu0
      %v832 = vadd.f32 0.0, %v831
      %v833 = vpop.f32.mrb[0].mxu0
      %v834 = vpop.f32.mrb[0].mxu0
      %v835 = vadd.f32 0.0, %v834
      %v836 = vpop.f32.mrb[0].mxu0
      %837 = vmatprep.mubr.bf16.mxu0 0
      %838 = vmatmul.mubr.bf16.gmra.mrb[0].mxu0 %v392
      %v839 = vpop.f32.mrb[0].mxu0
      %v840 = vadd.f32 0.0, %v839
      %v841 = vpop.f32.mrb[0].mxu0
      %v842 = vpop.f32.mrb[0].mxu0
      %v843 = vadd.f32 0.0, %v842
      %v844 = vpop.f32.mrb[0].mxu0
      %845 = vmatprep.mubr.bf16.mxu0 0
      %846 = vmatmul.mubr.bf16.gmra.mrb[0].mxu0 %v395
      %v847 = vpop.f32.mrb[0].mxu0
      %v848 = vadd.f32 0.0, %v847
      %v849 = vpop.f32.mrb[0].mxu0
      %v850 = vpop.f32.mrb[0].mxu0
      %v851 = vadd.f32 0.0, %v850
      %v852 = vpop.f32.mrb[0].mxu0
      %853 = vmatprep.mubr.bf16.mxu0 0
      %854 = vmatmul.mubr.bf16.gmra.mrb[0].mxu0 %v398
      %v855 = vpop.f32.mrb[0].mxu0
      %v856 = vadd.f32 0.0, %v855
      %v857 = vpop.f32.mrb[0].mxu0
      %v858 = vpop.f32.mrb[0].mxu0
      %v859 = vpop.f32.mrb[0].mxu0
      %860 = vdwg.mxu0
      %vm871 = vcmask 1045504
      %v872 = vrot.slane %v819, 2
      %v873 = vrot.slane %v824, 2
      %v874 = vsel %vm871, %v872, %v873
      %v875 = vrot.slane %v827, 2
      %v876 = vsel %vm871, %v873, %v875
      %v877 = vrot.slane %v832, 2
      %v878 = vsel %vm871, %v875, %v877
      %v879 = vrot.slane %v835, 2
      %v880 = vsel %vm871, %v877, %v879
      %v881 = vrot.slane %v840, 2
      %v882 = vsel %vm871, %v879, %v881
      %v883 = vrot.slane %v843, 2
      %v884 = vsel %vm871, %v881, %v883
      %v885 = vrot.slane %v848, 2
      %v886 = vsel %vm871, %v883, %v885
      %v887 = vrot.slane %v851, 2
      %v888 = vsel %vm871, %v885, %v887
      %v889 = vrot.slane %v856, 2
      %v890 = vsel %vm871, %v887, %v889
      %v900 = vadd.f32 %v756, %v874
      %v901 = vadd.f32 %v757, %v876
      %v902 = vadd.f32 %v758, %v878
      %v903 = vadd.f32 %v759, %v880
      %v904 = vadd.f32 %v760, %v882
      %v905 = vadd.f32 %v761, %v884
      %v906 = vadd.f32 %v762, %v886
      %v907 = vadd.f32 %v763, %v888
      %v908 = vadd.f32 %v764, %v890
      %v909 = vmul.f32 %v900, %v317
      %v910 = vmul.f32 %v901, %v318
      %v911 = vmul.f32 %v902, %v319
      %v912 = vmul.f32 %v903, %v320
      %v913 = vmul.f32 %v904, %v321
      %v914 = vmul.f32 %v905, %v322
      %v915 = vmul.f32 %v906, %v323
      %v916 = vmul.f32 %v907, %v324
      %v917 = vmul.f32 %v908, %v325
      %vm918 = vcmask 130048
      %v919 = vsel %vm918, %v909, 0.0
      %v920 = vsel %vm918, %v910, 0.0
      %v921 = vadd.f32 %v919, %v920
      %v922 = vsel %vm918, %v911, 0.0
      %v923 = vadd.f32 %v921, %v922
      %v924 = vsel %vm918, %v912, 0.0
      %v925 = vadd.f32 %v923, %v924
      %v926 = vsel %vm918, %v913, 0.0
      %v927 = vadd.f32 %v925, %v926
      %v928 = vsel %vm918, %v914, 0.0
      %v929 = vadd.f32 %v927, %v928
      %v930 = vsel %vm918, %v915, 0.0
      %v931 = vadd.f32 %v929, %v930
      %v932 = vsel %vm918, %v916, 0.0
      %v933 = vadd.f32 %v931, %v932
      %v934 = vsel %vm918, %v917, 0.0
      %v935 = vadd.f32 %v933, %v934
      %v936 = vrot.slane %v935, 4
      %v937 = vadd.f32 %v935, %v936
      %v938 = vrot.slane %v937, 2
      %v939 = vadd.f32 %v937, %v938
      %v940 = vrot.slane %v939, 1
      %v941 = vadd.f32 %v939, %v940
      %v942 = vmul.f32 %v941, 0.015625
      %v943 = vsub.f32 %v900, %v942
      %v944 = vsub.f32 %v901, %v942
      %v945 = vsub.f32 %v902, %v942
      %v946 = vsub.f32 %v903, %v942
      %v947 = vsub.f32 %v904, %v942
      %v948 = vsub.f32 %v905, %v942
      %v949 = vsub.f32 %v906, %v942
      %v950 = vsub.f32 %v907, %v942
      %v951 = vsub.f32 %v908, %v942
      %v952 = vmul.f32 %v943, %v943
      %v953 = vmul.f32 %v944, %v944
      %v954 = vmul.f32 %v945, %v945
      %v955 = vmul.f32 %v946, %v946
      %v956 = vmul.f32 %v947, %v947
      %v957 = vmul.f32 %v948, %v948
      %v958 = vmul.f32 %v949, %v949
      %v959 = vmul.f32 %v950, %v950
      %v960 = vmul.f32 %v951, %v951
      %v961 = vmul.f32 %v952, %v317
      %v962 = vmul.f32 %v953, %v318
      %v963 = vmul.f32 %v954, %v319
      %v964 = vmul.f32 %v955, %v320
      %v965 = vmul.f32 %v956, %v321
      %v966 = vmul.f32 %v957, %v322
      %v967 = vmul.f32 %v958, %v323
      %v968 = vmul.f32 %v959, %v324
      %v969 = vmul.f32 %v960, %v325
      %v970 = vsel %vm918, %v961, 0.0
      %v971 = vsel %vm918, %v962, 0.0
      %v972 = vadd.f32 %v970, %v971
      %v973 = vsel %vm918, %v963, 0.0
      %v974 = vadd.f32 %v972, %v973
      %v975 = vsel %vm918, %v964, 0.0
      %v976 = vadd.f32 %v974, %v975
      %v977 = vsel %vm918, %v965, 0.0
      %v978 = vadd.f32 %v976, %v977
      %v979 = vsel %vm918, %v966, 0.0
      %v980 = vadd.f32 %v978, %v979
      %v981 = vsel %vm918, %v967, 0.0
      %v982 = vadd.f32 %v980, %v981
      %v983 = vsel %vm918, %v968, 0.0
      %v984 = vadd.f32 %v982, %v983
      %v985 = vsel %vm918, %v969, 0.0
      %v986 = vadd.f32 %v984, %v985
      %v987 = vrot.slane %v986, 4
      %v988 = vadd.f32 %v986, %v987
      %v989 = vrot.slane %v988, 2
      %v990 = vadd.f32 %v988, %v989
      %v991 = vrot.slane %v990, 1
      %v992 = vadd.f32 %v990, %v991
      %v993 = vmul.f32 %v992, 0.015625
      %v994 = vadd.f32 %v993, 1e-05
      %v995 = vrsqrt.pop %v994
      %v996 = vmul.f32 %v943, %v995
      %v997 = vmul.f32 %v944, %v995
      %v998 = vmul.f32 %v945, %v995
      %v999 = vmul.f32 %v946, %v995
      %v1000 = vmul.f32 %v947, %v995
      %v1001 = vmul.f32 %v948, %v995
      %v1002 = vmul.f32 %v949, %v995
      %v1003 = vmul.f32 %v950, %v995
      %v1004 = vmul.f32 %v951, %v995
      %vm1005 = vcmp.ge.f32.partialorder %v996, 0.0
      %vm1006 = vcmp.ge.f32.partialorder %v997, 0.0
      %vm1007 = vcmp.ge.f32.partialorder %v998, 0.0
      %vm1008 = vcmp.ge.f32.partialorder %v999, 0.0
      %vm1009 = vcmp.ge.f32.partialorder %v1000, 0.0
      %vm1010 = vcmp.ge.f32.partialorder %v1001, 0.0
      %vm1011 = vcmp.ge.f32.partialorder %v1002, 0.0
      %vm1012 = vcmp.ge.f32.partialorder %v1003, 0.0
      %vm1013 = vcmp.ge.f32.partialorder %v1004, 0.0
      %v1014 = vmul.f32 %v996, 0.01
      %v1015 = vmul.f32 %v997, 0.01
      %v1016 = vmul.f32 %v998, 0.01
      %v1017 = vmul.f32 %v999, 0.01
      %v1018 = vmul.f32 %v1000, 0.01
      %v1019 = vmul.f32 %v1001, 0.01
      %v1020 = vmul.f32 %v1002, 0.01
      %v1021 = vmul.f32 %v1003, 0.01
      %v1022 = vmul.f32 %v1004, 0.01
      %v1023 = vsel %vm1005, %v996, %v1014
      %v1024 = vsel %vm1006, %v997, %v1015
      %v1025 = vsel %vm1007, %v998, %v1016
      %v1026 = vsel %vm1008, %v999, %v1017
      %v1027 = vsel %vm1009, %v1000, %v1018
      %v1028 = vsel %vm1010, %v1001, %v1019
      %v1029 = vsel %vm1011, %v1002, %v1020
      %v1030 = vsel %vm1012, %v1003, %v1021
      %v1031 = vsel %vm1013, %v1004, %v1022
      %v1032 = vpack.c.bf16 %v1024, %v1023
      %v1033 = vpack.c.bf16 %v1026, %v1025
      %v1034 = vpack.c.bf16 %v1028, %v1027
      %v1035 = vpack.c.bf16 %v1030, %v1029
      %v1036 = vpack.c.bf16 %v1031, %v1031
      %v1042 = vunpack.c.l.b16 %v1032
      %v1043 = vunpack.c.h.b16 %v1032
      %v1044 = vunpack.c.l.b16 %v1033
      %v1045 = vunpack.c.h.b16 %v1033
      %v1046 = vunpack.c.l.b16 %v1034
      %v1047 = vunpack.c.h.b16 %v1034
      %v1048 = vunpack.c.l.b16 %v1035
      %v1049 = vunpack.c.h.b16 %v1035
      %v1050 = vunpack.c.l.b16 %v1036
      %v1051 = vpack.c.b16 %v1042, %v1042
      %v1052 = vpack.c.b16 %v1043, %v1043
      %v1053 = vpack.c.b16 %v1044, %v1044
      %v1054 = vpack.c.b16 %v1045, %v1045
      %v1055 = vpack.c.b16 %v1046, %v1046
      %v1056 = vpack.c.b16 %v1047, %v1047
      %v1057 = vpack.c.b16 %v1048, %v1048
      %v1058 = vpack.c.b16 %v1049, %v1049
      %v1059 = vpack.c.b16 %v1050, %v1050
      %vm1069 = vcmask 125952
      %1070 = vst.msk [vmem:[%s143] sm:$0xf] %vm1069, %v1051
      %1071 = vst.msk [vmem:[%s143 + $0x4] sm:$0xf] %vm1069, %v1052
      %1072 = vst.msk [vmem:[%s143 + $0x8] sm:$0xf] %vm1069, %v1053
      %1073 = vst.msk [vmem:[%s143 + $0xc] sm:$0xf] %vm1069, %v1054
      %1074 = vst.msk [vmem:[%s143 + $0x10] sm:$0xf] %vm1069, %v1055
      %1075 = vst.msk [vmem:[%s143 + $0x14] sm:$0xf] %vm1069, %v1056
      %1076 = vst.msk [vmem:[%s143 + $0x18] sm:$0xf] %vm1069, %v1057
      %1077 = vst.msk [vmem:[%s143 + $0x1c] sm:$0xf] %vm1069, %v1058
      %1078 = vst.msk [vmem:[%s143 + $0x20] sm:$0xf] %vm1069, %v1059
      %p1079 = scmp.lt.s32.totalorder %s13, 1
      %s1080 = scalar_select %p1079, %s13, 1
      %s1081 = smul.addr %s1080, 9
      %s1082 = smul.addr %s1081, 4
      %s1083 = scalar_lea.vmem %s2, %s1082
      // Predicated region
      $region29: #{netD_forward.5} parent=27 // pred_check
        %p1084 = pneg %p78
      $region30: #{netD_forward.5} parent=27 // pred_check_branch
        %1086 = sbr.rel (%p1084) target = $region32
      $region31: #{netD_forward.5} parent=27 // pred_region
        _
      $region32: #{netD_forward.5} parent=27 // pred_fallthru
        _
    $region28: #{netD_forward.5} parent=5 // pred_fallthru
      _
    %p1087 = scmp.le.s32.totalorder 2, %s8
    // Predicated region
    $region33: #{netD_forward.5} parent=5 // pred_check
      %p1088 = pneg %p1087
    $region34: #{netD_forward.5} parent=5 // pred_check_branch
      %1090 = sbr.rel (%p1088) target = $region36
    $region35: #{netD_forward.5} parent=5 // pred_region
      %s1091 = ssub.s32 %s8, 2
      // Predicated region
      $region37: #{netD_forward.5} parent=35 // pred_check
        %p1092 = pneg %p84
      $region38: #{netD_forward.5} parent=35 // pred_check_branch
        %1094 = sbr.rel (%p1092) target = $region40
      $region39: #{netD_forward.5} parent=35 // pred_region
        %p1095 = scmp.lt.s32.totalorder %s14, 1
        %s1096 = scalar_select %p1095, %s14, 1
        %s1097 = smul.addr %s1096, 9
        %s1098 = smul.addr %s1097, 4
        %s1099 = scalar_lea.vmem %s2, %s1098
      $region40: #{netD_forward.5} parent=35 // pred_fallthru
        _
    $region36: #{netD_forward.5} parent=5 // pred_fallthru
      _
  $region6: #{netD_forward.5} parent=0 // loop_footer
    %s12 = sadd.s32 1, %s8
  $region7: #{netD_forward.5} parent=0 // loop_footer_branch
    %7 = sbr.rel target = $region3
  $region8: #{netD_forward.5} parent=0 // loop_exit
    _

// kernel: netD_forward.6
$region0: #{netD_forward.6}
  #allocation0 [shape = 'u32[]', space=smem, size = 0x4, offset = 0x4, fixed_abs, tag = 'smem constant byte address 0x4 - core index']
  #allocation1 [shape = 'u32[144,128]{1,0:T(1,128)}', space=vmem, size = 0x12000, scoped, tag = 'internal scratch']
  %s0 = inlined_call_operand.vmem [shape: bf16[2,32,64], index: 0, kind: input, shape index: {}]
  %s1 = inlined_call_operand.vmem [shape: bf16[4,64,32], index: 1, kind: input, shape index: {}]
  %s2 = inlined_call_operand.vmem [shape: bf16[2,20,32], index: 2, kind: output, shape index: {}]
  %s3 = sld [smem:[#allocation0]]
  $region41: #{netD_forward.6} parent=0
    _
  %s5 = ssub.s32 1, %s3
  %s6 = scalar_select 0, %s5, %s3
  loop: start=0, step=1, limit=4
  $region2: #{netD_forward.6} parent=0 // loop_pre_header
    _
  $region3: #{netD_forward.6} parent=0 // loop_header
    %s8 = sphi 0, %s12
    %p9 = scmp.ge.s32.totalorder %s8, 4
    %s18 = sphi 0, %s20
    %s21 = sphi 0, %s18
    %s22 = sphi 0, %s21
    %s38 = sphi 0, %s22
    %s42 = sphi 0, %s42
    %s44 = sphi 0, %s42
    %s45 = sphi 0, %s44
    %s59 = sphi 0, %s45
    %s65 = sphi 0, %s67
    %s68 = sphi 0, %s65
    %s69 = sphi 0, %s68
    %s85 = sphi 0, %s69
  $region4: #{netD_forward.6} parent=0 // loop_header_branch
    %11 = sbr.rel (%p9) target = $region8
  $region5: #{netD_forward.6} parent=0 // loop_body
    %s13 = ssub.s32 %s8, 1
    %s14 = ssub.s32 %s8, 2
    %s15 = sadd.s32 %s8, 1
    %s16 = ssub.s32 %s8, %s15
    %p17 = scmp.eq.s32.totalorder %s16, 0
    %s19 = sadd.s32 %s18, 1
    %s20 = scalar_select %p17, %s18, %s19
    %p23 = pneg %p17
    %p24 = scmp.eq.s32.totalorder %s8, 1
    %p25 = por %p23, %p24
    %p26 = scmp.ne.s32.totalorder %s18, %s21
    %p27 = scmp.eq.s32.totalorder %s8, 0
    %p28 = por %p26, %p27
    %p29 = scmp.ne.s32.totalorder %s18, %s21
    %p30 = scmp.eq.s32.totalorder %s13, 1
    %p31 = por %p29, %p30
    %p32 = scmp.ne.s32.totalorder %s21, %s22
    %p33 = scmp.eq.s32.totalorder %s13, 0
    %p34 = por %p32, %p33
    %p35 = scmp.ne.s32.totalorder %s21, %s22
    %p36 = scmp.eq.s32.totalorder %s14, 1
    %p37 = por %p35, %p36
    %p39 = scmp.ne.s32.totalorder %s22, %s38
    %p40 = scmp.eq.s32.totalorder %s14, 0
    %p41 = por %p39, %p40
    %s43 = sadd.s32 %s42, 1
    %p46 = scmp.eq.s32.totalorder %s8, 1
    %p47 = scmp.ne.s32.totalorder %s42, %s44
    %p48 = scmp.eq.s32.totalorder %s8, 0
    %p49 = por %p47, %p48
    %p50 = scmp.ne.s32.totalorder %s42, %s44
    %p51 = scmp.eq.s32.totalorder %s13, 1
    %p52 = por %p50, %p51
    %p53 = scmp.ne.s32.totalorder %s44, %s45
    %p54 = scmp.eq.s32.totalorder %s13, 0
    %p55 = por %p53, %p54
    %p56 = scmp.ne.s32.totalorder %s44, %s45
    %p57 = scmp.eq.s32.totalorder %s14, 1
    %p58 = por %p56, %p57
    %p60 = scmp.ne.s32.totalorder %s45, %s59
    %p61 = scmp.eq.s32.totalorder %s14, 0
    %p62 = por %p60, %p61
    %s63 = ssub.s32 %s8, %s15
    %p64 = scmp.eq.s32.totalorder %s63, 0
    %s66 = sadd.s32 %s65, 1
    %s67 = scalar_select %p64, %s65, %s66
    %p70 = pneg %p64
    %p71 = scmp.eq.s32.totalorder %s8, 1
    %p72 = por %p70, %p71
    %p73 = scmp.ne.s32.totalorder %s65, %s68
    %p74 = scmp.eq.s32.totalorder %s8, 0
    %p75 = por %p73, %p74
    %p76 = scmp.ne.s32.totalorder %s65, %s68
    %p77 = scmp.eq.s32.totalorder %s13, 1
    %p78 = por %p76, %p77
    %p79 = scmp.ne.s32.totalorder %s68, %s69
    %p80 = scmp.eq.s32.totalorder %s13, 0
    %p81 = por %p79, %p80
    %p82 = scmp.ne.s32.totalorder %s68, %s69
    %p83 = scmp.eq.s32.totalorder %s14, 1
    %p84 = por %p82, %p83
    %p86 = scmp.ne.s32.totalorder %s69, %s85
    %p87 = scmp.eq.s32.totalorder %s14, 0
    %p88 = por %p86, %p87
    %p89 = scmp.le.s32.totalorder 1, %s8
    %p90 = scmp.lt.s32.totalorder %s8, 3
    %p91 = pnand %p89, %p90
    %p92 = pneg %p91
    // Predicated region
    $region9: #{netD_forward.6} parent=5 // pred_check
      _
    $region10: #{netD_forward.6} parent=5 // pred_check_branch
      %94 = sbr.rel (%p91) target = $region12
    $region11: #{netD_forward.6} parent=5 // pred_region
      %s95 = ssub.s32 %s8, 1
      // Predicated region
      $region13: #{netD_forward.6} parent=11 // pred_check
        %p96 = pneg %p55
      $region14: #{netD_forward.6} parent=11 // pred_check_branch
        %98 = sbr.rel (%p96) target = $region16
      $region15: #{netD_forward.6} parent=11 // pred_region
        _
      $region16: #{netD_forward.6} parent=11 // pred_fallthru
        _
    $region12: #{netD_forward.6} parent=5 // pred_fallthru
      _
    %p99 = scmp.lt.s32.totalorder %s8, 2
    // Predicated region
    $region17: #{netD_forward.6} parent=5 // pred_check
      %p100 = pneg %p99
    $region18: #{netD_forward.6} parent=5 // pred_check_branch
      %102 = sbr.rel (%p100) target = $region20
    $region19: #{netD_forward.6} parent=5 // pred_region
      // Predicated region
      $region21: #{netD_forward.6} parent=19 // pred_check
        %p103 = pneg %p28
      $region22: #{netD_forward.6} parent=19 // pred_check_branch
        %105 = sbr.rel (%p103) target = $region24
      $region23: #{netD_forward.6} parent=19 // pred_region
        %p106 = scmp.lt.s32.totalorder %s8, 1
        %s107 = scalar_select %p106, %s8, 1
        %s108 = smul.addr %s107, 4
        %s109 = smul.addr %s108, 4
        %s110 = scalar_lea.vmem %s0, %s109
      $region24: #{netD_forward.6} parent=19 // pred_fallthru
        _
    $region20: #{netD_forward.6} parent=5 // pred_fallthru
      _
    %p111 = scmp.le.s32.totalorder 1, %s8
    %p112 = scmp.lt.s32.totalorder %s8, 3
    %p113 = pnand %p111, %p112
    %p114 = pneg %p113
    // Predicated region
    $region25: #{netD_forward.6} parent=5 // pred_check
      _
    $region26: #{netD_forward.6} parent=5 // pred_check_branch
      %116 = sbr.rel (%p113) target = $region28
    $region27: #{netD_forward.6} parent=5 // pred_region
      %s117 = ssub.s32 %s8, 1
      %p118 = scmp.lt.s32.totalorder %s13, 1
      %s119 = scalar_select %p118, %s13, 1
      %s120 = smul.addr %s119, 4
      %s121 = smul.addr %s120, 4
      %s122 = scalar_lea.vmem %s0, %s121
      %p123 = pneg %p34
      %p124 = pneg %p31
      %p125 = pneg %p55
      %p126 = pneg %p52
      %p127 = pneg %p81
      %p128 = pneg %p78
      %p129 = scmp.lt.s32.totalorder %s13, 1
      %s130 = scalar_select %p129, %s13, 1
      %s131 = smul.addr %s130, 3
      %s132 = smul.addr %s131, 4
      %s133 = scalar_lea.vmem %s2, %s132
      %p134 = scmp.lt.s32.totalorder %s13, 1
      %s135 = scalar_select %p134, %s13, 1
      %s136 = smul.addr %s135, 4
      %s137 = smul.addr %s136, 4
      %s138 = scalar_lea.vmem %s0, %s137
      %p139 = scmp.lt.s32.totalorder %s13, 1
      %s140 = scalar_select %p139, %s13, 1
      %s141 = smul.addr %s140, 3
      %s142 = smul.addr %s141, 4
      %s143 = scalar_lea.vmem %s2, %s142
      %v145 = vlaneseq
      %v146 = vshrl.u32 %v145, 7
      %v147 = vadd.s32 %v146, 8
      %v148 = vadd.s32 %v146, 16
      %vm149 = vcmp.lt.s32.totalorder %v146, 0
      %v150 = vsub.s32 0, %v146
      %v151 = vsel %vm149, %v150, %v146
      %v152 = vmul.u32.u64.compose %v151, 3435973837
      %v153 = vextract.low.u32 %v152
      %v154 = vextract.high.u32 %v152
      %v155 = vshrl.u32 %v154, 2
      %v156 = vmul.u32 %v155, 5
      %v157 = vsub.s32 %v151, %v156
      %v158 = vsub.s32 0, %v157
      %v159 = vsel %vm149, %v158, %v157
      %vm160 = vcmp.lt.s32.totalorder %v147, 0
      %v161 = vsub.s32 0, %v147
      %v162 = vsel %vm160, %v161, %v147
      %v163 = vmul.u32.u64.compose %v162, 3435973837
      %v164 = vextract.low.u32 %v163
      %v165 = vextract.high.u32 %v163
      %v166 = vshrl.u32 %v165, 2
      %v167 = vmul.u32 %v166, 5
      %v168 = vsub.s32 %v162, %v167
      %v169 = vsub.s32 0, %v168
      %v170 = vsel %vm160, %v169, %v168
      %vm171 = vcmp.lt.s32.totalorder %v148, 0
      %v172 = vsub.s32 0, %v148
      %v173 = vsel %vm171, %v172, %v148
      %v174 = vmul.u32.u64.compose %v173, 3435973837
      %v175 = vextract.low.u32 %v174
      %v176 = vextract.high.u32 %v174
      %v177 = vshrl.u32 %v176, 2
      %v178 = vmul.u32 %v177, 5
      %v179 = vsub.s32 %v173, %v178
      %v180 = vsub.s32 0, %v179
      %v181 = vsel %vm171, %v180, %v179
      %vm182 = vcmp.ne.s32.totalorder %v159, 0
      %vm183 = vcmp.ne.s32.totalorder %v170, 0
      %vm184 = vcmp.ne.s32.totalorder %v181, 0
      %vm185 = vcmp.lt.s32.totalorder %v159, 0
      %vm186 = vcmp.lt.s32.totalorder %v170, 0
      %vm187 = vcmp.lt.s32.totalorder %v181, 0
      %vm188 = vmand %vm185, %vm182
      %vm189 = vmand %vm186, %vm183
      %vm190 = vmand %vm187, %vm184
      %v191 = vadd.s32 %v159, 5
      %v192 = vadd.s32 %v170, 5
      %v193 = vadd.s32 %v181, 5
      %v194 = vsel %vm188, %v191, %v159
      %v195 = vsel %vm189, %v192, %v170
      %v196 = vsel %vm190, %v193, %v181
      %vm197 = vcmp.ne.s32.totalorder %v194, 4
      %vm198 = vcmp.ne.s32.totalorder %v195, 4
      %vm199 = vcmp.ne.s32.totalorder %v196, 4
      %v200 = vsel %vm197, 1, 0
      %v201 = vsel %vm198, 1, 0
      %v202 = vsel %vm199, 1, 0
      %v203 = vcvt.s32.f32 %v200
      %v204 = vcvt.s32.f32 %v201
      %v205 = vcvt.s32.f32 %v202
      %v206 = vld [vmem:[%s138] sm:$0xf]
      %v207 = vld [vmem:[%s138 + $0x4] sm:$0xf]
      %v208 = vld [vmem:[%s138 + $0x8] sm:$0xf]
      %v209 = vld [vmem:[%s138 + $0xc] sm:$0xf]
      %v210 = vld [vmem:[%s1] sm:$0xf]
      %v211 = vld [vmem:[%s1 + $0x4] sm:$0xf]
      %v212 = vld [vmem:[%s1 + $0x8] sm:$0xf]
      %v213 = vld [vmem:[%s1 + $0xc] sm:$0xf]
      %v214 = vld [vmem:[%s1 + $0x10] sm:$0xf]
      %v215 = vld [vmem:[%s1 + $0x14] sm:$0xf]
      %v216 = vld [vmem:[%s1 + $0x18] sm:$0xf]
      %v217 = vld [vmem:[%s1 + $0x1c] sm:$0xf]
      %v222 = vunpack.c.l.b16 %v206
      %v223 = vunpack.c.l.b16 %v207
      %v224 = vunpack.c.l.b16 %v208
      %v225 = vunpack.c.l.b16 %v209
      %v226 = vpack.c.b16 %v223, %v222
      %v227 = vpack.c.b16 %v225, %v224
      %v236 = vunpack.c.l.b16 %v210
      %v237 = vunpack.c.l.b16 %v211
      %v238 = vunpack.c.l.b16 %v212
      %v239 = vunpack.c.l.b16 %v213
      %v240 = vunpack.c.l.b16 %v214
      %v241 = vunpack.c.l.b16 %v215
      %v242 = vunpack.c.l.b16 %v216
      %v243 = vunpack.c.l.b16 %v217
      %v244 = vpack.c.b16 %v237, %v236
      %v245 = vpack.c.b16 %v239, %v238
      %v246 = vpack.c.b16 %v241, %v240
      %v247 = vpack.c.b16 %v243, %v242
      %vm252 = vcmask 523264
      %v254 = vsel %vm252, %v226, 0
      %v257 = vsel %vm252, %v227, 0
      %259 = vmatprep.subr.bf16.mxu0 0
      %260 = vmatpush1.bf16.msra.mxu0 %v244
      %261 = vmatprep.subr.bf16.mxu0 0
      %262 = vmatpush1.bf16.msra.mxu0 %v245
      %263 = vmatprep.subr.bf16.mxu0 0
      %264 = vmatpush1.bf16.msra.mxu0 %v246
      %265 = vmatprep.subr.bf16.mxu0 0
      %266 = vmatpush1.bf16.msra.mxu0 %v247
      %267 = vmatprep.subr.bf16.mxu0 0
      %268 = vmatpush1.bf16.msra.mxu0 0
      %269 = vmatprep.subr.bf16.mxu0 0
      %270 = vmatpush1.bf16.msra.mxu0 0
      %271 = vmatprep.subr.bf16.mxu0 0
      %272 = vmatpush1.bf16.msra.mxu0 0
      %273 = vmatprep.subr.bf16.mxu0 0
      %274 = vmatpush1.bf16.msra.mxu0 0
      %275 = vmatprep.subr.bf16.mxu0 0
      %276 = vmatpush1.bf16.msra.mxu0 0
      %277 = vmatprep.subr.bf16.mxu0 0
      %278 = vmatpush1.bf16.msra.mxu0 0
      %279 = vmatprep.subr.bf16.mxu0 0
      %280 = vmatpush1.bf16.msra.mxu0 0
      %281 = vmatprep.subr.bf16.mxu0 0
      %282 = vmatpush1.bf16.msra.mxu0 0
      %283 = vmatprep.subr.bf16.mxu0 0
      %284 = vmatpush1.bf16.msra.mxu0 0
      %285 = vmatprep.subr.bf16.mxu0 0
      %286 = vmatpush1.bf16.msra.mxu0 0
      %287 = vmatprep.subr.bf16.mxu0 0
      %288 = vmatpush1.bf16.msra.mxu0 0
      %289 = vmatprep.subr.bf16.mxu0 0
      %290 = vmatpush1.bf16.msra.mxu0 0
      %291 = vmatprep.mubr.bf16.mxu0 0
      %292 = vmatmul.mubr.bf16.gmra.mrb[0].mxu0 %v254
      %v293 = vpop.f32.mrb[0].mxu0
      %v294 = vadd.f32 0.0, %v293
      %v295 = vpop.f32.mrb[0].mxu0
      %v296 = vpop.f32.mrb[0].mxu0
      %v297 = vadd.f32 0.0, %v296
      %v298 = vpop.f32.mrb[0].mxu0
      %299 = vmatprep.mubr.bf16.mxu0 0
      %300 = vmatmul.mubr.bf16.gmra.mrb[0].mxu0 %v257
      %v301 = vpop.f32.mrb[0].mxu0
      %v302 = vadd.f32 0.0, %v301
      %v303 = vpop.f32.mrb[0].mxu0
      %v304 = vpop.f32.mrb[0].mxu0
      %v305 = vpop.f32.mrb[0].mxu0
      %306 = vdwg.mxu0
      %s307 = scalar_lea.vmem %s1, 32
      %v308 = vld [vmem:[%s307] sm:$0xf]
      %v309 = vld [vmem:[%s307 + $0x4] sm:$0xf]
      %v310 = vld [vmem:[%s307 + $0x8] sm:$0xf]
      %v311 = vld [vmem:[%s307 + $0xc] sm:$0xf]
      %v312 = vld [vmem:[%s307 + $0x10] sm:$0xf]
      %v313 = vld [vmem:[%s307 + $0x14] sm:$0xf]
      %v314 = vld [vmem:[%s307 + $0x18] sm:$0xf]
      %v315 = vld [vmem:[%s307 + $0x1c] sm:$0xf]
      %v324 = vunpack.c.l.b16 %v308
      %v325 = vunpack.c.l.b16 %v309
      %v326 = vunpack.c.l.b16 %v310
      %v327 = vunpack.c.l.b16 %v311
      %v328 = vunpack.c.l.b16 %v312
      %v329 = vunpack.c.l.b16 %v313
      %v330 = vunpack.c.l.b16 %v314
      %v331 = vunpack.c.l.b16 %v315
      %v332 = vpack.c.b16 %v325, %v324
      %v333 = vpack.c.b16 %v327, %v326
      %v334 = vpack.c.b16 %v329, %v328
      %v335 = vpack.c.b16 %v331, %v330
      %340 = vmatprep.subr.bf16.mxu0 0
      %341 = vmatpush1.bf16.msra.mxu0 %v332
      %342 = vmatprep.subr.bf16.mxu0 0
      %343 = vmatpush1.bf16.msra.mxu0 %v333
      %344 = vmatprep.subr.bf16.mxu0 0
      %345 = vmatpush1.bf16.msra.mxu0 %v334
      %346 = vmatprep.subr.bf16.mxu0 0
      %347 = vmatpush1.bf16.msra.mxu0 %v335
      %348 = vmatprep.subr.bf16.mxu0 0
      %349 = vmatpush1.bf16.msra.mxu0 0
      %350 = vmatprep.subr.bf16.mxu0 0
      %351 = vmatpush1.bf16.msra.mxu0 0
      %352 = vmatprep.subr.bf16.mxu0 0
      %353 = vmatpush1.bf16.msra.mxu0 0
      %354 = vmatprep.subr.bf16.mxu0 0
      %355 = vmatpush1.bf16.msra.mxu0 0
      %356 = vmatprep.subr.bf16.mxu0 0
      %357 = vmatpush1.bf16.msra.mxu0 0
      %358 = vmatprep.subr.bf16.mxu0 0
      %359 = vmatpush1.bf16.msra.mxu0 0
      %360 = vmatprep.subr.bf16.mxu0 0
      %361 = vmatpush1.bf16.msra.mxu0 0
      %362 = vmatprep.subr.bf16.mxu0 0
      %363 = vmatpush1.bf16.msra.mxu0 0
      %364 = vmatprep.subr.bf16.mxu0 0
      %365 = vmatpush1.bf16.msra.mxu0 0
      %366 = vmatprep.subr.bf16.mxu0 0
      %367 = vmatpush1.bf16.msra.mxu0 0
      %368 = vmatprep.subr.bf16.mxu0 0
      %369 = vmatpush1.bf16.msra.mxu0 0
      %370 = vmatprep.subr.bf16.mxu0 0
      %371 = vmatpush1.bf16.msra.mxu0 0
      %372 = vmatprep.mubr.bf16.mxu0 0
      %373 = vmatmul.mubr.bf16.gmra.mrb[0].mxu0 %v254
      %v374 = vpop.f32.mrb[0].mxu0
      %v375 = vadd.f32 0.0, %v374
      %v376 = vpop.f32.mrb[0].mxu0
      %v377 = vpop.f32.mrb[0].mxu0
      %v378 = vadd.f32 0.0, %v377
      %v379 = vpop.f32.mrb[0].mxu0
      %380 = vmatprep.mubr.bf16.mxu0 0
      %381 = vmatmul.mubr.bf16.gmra.mrb[0].mxu0 %v257
      %v382 = vpop.f32.mrb[0].mxu0
      %v383 = vadd.f32 0.0, %v382
      %v384 = vpop.f32.mrb[0].mxu0
      %v385 = vpop.f32.mrb[0].mxu0
      %v386 = vpop.f32.mrb[0].mxu0
      %387 = vdwg.mxu0
      %vm391 = vcmask 1046528
      %v392 = vrot.slane %v375, 1
      %v393 = vrot.slane %v378, 1
      %v394 = vsel %vm391, %v392, %v393
      %v395 = vrot.slane %v383, 1
      %v396 = vsel %vm391, %v393, %v395
      %v400 = vadd.f32 %v294, %v394
      %v401 = vadd.f32 %v297, %v396
      %v402 = vadd.f32 %v302, %v395
      %s403 = scalar_lea.vmem %s1, 64
      %v404 = vld [vmem:[%s403] sm:$0xf]
      %v405 = vld [vmem:[%s403 + $0x4] sm:$0xf]
      %v406 = vld [vmem:[%s403 + $0x8] sm:$0xf]
      %v407 = vld [vmem:[%s403 + $0xc] sm:$0xf]
      %v408 = vld [vmem:[%s403 + $0x10] sm:$0xf]
      %v409 = vld [vmem:[%s403 + $0x14] sm:$0xf]
      %v410 = vld [vmem:[%s403 + $0x18] sm:$0xf]
      %v411 = vld [vmem:[%s403 + $0x1c] sm:$0xf]
      %v420 = vunpack.c.l.b16 %v404
      %v421 = vunpack.c.l.b16 %v405
      %v422 = vunpack.c.l.b16 %v406
      %v423 = vunpack.c.l.b16 %v407
      %v424 = vunpack.c.l.b16 %v408
      %v425 = vunpack.c.l.b16 %v409
      %v426 = vunpack.c.l.b16 %v410
      %v427 = vunpack.c.l.b16 %v411
      %v428 = vpack.c.b16 %v421, %v420
      %v429 = vpack.c.b16 %v423, %v422
      %v430 = vpack.c.b16 %v425, %v424
      %v431 = vpack.c.b16 %v427, %v426
      %436 = vmatprep.subr.bf16.mxu0 0
      %437 = vmatpush1.bf16.msra.mxu0 %v428
      %438 = vmatprep.subr.bf16.mxu0 0
      %439 = vmatpush1.bf16.msra.mxu0 %v429
      %440 = vmatprep.subr.bf16.mxu0 0
      %441 = vmatpush1.bf16.msra.mxu0 %v430
      %442 = vmatprep.subr.bf16.mxu0 0
      %443 = vmatpush1.bf16.msra.mxu0 %v431
      %444 = vmatprep.subr.bf16.mxu0 0
      %445 = vmatpush1.bf16.msra.mxu0 0
      %446 = vmatprep.subr.bf16.mxu0 0
      %447 = vmatpush1.bf16.msra.mxu0 0
      %448 = vmatprep.subr.bf16.mxu0 0
      %449 = vmatpush1.bf16.msra.mxu0 0
      %450 = vmatprep.subr.bf16.mxu0 0
      %451 = vmatpush1.bf16.msra.mxu0 0
      %452 = vmatprep.subr.bf16.mxu0 0
      %453 = vmatpush1.bf16.msra.mxu0 0
      %454 = vmatprep.subr.bf16.mxu0 0
      %455 = vmatpush1.bf16.msra.mxu0 0
      %456 = vmatprep.subr.bf16.mxu0 0
      %457 = vmatpush1.bf16.msra.mxu0 0
      %458 = vmatprep.subr.bf16.mxu0 0
      %459 = vmatpush1.bf16.msra.mxu0 0
      %460 = vmatprep.subr.bf16.mxu0 0
      %461 = vmatpush1.bf16.msra.mxu0 0
      %462 = vmatprep.subr.bf16.mxu0 0
      %463 = vmatpush1.bf16.msra.mxu0 0
      %464 = vmatprep.subr.bf16.mxu0 0
      %465 = vmatpush1.bf16.msra.mxu0 0
      %466 = vmatprep.subr.bf16.mxu0 0
      %467 = vmatpush1.bf16.msra.mxu0 0
      %468 = vmatprep.mubr.bf16.mxu0 0
      %469 = vmatmul.mubr.bf16.gmra.mrb[0].mxu0 %v254
      %v470 = vpop.f32.mrb[0].mxu0
      %v471 = vadd.f32 0.0, %v470
      %v472 = vpop.f32.mrb[0].mxu0
      %v473 = vpop.f32.mrb[0].mxu0
      %v474 = vadd.f32 0.0, %v473
      %v475 = vpop.f32.mrb[0].mxu0
      %476 = vmatprep.mubr.bf16.mxu0 0
      %477 = vmatmul.mubr.bf16.gmra.mrb[0].mxu0 %v257
      %v478 = vpop.f32.mrb[0].mxu0
      %v479 = vadd.f32 0.0, %v478
      %v480 = vpop.f32.mrb[0].mxu0
      %v481 = vpop.f32.mrb[0].mxu0
      %v482 = vadd.f32 0.0, %v481
      %v483 = vpop.f32.mrb[0].mxu0
      %484 = vdwg.mxu0
      %vm489 = vcmask 1042432
      %v490 = vrot.slane %v471, 5
      %v491 = vrot.slane %v474, 5
      %v492 = vsel %vm489, %v490, %v491
      %v493 = vrot.slane %v479, 5
      %v494 = vsel %vm489, %v491, %v493
      %v495 = vrot.slane %v482, 5
      %v496 = vsel %vm489, %v493, %v495
      %v500 = vadd.f32 %v400, %v492
      %v501 = vadd.f32 %v401, %v494
      %v502 = vadd.f32 %v402, %v496
      %s503 = scalar_lea.vmem %s1, 96
      %v504 = vld [vmem:[%s503] sm:$0xf]
      %v505 = vld [vmem:[%s503 + $0x4] sm:$0xf]
      %v506 = vld [vmem:[%s503 + $0x8] sm:$0xf]
      %v507 = vld [vmem:[%s503 + $0xc] sm:$0xf]
      %v508 = vld [vmem:[%s503 + $0x10] sm:$0xf]
      %v509 = vld [vmem:[%s503 + $0x14] sm:$0xf]
      %v510 = vld [vmem:[%s503 + $0x18] sm:$0xf]
      %v511 = vld [vmem:[%s503 + $0x1c] sm:$0xf]
      %v520 = vunpack.c.l.b16 %v504
      %v521 = vunpack.c.l.b16 %v505
      %v522 = vunpack.c.l.b16 %v506
      %v523 = vunpack.c.l.b16 %v507
      %v524 = vunpack.c.l.b16 %v508
      %v525 = vunpack.c.l.b16 %v509
      %v526 = vunpack.c.l.b16 %v510
      %v527 = vunpack.c.l.b16 %v511
      %v528 = vpack.c.b16 %v521, %v520
      %v529 = vpack.c.b16 %v523, %v522
      %v530 = vpack.c.b16 %v525, %v524
      %v531 = vpack.c.b16 %v527, %v526
      %536 = vmatprep.subr.bf16.mxu0 0
      %537 = vmatpush1.bf16.msra.mxu0 %v528
      %538 = vmatprep.subr.bf16.mxu0 0
      %539 = vmatpush1.bf16.msra.mxu0 %v529
      %540 = vmatprep.subr.bf16.mxu0 0
      %541 = vmatpush1.bf16.msra.mxu0 %v530
      %542 = vmatprep.subr.bf16.mxu0 0
      %543 = vmatpush1.bf16.msra.mxu0 %v531
      %544 = vmatprep.subr.bf16.mxu0 0
      %545 = vmatpush1.bf16.msra.mxu0 0
      %546 = vmatprep.subr.bf16.mxu0 0
      %547 = vmatpush1.bf16.msra.mxu0 0
      %548 = vmatprep.subr.bf16.mxu0 0
      %549 = vmatpush1.bf16.msra.mxu0 0
      %550 = vmatprep.subr.bf16.mxu0 0
      %551 = vmatpush1.bf16.msra.mxu0 0
      %552 = vmatprep.subr.bf16.mxu0 0
      %553 = vmatpush1.bf16.msra.mxu0 0
      %554 = vmatprep.subr.bf16.mxu0 0
      %555 = vmatpush1.bf16.msra.mxu0 0
      %556 = vmatprep.subr.bf16.mxu0 0
      %557 = vmatpush1.bf16.msra.mxu0 0
      %558 = vmatprep.subr.bf16.mxu0 0
      %559 = vmatpush1.bf16.msra.mxu0 0
      %560 = vmatprep.subr.bf16.mxu0 0
      %561 = vmatpush1.bf16.msra.mxu0 0
      %562 = vmatprep.subr.bf16.mxu0 0
      %563 = vmatpush1.bf16.msra.mxu0 0
      %564 = vmatprep.subr.bf16.mxu0 0
      %565 = vmatpush1.bf16.msra.mxu0 0
      %566 = vmatprep.subr.bf16.mxu0 0
      %567 = vmatpush1.bf16.msra.mxu0 0
      %568 = vmatprep.mubr.bf16.mxu0 0
      %569 = vmatmul.mubr.bf16.gmra.mrb[0].mxu0 %v254
      %v570 = vpop.f32.mrb[0].mxu0
      %v571 = vadd.f32 0.0, %v570
      %v572 = vpop.f32.mrb[0].mxu0
      %v573 = vpop.f32.mrb[0].mxu0
      %v574 = vadd.f32 0.0, %v573
      %v575 = vpop.f32.mrb[0].mxu0
      %576 = vmatprep.mubr.bf16.mxu0 0
      %577 = vmatmul.mubr.bf16.gmra.mrb[0].mxu0 %v257
      %v578 = vpop.f32.mrb[0].mxu0
      %v579 = vadd.f32 0.0, %v578
      %v580 = vpop.f32.mrb[0].mxu0
      %v581 = vpop.f32.mrb[0].mxu0
      %v582 = vadd.f32 0.0, %v581
      %v583 = vpop.f32.mrb[0].mxu0
      %584 = vdwg.mxu0
      %vm589 = vcmask 1041408
      %v590 = vrot.slane %v571, 6
      %v591 = vrot.slane %v574, 6
      %v592 = vsel %vm589, %v590, %v591
      %v593 = vrot.slane %v579, 6
      %v594 = vsel %vm589, %v591, %v593
      %v595 = vrot.slane %v582, 6
      %v596 = vsel %vm589, %v593, %v595
      %v600 = vadd.f32 %v500, %v592
      %v601 = vadd.f32 %v501, %v594
      %v602 = vadd.f32 %v502, %v596
      %v603 = vmul.f32 %v600, %v203
      %v604 = vmul.f32 %v601, %v204
      %v605 = vmul.f32 %v602, %v205
      %vm606 = vcmask 261120
      %v607 = vsel %vm606, %v603, 0.0
      %v608 = vsel %vm606, %v604, 0.0
      %v609 = vadd.f32 %v607, %v608
      %vm610 = vcmask 257024
      %v611 = vsel %vm610, %v605, 0.0
      %v612 = vadd.f32 %v609, %v611
      %v613 = vrot.slane %v612, 4
      %v614 = vadd.f32 %v612, %v613
      %v615 = vrot.slane %v614, 2
      %v616 = vadd.f32 %v614, %v615
      %v617 = vrot.slane %v616, 1
      %v618 = vadd.f32 %v616, %v617
      %v619 = vmul.f32 %v618, 0.0625
      %v620 = vsub.f32 %v600, %v619
      %v621 = vsub.f32 %v601, %v619
      %v622 = vsub.f32 %v602, %v619
      %v623 = vmul.f32 %v620, %v620
      %v624 = vmul.f32 %v621, %v621
      %v625 = vmul.f32 %v622, %v622
      %v626 = vmul.f32 %v623, %v203
      %v627 = vmul.f32 %v624, %v204
      %v628 = vmul.f32 %v625, %v205
      %v629 = vsel %vm606, %v626, 0.0
      %v630 = vsel %vm606, %v627, 0.0
      %v631 = vadd.f32 %v629, %v630
      %v632 = vsel %vm610, %v628, 0.0
      %v633 = vadd.f32 %v631, %v632
      %v634 = vrot.slane %v633, 4
      %v635 = vadd.f32 %v633, %v634
      %v636 = vrot.slane %v635, 2
      %v637 = vadd.f32 %v635, %v636
      %v638 = vrot.slane %v637, 1
      %v639 = vadd.f32 %v637, %v638
      %v640 = vmul.f32 %v639, 0.0625
      %v641 = vadd.f32 %v640, 1e-05
      %v642 = vrsqrt.pop %v641
      %v643 = vmul.f32 %v620, %v642
      %v644 = vmul.f32 %v621, %v642
      %v645 = vmul.f32 %v622, %v642
      %vm646 = vcmp.ge.f32.partialorder %v643, 0.0
      %vm647 = vcmp.ge.f32.partialorder %v644, 0.0
      %vm648 = vcmp.ge.f32.partialorder %v645, 0.0
      %v649 = vmul.f32 %v643, 0.01
      %v650 = vmul.f32 %v644, 0.01
      %v651 = vmul.f32 %v645, 0.01
      %v652 = vsel %vm646, %v643, %v649
      %v653 = vsel %vm647, %v644, %v650
      %v654 = vsel %vm648, %v645, %v651
      %v655 = vpack.c.bf16 %v653, %v652
      %v656 = vpack.c.bf16 %v654, %v654
      %v659 = vunpack.c.l.b16 %v655
      %v660 = vunpack.c.h.b16 %v655
      %v661 = vunpack.c.l.b16 %v656
      %v662 = vpack.c.b16 %v659, %v659
      %v663 = vpack.c.b16 %v660, %v660
      %v664 = vpack.c.b16 %v661, %v661
      %668 = vst.msk [vmem:[%s143] sm:$0xf] %vm610, %v662
      %669 = vst.msk [vmem:[%s143 + $0x4] sm:$0xf] %vm610, %v663
      %vm670 = vcmask 254976
      %671 = vst.msk [vmem:[%s143 + $0x8] sm:$0x3] %vm670, %v664
      %p672 = scmp.lt.s32.totalorder %s13, 1
      %s673 = scalar_select %p672, %s13, 1
      %s674 = smul.addr %s673, 3
      %s675 = smul.addr %s674, 4
      %s676 = scalar_lea.vmem %s2, %s675
      // Predicated region
      $region29: #{netD_forward.6} parent=27 // pred_check
        %p677 = pneg %p78
      $region30: #{netD_forward.6} parent=27 // pred_check_branch
        %679 = sbr.rel (%p677) target = $region32
      $region31: #{netD_forward.6} parent=27 // pred_region
        _
      $region32: #{netD_forward.6} parent=27 // pred_fallthru
        _
    $region28: #{netD_forward.6} parent=5 // pred_fallthru
      _
    %p680 = scmp.le.s32.totalorder 2, %s8
    // Predicated region
    $region33: #{netD_forward.6} parent=5 // pred_check
      %p681 = pneg %p680
    $region34: #{netD_forward.6} parent=5 // pred_check_branch
      %683 = sbr.rel (%p681) target = $region36
    $region35: #{netD_forward.6} parent=5 // pred_region
      %s684 = ssub.s32 %s8, 2
      // Predicated region
      $region37: #{netD_forward.6} parent=35 // pred_check
        %p685 = pneg %p84
      $region38: #{netD_forward.6} parent=35 // pred_check_branch
        %687 = sbr.rel (%p685) target = $region40
      $region39: #{netD_forward.6} parent=35 // pred_region
        %p688 = scmp.lt.s32.totalorder %s14, 1
        %s689 = scalar_select %p688, %s14, 1
        %s690 = smul.addr %s689, 3
        %s691 = smul.addr %s690, 4
        %s692 = scalar_lea.vmem %s2, %s691
      $region40: #{netD_forward.6} parent=35 // pred_fallthru
        _
    $region36: #{netD_forward.6} parent=5 // pred_fallthru
      _
  $region6: #{netD_forward.6} parent=0 // loop_footer
    %s12 = sadd.s32 1, %s8
  $region7: #{netD_forward.6} parent=0 // loop_footer_branch
    %7 = sbr.rel target = $region3
  $region8: #{netD_forward.6} parent=0 // loop_exit
    _

// kernel: netD_forward.7
$region0: #{netD_forward.7}
  #allocation0 [shape = 'u32[]', space=smem, size = 0x4, offset = 0x4, fixed_abs, tag = 'smem constant byte address 0x4 - core index']
  #allocation1 [shape = 'u32[144,128]{1,0:T(1,128)}', space=vmem, size = 0x12000, scoped, tag = 'internal scratch']
  %s0 = inlined_call_operand.vmem [shape: bf16[2,512], index: 0, kind: input, shape index: {}]
  %s1 = inlined_call_operand.vmem [shape: bf16[512,1], index: 1, kind: input, shape index: {}]
  %s2 = inlined_call_operand.vmem [shape: f32[2,1], index: 2, kind: output, shape index: {}]
  %s3 = sld [smem:[#allocation0]]
  $region18: #{netD_forward.7} parent=0
    _
  %s5 = ssub.s32 1, %s3
  %s6 = scalar_select 0, %s5, %s3
  // Predicated region
  $region2: #{netD_forward.7} parent=0 // pred_check
    _
  $region3: #{netD_forward.7} parent=0 // pred_check_branch
    %8 = sbr.rel (0) target = $region5
  $region4: #{netD_forward.7} parent=0 // pred_region
    _
  $region5: #{netD_forward.7} parent=0 // pred_fallthru
    _
  // Predicated region
  $region6: #{netD_forward.7} parent=0 // pred_check
    _
  $region7: #{netD_forward.7} parent=0 // pred_check_branch
    %10 = sbr.rel (0) target = $region9
  $region8: #{netD_forward.7} parent=0 // pred_region
    _
  $region9: #{netD_forward.7} parent=0 // pred_fallthru
    _
  %v12 = vld [vmem:[%s0] sm:$0xf]
  %v13 = vld [vmem:[%s1] sm:$0xf]
  %v14 = vld [vmem:[%s1 + $0x4] sm:$0xf]
  %v15 = vld [vmem:[%s1 + $0x8] sm:$0xf]
  %v16 = vld [vmem:[%s1 + $0xc] sm:$0xf]
  %v17 = vld [vmem:[%s1 + $0x10] sm:$0xf]
  %v18 = vld [vmem:[%s1 + $0x14] sm:$0xf]
  %v19 = vld [vmem:[%s1 + $0x18] sm:$0xf]
  %v20 = vld [vmem:[%s1 + $0x1c] sm:$0xf]
  %v21 = vld [vmem:[%s1 + $0x20] sm:$0xf]
  %v22 = vld [vmem:[%s1 + $0x24] sm:$0xf]
  %v23 = vld [vmem:[%s1 + $0x28] sm:$0xf]
  %v24 = vld [vmem:[%s1 + $0x2c] sm:$0xf]
  %v25 = vld [vmem:[%s1 + $0x30] sm:$0xf]
  %v26 = vld [vmem:[%s1 + $0x34] sm:$0xf]
  %v27 = vld [vmem:[%s1 + $0x38] sm:$0xf]
  %v28 = vld [vmem:[%s1 + $0x3c] sm:$0xf]
  %v29 = vld [vmem:[%s1 + $0x40] sm:$0xf]
  %v30 = vld [vmem:[%s1 + $0x44] sm:$0xf]
  %v31 = vld [vmem:[%s1 + $0x48] sm:$0xf]
  %v32 = vld [vmem:[%s1 + $0x4c] sm:$0xf]
  %v33 = vld [vmem:[%s1 + $0x50] sm:$0xf]
  %v34 = vld [vmem:[%s1 + $0x54] sm:$0xf]
  %v35 = vld [vmem:[%s1 + $0x58] sm:$0xf]
  %v36 = vld [vmem:[%s1 + $0x5c] sm:$0xf]
  %v37 = vld [vmem:[%s1 + $0x60] sm:$0xf]
  %v38 = vld [vmem:[%s1 + $0x64] sm:$0xf]
  %v39 = vld [vmem:[%s1 + $0x68] sm:$0xf]
  %v40 = vld [vmem:[%s1 + $0x6c] sm:$0xf]
  %v41 = vld [vmem:[%s1 + $0x70] sm:$0xf]
  %v42 = vld [vmem:[%s1 + $0x74] sm:$0xf]
  %v43 = vld [vmem:[%s1 + $0x78] sm:$0xf]
  %v44 = vld [vmem:[%s1 + $0x7c] sm:$0xf]
  %v45 = vld [vmem:[%s1 + $0x80] sm:$0xf]
  %v46 = vld [vmem:[%s1 + $0x84] sm:$0xf]
  %v47 = vld [vmem:[%s1 + $0x88] sm:$0xf]
  %v48 = vld [vmem:[%s1 + $0x8c] sm:$0xf]
  %v49 = vld [vmem:[%s1 + $0x90] sm:$0xf]
  %v50 = vld [vmem:[%s1 + $0x94] sm:$0xf]
  %v51 = vld [vmem:[%s1 + $0x98] sm:$0xf]
  %v52 = vld [vmem:[%s1 + $0x9c] sm:$0xf]
  %v53 = vld [vmem:[%s1 + $0xa0] sm:$0xf]
  %v54 = vld [vmem:[%s1 + $0xa4] sm:$0xf]
  %v55 = vld [vmem:[%s1 + $0xa8] sm:$0xf]
  %v56 = vld [vmem:[%s1 + $0xac] sm:$0xf]
  %v57 = vld [vmem:[%s1 + $0xb0] sm:$0xf]
  %v58 = vld [vmem:[%s1 + $0xb4] sm:$0xf]
  %v59 = vld [vmem:[%s1 + $0xb8] sm:$0xf]
  %v60 = vld [vmem:[%s1 + $0xbc] sm:$0xf]
  %v61 = vld [vmem:[%s1 + $0xc0] sm:$0xf]
  %v62 = vld [vmem:[%s1 + $0xc4] sm:$0xf]
  %v63 = vld [vmem:[%s1 + $0xc8] sm:$0xf]
  %v64 = vld [vmem:[%s1 + $0xcc] sm:$0xf]
  %v65 = vld [vmem:[%s1 + $0xd0] sm:$0xf]
  %v66 = vld [vmem:[%s1 + $0xd4] sm:$0xf]
  %v67 = vld [vmem:[%s1 + $0xd8] sm:$0xf]
  %v68 = vld [vmem:[%s1 + $0xdc] sm:$0xf]
  %v69 = vld [vmem:[%s1 + $0xe0] sm:$0xf]
  %v70 = vld [vmem:[%s1 + $0xe4] sm:$0xf]
  %v71 = vld [vmem:[%s1 + $0xe8] sm:$0xf]
  %v72 = vld [vmem:[%s1 + $0xec] sm:$0xf]
  %v73 = vld [vmem:[%s1 + $0xf0] sm:$0xf]
  %v74 = vld [vmem:[%s1 + $0xf4] sm:$0xf]
  %v75 = vld [vmem:[%s1 + $0xf8] sm:$0xf]
  %v76 = vld [vmem:[%s1 + $0xfc] sm:$0xf]
  %v79 = vunpack.c.l.s4 1966171168
  %v80 = vunpack.c.0.s8 %v79
  %v81 = vlaneseq
  %v82 = vshrl.u32 %v81, 7
  %v83 = vsub.s32 %v80, %v82
  %v84 = vrot.slane %v12, %v83
  %v85 = vcombine.high %v84, %v84
  %v87 = vunpack.c.l.s4 1966171168
  %v88 = vunpack.c.0.s8 %v87
  %v89 = vlaneseq
  %v90 = vshrl.u32 %v89, 7
  %v91 = vsub.s32 %v88, %v90
  %v92 = vrot.slane %v84, %v91
  %v94 = vunpack.c.l.s4 1966171168
  %v95 = vunpack.c.0.s8 %v94
  %v96 = vlaneseq
  %v97 = vshrl.u32 %v96, 7
  %v98 = vsub.s32 %v95, %v97
  %v99 = vrot.slane %v85, %v98
  %v100 = vcombine.high %v92, %v92
  %v101 = vcombine.high %v99, %v99
  %v170 = vunpack.c.l.b16 %v13
  %v171 = vunpack.c.l.b16 %v14
  %v172 = vunpack.c.l.b16 %v15
  %v173 = vunpack.c.l.b16 %v16
  %v174 = vunpack.c.l.b16 %v17
  %v175 = vunpack.c.l.b16 %v18
  %v176 = vunpack.c.l.b16 %v19
  %v177 = vunpack.c.l.b16 %v20
  %v178 = vunpack.c.l.b16 %v21
  %v179 = vunpack.c.l.b16 %v22
  %v180 = vunpack.c.l.b16 %v23
  %v181 = vunpack.c.l.b16 %v24
  %v182 = vunpack.c.l.b16 %v25
  %v183 = vunpack.c.l.b16 %v26
  %v184 = vunpack.c.l.b16 %v27
  %v185 = vunpack.c.l.b16 %v28
  %v186 = vunpack.c.l.b16 %v29
  %v187 = vunpack.c.l.b16 %v30
  %v188 = vunpack.c.l.b16 %v31
  %v189 = vunpack.c.l.b16 %v32
  %v190 = vunpack.c.l.b16 %v33
  %v191 = vunpack.c.l.b16 %v34
  %v192 = vunpack.c.l.b16 %v35
  %v193 = vunpack.c.l.b16 %v36
  %v194 = vunpack.c.l.b16 %v37
  %v195 = vunpack.c.l.b16 %v38
  %v196 = vunpack.c.l.b16 %v39
  %v197 = vunpack.c.l.b16 %v40
  %v198 = vunpack.c.l.b16 %v41
  %v199 = vunpack.c.l.b16 %v42
  %v200 = vunpack.c.l.b16 %v43
  %v201 = vunpack.c.l.b16 %v44
  %v202 = vunpack.c.l.b16 %v45
  %v203 = vunpack.c.l.b16 %v46
  %v204 = vunpack.c.l.b16 %v47
  %v205 = vunpack.c.l.b16 %v48
  %v206 = vunpack.c.l.b16 %v49
  %v207 = vunpack.c.l.b16 %v50
  %v208 = vunpack.c.l.b16 %v51
  %v209 = vunpack.c.l.b16 %v52
  %v210 = vunpack.c.l.b16 %v53
  %v211 = vunpack.c.l.b16 %v54
  %v212 = vunpack.c.l.b16 %v55
  %v213 = vunpack.c.l.b16 %v56
  %v214 = vunpack.c.l.b16 %v57
  %v215 = vunpack.c.l.b16 %v58
  %v216 = vunpack.c.l.b16 %v59
  %v217 = vunpack.c.l.b16 %v60
  %v218 = vunpack.c.l.b16 %v61
  %v219 = vunpack.c.l.b16 %v62
  %v220 = vunpack.c.l.b16 %v63
  %v221 = vunpack.c.l.b16 %v64
  %v222 = vunpack.c.l.b16 %v65
  %v223 = vunpack.c.l.b16 %v66
  %v224 = vunpack.c.l.b16 %v67
  %v225 = vunpack.c.l.b16 %v68
  %v226 = vunpack.c.l.b16 %v69
  %v227 = vunpack.c.l.b16 %v70
  %v228 = vunpack.c.l.b16 %v71
  %v229 = vunpack.c.l.b16 %v72
  %v230 = vunpack.c.l.b16 %v73
  %v231 = vunpack.c.l.b16 %v74
  %v232 = vunpack.c.l.b16 %v75
  %v233 = vunpack.c.l.b16 %v76
  %v234 = vpack.c.b16 %v171, %v170
  %v235 = vpack.c.b16 %v173, %v172
  %v236 = vpack.c.b16 %v175, %v174
  %v237 = vpack.c.b16 %v177, %v176
  %v238 = vpack.c.b16 %v179, %v178
  %v239 = vpack.c.b16 %v181, %v180
  %v240 = vpack.c.b16 %v183, %v182
  %v241 = vpack.c.b16 %v185, %v184
  %v242 = vpack.c.b16 %v187, %v186
  %v243 = vpack.c.b16 %v189, %v188
  %v244 = vpack.c.b16 %v191, %v190
  %v245 = vpack.c.b16 %v193, %v192
  %v246 = vpack.c.b16 %v195, %v194
  %v247 = vpack.c.b16 %v197, %v196
  %v248 = vpack.c.b16 %v199, %v198
  %v249 = vpack.c.b16 %v201, %v200
  %v250 = vpack.c.b16 %v203, %v202
  %v251 = vpack.c.b16 %v205, %v204
  %v252 = vpack.c.b16 %v207, %v206
  %v253 = vpack.c.b16 %v209, %v208
  %v254 = vpack.c.b16 %v211, %v210
  %v255 = vpack.c.b16 %v213, %v212
  %v256 = vpack.c.b16 %v215, %v214
  %v257 = vpack.c.b16 %v217, %v216
  %v258 = vpack.c.b16 %v219, %v218
  %v259 = vpack.c.b16 %v221, %v220
  %v260 = vpack.c.b16 %v223, %v222
  %v261 = vpack.c.b16 %v225, %v224
  %v262 = vpack.c.b16 %v227, %v226
  %v263 = vpack.c.b16 %v229, %v228
  %v264 = vpack.c.b16 %v231, %v230
  %v265 = vpack.c.b16 %v233, %v232
  %298 = vmatprep.subr.bf16.mxu0 0
  %299 = vmatpush1.bf16.msra.mxu0 %v234
  %300 = vmatprep.subr.bf16.mxu0 0
  %301 = vmatpush1.bf16.msra.mxu0 %v235
  %302 = vmatprep.subr.bf16.mxu0 0
  %303 = vmatpush1.bf16.msra.mxu0 %v236
  %304 = vmatprep.subr.bf16.mxu0 0
  %305 = vmatpush1.bf16.msra.mxu0 %v237
  %306 = vmatprep.subr.bf16.mxu0 0
  %307 = vmatpush1.bf16.msra.mxu0 %v238
  %308 = vmatprep.subr.bf16.mxu0 0
  %309 = vmatpush1.bf16.msra.mxu0 %v239
  %310 = vmatprep.subr.bf16.mxu0 0
  %311 = vmatpush1.bf16.msra.mxu0 %v240
  %312 = vmatprep.subr.bf16.mxu0 0
  %313 = vmatpush1.bf16.msra.mxu0 %v241
  %314 = vmatprep.subr.bf16.mxu0 0
  %315 = vmatpush1.bf16.msra.mxu0 %v242
  %316 = vmatprep.subr.bf16.mxu0 0
  %317 = vmatpush1.bf16.msra.mxu0 %v243
  %318 = vmatprep.subr.bf16.mxu0 0
  %319 = vmatpush1.bf16.msra.mxu0 %v244
  %320 = vmatprep.subr.bf16.mxu0 0
  %321 = vmatpush1.bf16.msra.mxu0 %v245
  %322 = vmatprep.subr.bf16.mxu0 0
  %323 = vmatpush1.bf16.msra.mxu0 %v246
  %324 = vmatprep.subr.bf16.mxu0 0
  %325 = vmatpush1.bf16.msra.mxu0 %v247
  %326 = vmatprep.subr.bf16.mxu0 0
  %327 = vmatpush1.bf16.msra.mxu0 %v248
  %328 = vmatprep.subr.bf16.mxu0 0
  %329 = vmatpush1.bf16.msra.mxu0 %v249
  %330 = vmatprep.mubr.bf16.mxu0 %v99
  %331 = vmatmul.mubr.bf16.gmra.mrb[0].mxu0 %v92
  %v332 = vpop.f32.mrb[0].mxu0
  %v333 = vadd.f32 0.0, %v332
  %v334 = vpop.f32.mrb[0].mxu0
  %v335 = vpop.f32.mrb[0].mxu0
  %v336 = vpop.f32.mrb[0].mxu0
  %337 = vdwg.mxu0
  %338 = vmatprep.subr.bf16.mxu0 0
  %339 = vmatpush1.bf16.msra.mxu0 %v250
  %340 = vmatprep.subr.bf16.mxu0 0
  %341 = vmatpush1.bf16.msra.mxu0 %v251
  %342 = vmatprep.subr.bf16.mxu0 0
  %343 = vmatpush1.bf16.msra.mxu0 %v252
  %344 = vmatprep.subr.bf16.mxu0 0
  %345 = vmatpush1.bf16.msra.mxu0 %v253
  %346 = vmatprep.subr.bf16.mxu0 0
  %347 = vmatpush1.bf16.msra.mxu0 %v254
  %348 = vmatprep.subr.bf16.mxu0 0
  %349 = vmatpush1.bf16.msra.mxu0 %v255
  %350 = vmatprep.subr.bf16.mxu0 0
  %351 = vmatpush1.bf16.msra.mxu0 %v256
  %352 = vmatprep.subr.bf16.mxu0 0
  %353 = vmatpush1.bf16.msra.mxu0 %v257
  %354 = vmatprep.subr.bf16.mxu0 0
  %355 = vmatpush1.bf16.msra.mxu0 %v258
  %356 = vmatprep.subr.bf16.mxu0 0
  %357 = vmatpush1.bf16.msra.mxu0 %v259
  %358 = vmatprep.subr.bf16.mxu0 0
  %359 = vmatpush1.bf16.msra.mxu0 %v260
  %360 = vmatprep.subr.bf16.mxu0 0
  %361 = vmatpush1.bf16.msra.mxu0 %v261
  %362 = vmatprep.subr.bf16.mxu0 0
  %363 = vmatpush1.bf16.msra.mxu0 %v262
  %364 = vmatprep.subr.bf16.mxu0 0
  %365 = vmatpush1.bf16.msra.mxu0 %v263
  %366 = vmatprep.subr.bf16.mxu0 0
  %367 = vmatpush1.bf16.msra.mxu0 %v264
  %368 = vmatprep.subr.bf16.mxu0 0
  %369 = vmatpush1.bf16.msra.mxu0 %v265
  %370 = vmatprep.mubr.bf16.mxu0 %v101
  %371 = vmatmul.mubr.bf16.gmra.mrb[0].mxu0 %v100
  %v372 = vpop.f32.mrb[0].mxu0
  %v373 = vadd.f32 %v333, %v372
  %v374 = vpop.f32.mrb[0].mxu0
  %v375 = vpop.f32.mrb[0].mxu0
  %v376 = vpop.f32.mrb[0].mxu0
  %377 = vdwg.mxu0
  %v378 = vsub.f32 0.0, %v373
  %v379 = vmul.f32 %v378, 1.442695
  %v380 = vpow.pop %v379
  %v381 = vadd.f32 %v380, 1.0
  %v382 = vrcp.pop %v381
  %v383 = vmul.f32 1.0, %v382
  %vm384 = vcmask 1024
  %385 = vst.msk [vmem:[%s2] sm:$0x3] %vm384, %v383
  // Predicated region
  $region10: #{netD_forward.7} parent=0 // pred_check
    _
  $region11: #{netD_forward.7} parent=0 // pred_check_branch
    %387 = sbr.rel (0) target = $region13
  $region12: #{netD_forward.7} parent=0 // pred_region
    _
  $region13: #{netD_forward.7} parent=0 // pred_fallthru
    _
  // Predicated region
  $region14: #{netD_forward.7} parent=0 // pred_check
    _
  $region15: #{netD_forward.7} parent=0 // pred_check_branch
    %389 = sbr.rel (0) target = $region17
  $region16: #{netD_forward.7} parent=0 // pred_region
    _
  $region17: #{netD_forward.7} parent=0 // pred_fallthru
    _

</llo_original>
